<compile_context>
chip_gen: v7x
topology: tpu7x:2x2x1
jax: 0.10.0
libtpu: 0.0.40
codegen_flags: <defaults>
</compile_context>

<pallas_src>
import functools

import jax
import jax.numpy as jnp
from jax.experimental import pallas as pl
from jax.experimental.pallas import tpu as pltpu

EPS = 1e-5
LANE = 128

MXU_DTYPE = jnp.bfloat16      # bf16-native MXU on v5e/v6e/v7x
ACT_DTYPE = jnp.bfloat16      # inter-stage activation storage (halves HBM traffic)


def _default_vmem_limit():
    try:
        cap = int(pltpu.get_tpu_info().vmem_capacity_bytes)
    except Exception:
        cap = 64 * 1024 * 1024        # conservative fallback (v7x-sized)
    return (cap // 4) * 3             # leave ~25% headroom for compiler scratch


_VMEM_LIMIT = _default_vmem_limit()


def _compiler_params(semantics):
    return pltpu.CompilerParams(dimension_semantics=semantics,
                                vmem_limit_bytes=_VMEM_LIMIT)


def _round_up(c, m=LANE):
    return ((c + m - 1) // m) * m


def _pick_row_tile(rows):
    # Prefer large tiles (closer to HBM roofline) while keeping >= 2 grid steps.
    for cand in (1024, 768, 512, 384, 256, 192, 128, 64, 32, 16, 8):
        if rows % cand == 0 and rows >= 2 * cand:
            return cand
    for cand in (1024, 512, 256, 128, 64, 32, 16, 8):
        if rows % cand == 0:
            return cand
    return rows


def _pick_h_tile(H, W):
    # Largest divisor of H whose tile has <= ~1024 pixel-rows.
    best = 1
    for th in range(1, H + 1):
        if H % th == 0 and th * W <= 1024:
            best = th
    return best


def _pad_last(a, to):
    pad = to - a.shape[-1]
    if pad == 0:
        return a
    return jnp.pad(a, [(0, 0)] * (a.ndim - 1) + [(0, pad)])


def _fold_bn(stats, gamma, beta, count):
    """Per-tile (sum, sumsq) partials -> per-channel BN affine (scale, shift)."""
    s = jnp.sum(stats[:, 0, :], axis=0)
    ss = jnp.sum(stats[:, 1, :], axis=0)
    mean = s / count
    var = jnp.maximum(ss / count - mean * mean, 0.0)          # biased variance
    scale = gamma * jax.lax.rsqrt(var + EPS)
    shift = beta - mean * scale
    return scale[None, :].astype(jnp.float32), shift[None, :].astype(jnp.float32)


# --------------------------------------------------------------------------- #
# Kernel 1: tiled 1x1-conv matmul with (optionally) the previous layer's BN
#           affine + ReLU fused on the input tile, plus fused one-pass BN
#           partial statistics (per-channel sum / sum-of-squares) of the output.
# --------------------------------------------------------------------------- #
def _mm_stats_kernel(apply_act, a_ref, w_ref, scale_ref, shift_ref,
                     y_ref, stats_ref):
    if apply_act:                                     # previous layer's BN + ReLU
        a = jnp.maximum(a_ref[...].astype(jnp.float32) * scale_ref[...]
                        + shift_ref[...], 0.0).astype(MXU_DTYPE)
    else:
        a = a_ref[...].astype(MXU_DTYPE)
    y = jnp.dot(a, w_ref[...].astype(MXU_DTYPE),
                preferred_element_type=jnp.float32)
    y_ref[...] = y.astype(y_ref.dtype)
    stats_ref[0, 0:1, :] = jnp.sum(y, axis=0, keepdims=True)
    stats_ref[0, 1:2, :] = jnp.sum(y * y, axis=0, keepdims=True)


def _matmul_bn_stats(a, w, scale, shift, *, apply_act, tm, out_dtype):
    rows, K = a.shape
    Nc = w.shape[1]
    nt = rows // tm
    y, stats = pl.pallas_call(
        functools.partial(_mm_stats_kernel, apply_act),
        out_shape=(jax.ShapeDtypeStruct((rows, Nc), out_dtype),
                   jax.ShapeDtypeStruct((nt, 2, Nc), jnp.float32)),
        grid=(nt,),
        in_specs=[
            pl.BlockSpec((tm, K), lambda i: (i, 0)),        # activation row-tile
            pl.BlockSpec((K, Nc), lambda i: (0, 0)),        # weights (resident)
            pl.BlockSpec((1, K), lambda i: (0, 0)),         # prev-layer BN scale
            pl.BlockSpec((1, K), lambda i: (0, 0)),         # prev-layer BN shift
        ],
        out_specs=(
            pl.BlockSpec((tm, Nc), lambda i: (i, 0)),       # raw (pre-BN) output
            pl.BlockSpec((1, 2, Nc), lambda i: (i, 0, 0)),  # per-tile stats
        ),
        compiler_params=_compiler_params(("parallel",)),
    )(a, w, scale, shift)
    return y, stats


# --------------------------------------------------------------------------- #
# Kernel 2: in-kernel 3x3 conv (stride 1, pad 1) on a spatial tile with 1-row
#           halos, BN1 + ReLU fused on the input, and fused BN2 partial stats.
# --------------------------------------------------------------------------- #
def _conv3x3_kernel(a_c_ref, a_t_ref, a_b_ref, w_ref, scale_ref, shift_ref,
                    y_ref, stats_ref):
    i = pl.program_id(1)
    last = pl.num_programs(1) - 1
    _, th, W, C = a_c_ref.shape
    Cout = w_ref.shape[3]

    scale = scale_ref[...].reshape(1, 1, C)
    shift = shift_ref[...].reshape(1, 1, C)

    def bn_relu(t):                                   # BN1 + ReLU, f32 math
        return jnp.maximum(t.astype(jnp.float32) * scale + shift, 0.0)

    # Halo rows are clamped in the index_map; zero them at the image edges.
    zt = jnp.where(i == 0, 0.0, bn_relu(a_t_ref[0]))       # (1, W, C)
    zb = jnp.where(i == last, 0.0, bn_relu(a_b_ref[0]))     # (1, W, C)
    zc = bn_relu(a_c_ref[0])                                # (th, W, C)

    z = jnp.concatenate([zt, zc, zb], axis=0)               # (th+2, W, C)
    zcol = jnp.zeros((th + 2, 1, C), jnp.float32)
    z = jnp.concatenate([zcol, z, zcol], axis=1)            # (th+2, W+2, C)

    acc = jnp.zeros((th * W, Cout), jnp.float32)
    for dy in range(3):
        for dx in range(3):
            zs = z[dy:dy + th, dx:dx + W, :].reshape(th * W, C)
            acc = acc + jnp.dot(zs.astype(MXU_DTYPE),
                                w_ref[dy, dx].astype(MXU_DTYPE),
                                preferred_element_type=jnp.float32)

    y_ref[0] = acc.reshape(th, W, Cout).astype(y_ref.dtype)
    stats_ref[0, 0:1, :] = jnp.sum(acc, axis=0, keepdims=True)
    stats_ref[0, 1:2, :] = jnp.sum(acc * acc, axis=0, keepdims=True)


def _conv3x3_bn_stats(y1_nhwc, w2, scale1, shift1, *, th, out_dtype):
    N, H, W, C = y1_nhwc.shape
    Cout = w2.shape[3]
    nht = H // th
    y2, stats = pl.pallas_call(
        _conv3x3_kernel,
        out_shape=(jax.ShapeDtypeStruct((N, H, W, Cout), out_dtype),
                   jax.ShapeDtypeStruct((N * nht, 2, Cout), jnp.float32)),
        grid=(N, nht),
        in_specs=[
            # center tile
            pl.BlockSpec((1, th, W, C), lambda n, i: (n, i, 0, 0)),
            # 1-row top halo (block size 1 along H => block index == row index)
            pl.BlockSpec((1, 1, W, C),
                         lambda n, i: (n, jnp.maximum(i * th - 1, 0), 0, 0)),
            # 1-row bottom halo
            pl.BlockSpec((1, 1, W, C),
                         lambda n, i: (n, jnp.minimum(i * th + th, H - 1), 0, 0)),
            # 3x3 weights (resident)
            pl.BlockSpec((3, 3, C, Cout), lambda n, i: (0, 0, 0, 0)),
            # BN1 scale / shift
            pl.BlockSpec((1, C), lambda n, i: (0, 0)),
            pl.BlockSpec((1, C), lambda n, i: (0, 0)),
        ],
        out_specs=(
            pl.BlockSpec((1, th, W, Cout), lambda n, i: (n, i, 0, 0)),
            pl.BlockSpec((1, 2, Cout), lambda n, i: (n * nht + i, 0, 0)),
        ),
        compiler_params=_compiler_params(("parallel", "parallel")),
    )(y1_nhwc, y1_nhwc, y1_nhwc, w2, scale1, shift1)
    return y2, stats


# --------------------------------------------------------------------------- #
# Kernel 3: fused BN3 affine + identity residual + ReLU epilogue (lane-dense),
#           output aliased onto the conv3 output buffer.
# --------------------------------------------------------------------------- #
def _bn_residual_relu_kernel(y_ref, r_ref, scale_ref, shift_ref, o_ref):
    o_ref[...] = jnp.maximum(
        y_ref[...] * scale_ref[...] + shift_ref[...]
        + r_ref[...].astype(jnp.float32), 0.0)


def _bn_residual_relu(y, res, scale, shift, *, tm):
    rows, Nc = y.shape
    nt = rows // tm
    return pl.pallas_call(
        _bn_residual_relu_kernel,
        out_shape=jax.ShapeDtypeStruct((rows, Nc), y.dtype),
        grid=(nt,),
        in_specs=[
            pl.BlockSpec((tm, Nc), lambda i: (i, 0)),
            pl.BlockSpec((tm, Nc), lambda i: (i, 0)),
            pl.BlockSpec((1, Nc), lambda i: (0, 0)),
            pl.BlockSpec((1, Nc), lambda i: (0, 0)),
        ],
        out_specs=pl.BlockSpec((tm, Nc), lambda i: (i, 0)),
        input_output_aliases={0: 0},                  # write in place over y3
        compiler_params=_compiler_params(("parallel",)),
    )(y, res, scale, shift)


# --------------------------------------------------------------------------- #
# Wrapper (channels-last / NHWC end to end; no layout transposes).
# --------------------------------------------------------------------------- #
def bottleneck_block_nhwc(x, params):
    """x: (N, H, W, Cin) float32.  Returns (N, H, W, Cout) float32 (Cout == Cin)."""
    w1, w2, w3, g1, b1, g2, b2, g3, b3 = params
    N, H, W, Cin = x.shape
    hid = w1.shape[1]
    Cout = w3.shape[1]
    if Cin != Cout:
        raise ValueError("identity residual requires in_channels == hid_channels*4")
    # TODO(synk): downsample / stride>1 / CBAM attention branches of the module are
    # not implemented (they are disabled under the module's default arguments).

    rows = N * H * W
    count = float(rows)
    tm = _pick_row_tile(rows)
    th = _pick_h_tile(H, W)
    cinp, hidp, coutp = _round_up(Cin), _round_up(hid), _round_up(Cout)

    # Lane-dense (multiple-of-128) zero padding of channels; bf16 MXU operands.
    xp = _pad_last(x.reshape(rows, Cin), cinp).astype(ACT_DTYPE)
    w1p = jnp.pad(w1, ((0, cinp - Cin), (0, hidp - hid))).astype(MXU_DTYPE)
    w2p = jnp.pad(w2, ((0, 0), (0, 0),
                       (0, hidp - hid), (0, hidp - hid))).astype(MXU_DTYPE)
    w3p = jnp.pad(w3, ((0, hidp - hid), (0, coutp - Cout))).astype(MXU_DTYPE)
    g1p, b1p = _pad_last(g1, hidp), _pad_last(b1, hidp)
    g2p, b2p = _pad_last(g2, hidp), _pad_last(b2, hidp)
    g3p, b3p = _pad_last(g3, coutp), _pad_last(b3, coutp)

    dummy = jnp.zeros((1, cinp), jnp.float32)          # unused when apply_act=False

    # ---- conv1 (1x1 matmul) + fused one-pass BN1 partials ----
    y1, st1 = _matmul_bn_stats(xp, w1p, dummy, dummy,
                               apply_act=False, tm=tm, out_dtype=ACT_DTYPE)
    sc1, sh1 = _fold_bn(st1, g1p, b1p, count)

    # ---- conv2 (3x3, in-kernel halo conv) with BN1+ReLU fused + BN2 partials ----
    y2, st2 = _conv3x3_bn_stats(y1.reshape(N, H, W, hidp), w2p, sc1, sh1,
                                th=th, out_dtype=ACT_DTYPE)
    sc2, sh2 = _fold_bn(st2, g2p, b2p, count)

    # ---- conv3 (1x1 matmul) with BN2+ReLU fused on input + BN3 partials ----
    y3, st3 = _matmul_bn_stats(y2.reshape(rows, hidp), w3p, sc2, sh2,
                               apply_act=True, tm=tm, out_dtype=jnp.float32)
    sc3, sh3 = _fold_bn(st3, g3p, b3p, count)

    # ---- BN3 + identity residual + ReLU (fused epilogue, aliased onto y3) ----
    out = _bn_residual_relu(y3, xp, sc3, sh3, tm=tm)
    out = out.reshape(N, H, W, coutp)
    if coutp != Cout:                       # only the toy / non-128-aligned case
        out = out[..., :Cout]
    return out


# --------------------------------------------------------------------------- #
# Pure-JAX NHWC reference mirroring the PyTorch forward (training-mode BN).
# --------------------------------------------------------------------------- #
def reference(x, params):
    w1, w2, w3, g1, b1, g2, b2, g3, b3 = params

    def conv(x, w_hwio, pad):
        return jax.lax.conv_general_dilated(
            x, w_hwio, window_strides=(1, 1),
            padding=[(pad, pad), (pad, pad)],
            dimension_numbers=('NHWC', 'HWIO', 'NHWC'))

    def bn(y, g, beta):
        mean = jnp.mean(y, axis=(0, 1, 2), keepdims=True)
        var = jnp.mean((y - mean) ** 2, axis=(0, 1, 2), keepdims=True)
        return ((y - mean) / jnp.sqrt(var + EPS) * g.reshape(1, 1, 1, -1)
                + beta.reshape(1, 1, 1, -1))

    relu = lambda a: jnp.maximum(a, 0.0)
    out = relu(bn(conv(x, w1[None, None], 0), g1, b1))       # 1x1
    out = relu(bn(conv(out, w2, 1), g2, b2))                 # 3x3, pad 1
    out = bn(conv(out, w3[None, None], 0), g3, b3)           # 1x1
    return relu(out + x)                                     # identity residual


if __name__ == "__main__":
    # Small shapes consistent with the module: in_channels = hid * expansion (4) so
    # the identity residual path is valid.
    N, H, W = 2, 16, 16
    hid = 4
    Cin = Cout = hid * 4

    ks = jax.random.split(jax.random.PRNGKey(0), 10)
    # NHWC input — channels-last throughout, no layout transposes.
    x = jax.random.normal(ks[0], (N, H, W, Cin), jnp.float32)
    w1 = 0.1 * jax.random.normal(ks[1], (Cin, hid), jnp.float32)        # 1x1: (in, out)
    w2 = 0.1 * jax.random.normal(ks[2], (3, 3, hid, hid), jnp.float32)  # (kh, kw, in, out)
    w3 = 0.1 * jax.random.normal(ks[3], (hid, Cout), jnp.float32)       # 1x1: (in, out)
    g1 = 1.0 + 0.1 * jax.random.normal(ks[4], (hid,), jnp.float32)
    b1 = 0.1 * jax.random.normal(ks[5], (hid,), jnp.float32)
    g2 = 1.0 + 0.1 * jax.random.normal(ks[6], (hid,), jnp.float32)
    b2 = 0.1 * jax.random.normal(ks[7], (hid,), jnp.float32)
    g3 = 1.0 + 0.1 * jax.random.normal(ks[8], (Cout,), jnp.float32)
    b3 = 0.1 * jax.random.normal(ks[9], (Cout,), jnp.float32)
    params = (w1, w2, w3, g1, b1, g2, b2, g3, b3)

    fwd = jax.jit(bottleneck_block_nhwc)
    out = jax.block_until_ready(fwd(x, params))
    ref = reference(x, params)

    assert out.shape == (N, H, W, Cout)
    err = float(jnp.max(jnp.abs(out - ref)))
    # bf16 MXU operands / bf16 inter-stage activations => relaxed tolerance vs f32 ref.
    if not jnp.allclose(out, ref, atol=5e-2, rtol=5e-2):
        raise AssertionError(f"kernel mismatch vs reference, max abs err = {err}")
    print("KERNEL_OK")
</pallas_src>

<mosaic_0001>
module attributes {stable_mosaic.version = 11 : i64} {
  func.func @_conv3x3_kernel(%arg0: i32, %arg1: i32, %arg2: memref<1x16x16x128xbf16, #tpu.memory_space<vmem>>, %arg3: memref<1x1x16x128xbf16, #tpu.memory_space<vmem>>, %arg4: memref<1x1x16x128xbf16, #tpu.memory_space<vmem>>, %arg5: memref<3x3x128x128xbf16, #tpu.memory_space<vmem>>, %arg6: memref<1x128xf32, #tpu.memory_space<vmem>>, %arg7: memref<1x128xf32, #tpu.memory_space<vmem>>, %arg8: memref<1x16x16x128xbf16, #tpu.memory_space<vmem>>, %arg9: memref<1x2x128xf32, #tpu.memory_space<vmem>>) attributes {dimension_semantics = [#tpu.dimension_semantics<parallel>, #tpu.dimension_semantics<parallel>], iteration_bounds = array<i64: 2, 1>, scalar_prefetch = 0 : i64, scratch_operands = 0 : i64, tpu.core_type = #tpu.core_type<tc>, window_params = [{transform_indices = @transform_0, window_bounds = array<i64: 1, 16, 16, 128>}, {transform_indices = @transform_1, window_bounds = array<i64: 1, 1, 16, 128>}, {transform_indices = @transform_2, window_bounds = array<i64: 1, 1, 16, 128>}, {pipeline_mode = #tpu.pipeline_mode<synchronous>, transform_indices = @transform_3, window_bounds = array<i64: 3, 3, 128, 128>}, {pipeline_mode = #tpu.pipeline_mode<synchronous>, transform_indices = @transform_4, window_bounds = array<i64: 1, 128>}, {pipeline_mode = #tpu.pipeline_mode<synchronous>, transform_indices = @transform_5, window_bounds = array<i64: 1, 128>}, {transform_indices = @transform_6, window_bounds = array<i64: 1, 16, 16, 128>}, {transform_indices = @transform_7, window_bounds = array<i64: 1, 2, 128>}]} {
    %c0 = arith.constant 0 : index
    %c0_0 = arith.constant 0 : index
    %0 = vector.load %arg6[%c0, %c0_0] : memref<1x128xf32, #tpu.memory_space<vmem>>, vector<1x128xf32>
    %1 = vector.shape_cast %0 : vector<1x128xf32> to vector<1x1x128xf32>
    %c0_1 = arith.constant 0 : index
    %c0_2 = arith.constant 0 : index
    %2 = vector.load %arg7[%c0_1, %c0_2] : memref<1x128xf32, #tpu.memory_space<vmem>>, vector<1x128xf32>
    %3 = vector.shape_cast %2 : vector<1x128xf32> to vector<1x1x128xf32>
    %c0_i32 = arith.constant 0 : i32
    %4 = arith.cmpi eq, %arg1, %c0_i32 : i32
    %c0_3 = arith.constant 0 : index
    %c0_4 = arith.constant 0 : index
    %c0_5 = arith.constant 0 : index
    %c0_6 = arith.constant 0 : index
    %5 = vector.load %arg3[%c0_3, %c0_4, %c0_5, %c0_6] : memref<1x1x16x128xbf16, #tpu.memory_space<vmem>>, vector<1x1x16x128xbf16>
    %6 = vector.shape_cast %5 : vector<1x1x16x128xbf16> to vector<1x16x128xbf16>
    %7 = arith.extf %6 : vector<1x16x128xbf16> to vector<1x16x128xf32>
    %8 = vector.broadcast %1 : vector<1x1x128xf32> to vector<1x16x128xf32>
    %9 = arith.mulf %7, %8 : vector<1x16x128xf32>
    %10 = vector.broadcast %3 : vector<1x1x128xf32> to vector<1x16x128xf32>
    %11 = arith.addf %9, %10 : vector<1x16x128xf32>
    %cst = arith.constant 0.000000e+00 : f32
    %12 = vector.broadcast %cst : f32 to vector<1x16x128xf32>
    %13 = arith.maximumf %11, %12 : vector<1x16x128xf32>
    %cst_7 = arith.constant 0.000000e+00 : f32
    %14 = vector.broadcast %cst_7 : f32 to vector<1x16x128xf32>
    %15 = arith.select %4, %14, %13 : vector<1x16x128xf32>
    %c0_i32_8 = arith.constant 0 : i32
    %16 = arith.cmpi eq, %arg1, %c0_i32_8 : i32
    %c0_9 = arith.constant 0 : index
    %c0_10 = arith.constant 0 : index
    %c0_11 = arith.constant 0 : index
    %c0_12 = arith.constant 0 : index
    %17 = vector.load %arg4[%c0_9, %c0_10, %c0_11, %c0_12] : memref<1x1x16x128xbf16, #tpu.memory_space<vmem>>, vector<1x1x16x128xbf16>
    %18 = vector.shape_cast %17 : vector<1x1x16x128xbf16> to vector<1x16x128xbf16>
    %19 = arith.extf %18 : vector<1x16x128xbf16> to vector<1x16x128xf32>
    %20 = vector.broadcast %1 : vector<1x1x128xf32> to vector<1x16x128xf32>
    %21 = arith.mulf %19, %20 : vector<1x16x128xf32>
    %22 = vector.broadcast %3 : vector<1x1x128xf32> to vector<1x16x128xf32>
    %23 = arith.addf %21, %22 : vector<1x16x128xf32>
    %cst_13 = arith.constant 0.000000e+00 : f32
    %24 = vector.broadcast %cst_13 : f32 to vector<1x16x128xf32>
    %25 = arith.maximumf %23, %24 : vector<1x16x128xf32>
    %cst_14 = arith.constant 0.000000e+00 : f32
    %26 = vector.broadcast %cst_14 : f32 to vector<1x16x128xf32>
    %27 = arith.select %16, %26, %25 : vector<1x16x128xf32>
    %c0_15 = arith.constant 0 : index
    %c0_16 = arith.constant 0 : index
    %c0_17 = arith.constant 0 : index
    %c0_18 = arith.constant 0 : index
    %28 = vector.load %arg2[%c0_15, %c0_16, %c0_17, %c0_18] : memref<1x16x16x128xbf16, #tpu.memory_space<vmem>>, vector<1x16x16x128xbf16>
    %29 = vector.shape_cast %28 : vector<1x16x16x128xbf16> to vector<16x16x128xbf16>
    %30 = arith.extf %29 : vector<16x16x128xbf16> to vector<16x16x128xf32>
    %31 = vector.broadcast %1 : vector<1x1x128xf32> to vector<16x16x128xf32>
    %32 = arith.mulf %30, %31 : vector<16x16x128xf32>
    %33 = vector.broadcast %3 : vector<1x1x128xf32> to vector<16x16x128xf32>
    %34 = arith.addf %32, %33 : vector<16x16x128xf32>
    %cst_19 = arith.constant 0.000000e+00 : f32
    %35 = vector.broadcast %cst_19 : f32 to vector<16x16x128xf32>
    %36 = arith.maximumf %34, %35 : vector<16x16x128xf32>
    %37 = tpu.concatenate %15, %36, %27 in 0 : vector<1x16x128xf32>, vector<16x16x128xf32>, vector<1x16x128xf32> -> vector<18x16x128xf32>
    %cst_20 = arith.constant 0.000000e+00 : f32
    %38 = vector.broadcast %cst_20 : f32 to vector<18x1x128xf32>
    %39 = tpu.concatenate %38, %37, %38 in 1 : vector<18x1x128xf32>, vector<18x16x128xf32>, vector<18x1x128xf32> -> vector<18x18x128xf32>
    %cst_21 = arith.constant 0.000000e+00 : f32
    %40 = vector.broadcast %cst_21 : f32 to vector<256x128xf32>
    %41 = vector.extract_strided_slice %39 {offsets = [0, 0, 0], sizes = [16, 16, 128], strides = [1, 1, 1]} : vector<18x18x128xf32> to vector<16x16x128xf32>
    %42 = vector.shape_cast %41 : vector<16x16x128xf32> to vector<256x128xf32>
    %43 = arith.truncf %42 : vector<256x128xf32> to vector<256x128xbf16>
    %c0_22 = arith.constant 0 : index
    %c0_23 = arith.constant 0 : index
    %c0_24 = arith.constant 0 : index
    %c0_25 = arith.constant 0 : index
    %44 = vector.load %arg5[%c0_22, %c0_23, %c0_24, %c0_25] : memref<3x3x128x128xbf16, #tpu.memory_space<vmem>>, vector<1x1x128x128xbf16>
    %45 = vector.shape_cast %44 : vector<1x1x128x128xbf16> to vector<128x128xbf16>
    %cst_26 = arith.constant dense<0.000000e+00> : vector<256x128xf32>
    %46 = tpu.matmul %43, %45, %cst_26 {dimension_numbers = #tpu.dot_dimension_numbers<[1], [0], [0], [1], [0, 0, 1, 1], [], []>} : vector<256x128xbf16>, vector<128x128xbf16>, vector<256x128xf32> -> vector<256x128xf32>
    %47 = arith.addf %40, %46 : vector<256x128xf32>
    %48 = vector.extract_strided_slice %39 {offsets = [0, 1, 0], sizes = [16, 16, 128], strides = [1, 1, 1]} : vector<18x18x128xf32> to vector<16x16x128xf32>
    %49 = vector.shape_cast %48 : vector<16x16x128xf32> to vector<256x128xf32>
    %50 = arith.truncf %49 : vector<256x128xf32> to vector<256x128xbf16>
    %c0_27 = arith.constant 0 : index
    %c1 = arith.constant 1 : index
    %c0_28 = arith.constant 0 : index
    %c0_29 = arith.constant 0 : index
    %51 = vector.load %arg5[%c0_27, %c1, %c0_28, %c0_29] : memref<3x3x128x128xbf16, #tpu.memory_space<vmem>>, vector<1x1x128x128xbf16>
    %52 = vector.shape_cast %51 : vector<1x1x128x128xbf16> to vector<128x128xbf16>
    %cst_30 = arith.constant dense<0.000000e+00> : vector<256x128xf32>
    %53 = tpu.matmul %50, %52, %cst_30 {dimension_numbers = #tpu.dot_dimension_numbers<[1], [0], [0], [1], [0, 0, 1, 1], [], []>} : vector<256x128xbf16>, vector<128x128xbf16>, vector<256x128xf32> -> vector<256x128xf32>
    %54 = arith.addf %47, %53 : vector<256x128xf32>
    %55 = vector.extract_strided_slice %39 {offsets = [0, 2, 0], sizes = [16, 16, 128], strides = [1, 1, 1]} : vector<18x18x128xf32> to vector<16x16x128xf32>
    %56 = vector.shape_cast %55 : vector<16x16x128xf32> to vector<256x128xf32>
    %57 = arith.truncf %56 : vector<256x128xf32> to vector<256x128xbf16>
    %c0_31 = arith.constant 0 : index
    %c2 = arith.constant 2 : index
    %c0_32 = arith.constant 0 : index
    %c0_33 = arith.constant 0 : index
    %58 = vector.load %arg5[%c0_31, %c2, %c0_32, %c0_33] : memref<3x3x128x128xbf16, #tpu.memory_space<vmem>>, vector<1x1x128x128xbf16>
    %59 = vector.shape_cast %58 : vector<1x1x128x128xbf16> to vector<128x128xbf16>
    %cst_34 = arith.constant dense<0.000000e+00> : vector<256x128xf32>
    %60 = tpu.matmul %57, %59, %cst_34 {dimension_numbers = #tpu.dot_dimension_numbers<[1], [0], [0], [1], [0, 0, 1, 1], [], []>} : vector<256x128xbf16>, vector<128x128xbf16>, vector<256x128xf32> -> vector<256x128xf32>
    %61 = arith.addf %54, %60 : vector<256x128xf32>
    %62 = vector.extract_strided_slice %39 {offsets = [1, 0, 0], sizes = [16, 16, 128], strides = [1, 1, 1]} : vector<18x18x128xf32> to vector<16x16x128xf32>
    %63 = vector.shape_cast %62 : vector<16x16x128xf32> to vector<256x128xf32>
    %64 = arith.truncf %63 : vector<256x128xf32> to vector<256x128xbf16>
    %c1_35 = arith.constant 1 : index
    %c0_36 = arith.constant 0 : index
    %c0_37 = arith.constant 0 : index
    %c0_38 = arith.constant 0 : index
    %65 = vector.load %arg5[%c1_35, %c0_36, %c0_37, %c0_38] : memref<3x3x128x128xbf16, #tpu.memory_space<vmem>>, vector<1x1x128x128xbf16>
    %66 = vector.shape_cast %65 : vector<1x1x128x128xbf16> to vector<128x128xbf16>
    %cst_39 = arith.constant dense<0.000000e+00> : vector<256x128xf32>
    %67 = tpu.matmul %64, %66, %cst_39 {dimension_numbers = #tpu.dot_dimension_numbers<[1], [0], [0], [1], [0, 0, 1, 1], [], []>} : vector<256x128xbf16>, vector<128x128xbf16>, vector<256x128xf32> -> vector<256x128xf32>
    %68 = arith.addf %61, %67 : vector<256x128xf32>
    %69 = vector.extract_strided_slice %39 {offsets = [1, 1, 0], sizes = [16, 16, 128], strides = [1, 1, 1]} : vector<18x18x128xf32> to vector<16x16x128xf32>
    %70 = vector.shape_cast %69 : vector<16x16x128xf32> to vector<256x128xf32>
    %71 = arith.truncf %70 : vector<256x128xf32> to vector<256x128xbf16>
    %c1_40 = arith.constant 1 : index
    %c1_41 = arith.constant 1 : index
    %c0_42 = arith.constant 0 : index
    %c0_43 = arith.constant 0 : index
    %72 = vector.load %arg5[%c1_40, %c1_41, %c0_42, %c0_43] : memref<3x3x128x128xbf16, #tpu.memory_space<vmem>>, vector<1x1x128x128xbf16>
    %73 = vector.shape_cast %72 : vector<1x1x128x128xbf16> to vector<128x128xbf16>
    %cst_44 = arith.constant dense<0.000000e+00> : vector<256x128xf32>
    %74 = tpu.matmul %71, %73, %cst_44 {dimension_numbers = #tpu.dot_dimension_numbers<[1], [0], [0], [1], [0, 0, 1, 1], [], []>} : vector<256x128xbf16>, vector<128x128xbf16>, vector<256x128xf32> -> vector<256x128xf32>
    %75 = arith.addf %68, %74 : vector<256x128xf32>
    %76 = vector.extract_strided_slice %39 {offsets = [1, 2, 0], sizes = [16, 16, 128], strides = [1, 1, 1]} : vector<18x18x128xf32> to vector<16x16x128xf32>
    %77 = vector.shape_cast %76 : vector<16x16x128xf32> to vector<256x128xf32>
    %78 = arith.truncf %77 : vector<256x128xf32> to vector<256x128xbf16>
    %c1_45 = arith.constant 1 : index
    %c2_46 = arith.constant 2 : index
    %c0_47 = arith.constant 0 : index
    %c0_48 = arith.constant 0 : index
    %79 = vector.load %arg5[%c1_45, %c2_46, %c0_47, %c0_48] : memref<3x3x128x128xbf16, #tpu.memory_space<vmem>>, vector<1x1x128x128xbf16>
    %80 = vector.shape_cast %79 : vector<1x1x128x128xbf16> to vector<128x128xbf16>
    %cst_49 = arith.constant dense<0.000000e+00> : vector<256x128xf32>
    %81 = tpu.matmul %78, %80, %cst_49 {dimension_numbers = #tpu.dot_dimension_numbers<[1], [0], [0], [1], [0, 0, 1, 1], [], []>} : vector<256x128xbf16>, vector<128x128xbf16>, vector<256x128xf32> -> vector<256x128xf32>
    %82 = arith.addf %75, %81 : vector<256x128xf32>
    %83 = vector.extract_strided_slice %39 {offsets = [2, 0, 0], sizes = [16, 16, 128], strides = [1, 1, 1]} : vector<18x18x128xf32> to vector<16x16x128xf32>
    %84 = vector.shape_cast %83 : vector<16x16x128xf32> to vector<256x128xf32>
    %85 = arith.truncf %84 : vector<256x128xf32> to vector<256x128xbf16>
    %c2_50 = arith.constant 2 : index
    %c0_51 = arith.constant 0 : index
    %c0_52 = arith.constant 0 : index
    %c0_53 = arith.constant 0 : index
    %86 = vector.load %arg5[%c2_50, %c0_51, %c0_52, %c0_53] : memref<3x3x128x128xbf16, #tpu.memory_space<vmem>>, vector<1x1x128x128xbf16>
    %87 = vector.shape_cast %86 : vector<1x1x128x128xbf16> to vector<128x128xbf16>
    %cst_54 = arith.constant dense<0.000000e+00> : vector<256x128xf32>
    %88 = tpu.matmul %85, %87, %cst_54 {dimension_numbers = #tpu.dot_dimension_numbers<[1], [0], [0], [1], [0, 0, 1, 1], [], []>} : vector<256x128xbf16>, vector<128x128xbf16>, vector<256x128xf32> -> vector<256x128xf32>
    %89 = arith.addf %82, %88 : vector<256x128xf32>
    %90 = vector.extract_strided_slice %39 {offsets = [2, 1, 0], sizes = [16, 16, 128], strides = [1, 1, 1]} : vector<18x18x128xf32> to vector<16x16x128xf32>
    %91 = vector.shape_cast %90 : vector<16x16x128xf32> to vector<256x128xf32>
    %92 = arith.truncf %91 : vector<256x128xf32> to vector<256x128xbf16>
    %c2_55 = arith.constant 2 : index
    %c1_56 = arith.constant 1 : index
    %c0_57 = arith.constant 0 : index
    %c0_58 = arith.constant 0 : index
    %93 = vector.load %arg5[%c2_55, %c1_56, %c0_57, %c0_58] : memref<3x3x128x128xbf16, #tpu.memory_space<vmem>>, vector<1x1x128x128xbf16>
    %94 = vector.shape_cast %93 : vector<1x1x128x128xbf16> to vector<128x128xbf16>
    %cst_59 = arith.constant dense<0.000000e+00> : vector<256x128xf32>
    %95 = tpu.matmul %92, %94, %cst_59 {dimension_numbers = #tpu.dot_dimension_numbers<[1], [0], [0], [1], [0, 0, 1, 1], [], []>} : vector<256x128xbf16>, vector<128x128xbf16>, vector<256x128xf32> -> vector<256x128xf32>
    %96 = arith.addf %89, %95 : vector<256x128xf32>
    %97 = vector.extract_strided_slice %39 {offsets = [2, 2, 0], sizes = [16, 16, 128], strides = [1, 1, 1]} : vector<18x18x128xf32> to vector<16x16x128xf32>
    %98 = vector.shape_cast %97 : vector<16x16x128xf32> to vector<256x128xf32>
    %99 = arith.truncf %98 : vector<256x128xf32> to vector<256x128xbf16>
    %c2_60 = arith.constant 2 : index
    %c2_61 = arith.constant 2 : index
    %c0_62 = arith.constant 0 : index
    %c0_63 = arith.constant 0 : index
    %100 = vector.load %arg5[%c2_60, %c2_61, %c0_62, %c0_63] : memref<3x3x128x128xbf16, #tpu.memory_space<vmem>>, vector<1x1x128x128xbf16>
    %101 = vector.shape_cast %100 : vector<1x1x128x128xbf16> to vector<128x128xbf16>
    %cst_64 = arith.constant dense<0.000000e+00> : vector<256x128xf32>
    %102 = tpu.matmul %99, %101, %cst_64 {dimension_numbers = #tpu.dot_dimension_numbers<[1], [0], [0], [1], [0, 0, 1, 1], [], []>} : vector<256x128xbf16>, vector<128x128xbf16>, vector<256x128xf32> -> vector<256x128xf32>
    %103 = arith.addf %96, %102 : vector<256x128xf32>
    %104 = vector.shape_cast %103 : vector<256x128xf32> to vector<16x16x128xf32>
    %105 = arith.truncf %104 : vector<16x16x128xf32> to vector<16x16x128xbf16>
    %c0_65 = arith.constant 0 : index
    %c0_66 = arith.constant 0 : index
    %c0_67 = arith.constant 0 : index
    %c0_68 = arith.constant 0 : index
    %106 = vector.load %arg8[%c0_65, %c0_66, %c0_67, %c0_68] : memref<1x16x16x128xbf16, #tpu.memory_space<vmem>>, vector<1x16x16x128xbf16>
    %107 = vector.shape_cast %106 : vector<1x16x16x128xbf16> to vector<16x16x128xbf16>
    %108 = vector.shape_cast %105 : vector<16x16x128xbf16> to vector<1x16x16x128xbf16>
    tpu.vector_store %arg8[%c0_65, %c0_66, %c0_67, %c0_68], %108 {strides = array<i32>} : memref<1x16x16x128xbf16, #tpu.memory_space<vmem>>, vector<1x16x16x128xbf16>,
    %cst_69 = arith.constant dense<0.000000e+00> : vector<128xf32>
    %109 = vector.multi_reduction <add>, %103, %cst_69 [0] : vector<256x128xf32> to vector<128xf32>
    %110 = vector.shape_cast %109 : vector<128xf32> to vector<1x128xf32>
    %c0_70 = arith.constant 0 : index
    %c0_71 = arith.constant 0 : index
    %c0_72 = arith.constant 0 : index
    %111 = vector.load %arg9[%c0_70, %c0_71, %c0_72] : memref<1x2x128xf32, #tpu.memory_space<vmem>>, vector<1x1x128xf32>
    %112 = vector.shape_cast %111 : vector<1x1x128xf32> to vector<1x128xf32>
    %113 = vector.shape_cast %110 : vector<1x128xf32> to vector<1x1x128xf32>
    tpu.vector_store %arg9[%c0_70, %c0_71, %c0_72], %113 {strides = array<i32>} : memref<1x2x128xf32, #tpu.memory_space<vmem>>, vector<1x1x128xf32>,
    %114 = arith.mulf %103, %103 : vector<256x128xf32>
    %cst_73 = arith.constant dense<0.000000e+00> : vector<128xf32>
    %115 = vector.multi_reduction <add>, %114, %cst_73 [0] : vector<256x128xf32> to vector<128xf32>
    %116 = vector.shape_cast %115 : vector<128xf32> to vector<1x128xf32>
    %c0_74 = arith.constant 0 : index
    %c1_75 = arith.constant 1 : index
    %c0_76 = arith.constant 0 : index
    %117 = vector.load %arg9[%c0_74, %c1_75, %c0_76] : memref<1x2x128xf32, #tpu.memory_space<vmem>>, vector<1x1x128xf32>
    %118 = vector.shape_cast %117 : vector<1x1x128xf32> to vector<1x128xf32>
    %119 = vector.shape_cast %116 : vector<1x128xf32> to vector<1x1x128xf32>
    tpu.vector_store %arg9[%c0_74, %c1_75, %c0_76], %119 {strides = array<i32>} : memref<1x2x128xf32, #tpu.memory_space<vmem>>, vector<1x1x128xf32>,
    return
  }
  func.func @transform_0(%arg0: i32, %arg1: i32) -> (i32, i32, i32, i32) {
    %c0_i32 = arith.constant 0 : i32
    %c0_i32_0 = arith.constant 0 : i32
    %c0_i32_1 = arith.constant 0 : i32
    return %arg0, %arg1, %c0_i32, %c0_i32_0 : i32, i32, i32, i32
  }
  func.func @transform_1(%arg0: i32, %arg1: i32) -> (i32, i32, i32, i32) {
    %c16_i32 = arith.constant 16 : i32
    %0 = arith.muli %arg1, %c16_i32 : i32
    %c1_i32 = arith.constant 1 : i32
    %1 = arith.subi %0, %c1_i32 : i32
    %c0_i32 = arith.constant 0 : i32
    %2 = arith.maxsi %1, %c0_i32 : i32
    %c0_i32_0 = arith.constant 0 : i32
    %c0_i32_1 = arith.constant 0 : i32
    %c0_i32_2 = arith.constant 0 : i32
    return %arg0, %2, %c0_i32_0, %c0_i32_1 : i32, i32, i32, i32
  }
  func.func @transform_2(%arg0: i32, %arg1: i32) -> (i32, i32, i32, i32) {
    %c16_i32 = arith.constant 16 : i32
    %0 = arith.muli %arg1, %c16_i32 : i32
    %c16_i32_0 = arith.constant 16 : i32
    %1 = arith.addi %0, %c16_i32_0 : i32
    %c15_i32 = arith.constant 15 : i32
    %2 = arith.minsi %1, %c15_i32 : i32
    %c0_i32 = arith.constant 0 : i32
    %c0_i32_1 = arith.constant 0 : i32
    %c0_i32_2 = arith.constant 0 : i32
    return %arg0, %2, %c0_i32, %c0_i32_1 : i32, i32, i32, i32
  }
  func.func @transform_3(%arg0: i32, %arg1: i32) -> (i32, i32, i32, i32) {
    %c0_i32 = arith.constant 0 : i32
    %c0_i32_0 = arith.constant 0 : i32
    %c0_i32_1 = arith.constant 0 : i32
    %c0_i32_2 = arith.constant 0 : i32
    %c0_i32_3 = arith.constant 0 : i32
    return %c0_i32, %c0_i32_0, %c0_i32_1, %c0_i32_2 : i32, i32, i32, i32
  }
  func.func @transform_4(%arg0: i32, %arg1: i32) -> (i32, i32) {
    %c0_i32 = arith.constant 0 : i32
    %c0_i32_0 = arith.constant 0 : i32
    %c0_i32_1 = arith.constant 0 : i32
    return %c0_i32, %c0_i32_0 : i32, i32
  }
  func.func @transform_5(%arg0: i32, %arg1: i32) -> (i32, i32) {
    %c0_i32 = arith.constant 0 : i32
    %c0_i32_0 = arith.constant 0 : i32
    %c0_i32_1 = arith.constant 0 : i32
    return %c0_i32, %c0_i32_0 : i32, i32
  }
  func.func @transform_6(%arg0: i32, %arg1: i32) -> (i32, i32, i32, i32) {
    %c0_i32 = arith.constant 0 : i32
    %c0_i32_0 = arith.constant 0 : i32
    %c0_i32_1 = arith.constant 0 : i32
    return %arg0, %arg1, %c0_i32, %c0_i32_0 : i32, i32, i32, i32
  }
  func.func @transform_7(%arg0: i32, %arg1: i32) -> (i32, i32, i32) {
    %c1_i32 = arith.constant 1 : i32
    %0 = arith.muli %arg0, %c1_i32 : i32
    %1 = arith.addi %0, %arg1 : i32
    %c0_i32 = arith.constant 0 : i32
    %c0_i32_0 = arith.constant 0 : i32
    %c0_i32_1 = arith.constant 0 : i32
    return %1, %c0_i32, %c0_i32_0 : i32, i32, i32
  }
}

module attributes {stable_mosaic.version = 11 : i64} {
  func.func @_mm_stats_kernel(%arg0: i32, %arg1: memref<256x128xbf16, #tpu.memory_space<vmem>>, %arg2: memref<128x128xbf16, #tpu.memory_space<vmem>>, %arg3: memref<1x128xf32, #tpu.memory_space<vmem>>, %arg4: memref<1x128xf32, #tpu.memory_space<vmem>>, %arg5: memref<256x128xbf16, #tpu.memory_space<vmem>>, %arg6: memref<1x2x128xf32, #tpu.memory_space<vmem>>) attributes {dimension_semantics = [#tpu.dimension_semantics<parallel>], iteration_bounds = array<i64: 2>, scalar_prefetch = 0 : i64, scratch_operands = 0 : i64, tpu.core_type = #tpu.core_type<tc>, window_params = [{transform_indices = @transform_0, window_bounds = array<i64: 256, 128>}, {pipeline_mode = #tpu.pipeline_mode<synchronous>, transform_indices = @transform_1, window_bounds = array<i64: 128, 128>}, {pipeline_mode = #tpu.pipeline_mode<synchronous>, transform_indices = @transform_2, window_bounds = array<i64: 1, 128>}, {pipeline_mode = #tpu.pipeline_mode<synchronous>, transform_indices = @transform_3, window_bounds = array<i64: 1, 128>}, {transform_indices = @transform_4, window_bounds = array<i64: 256, 128>}, {transform_indices = @transform_5, window_bounds = array<i64: 1, 2, 128>}]} {
    %c0 = arith.constant 0 : index
    %c0_0 = arith.constant 0 : index
    %0 = vector.load %arg1[%c0, %c0_0] : memref<256x128xbf16, #tpu.memory_space<vmem>>, vector<256x128xbf16>
    %c0_1 = arith.constant 0 : index
    %c0_2 = arith.constant 0 : index
    %1 = vector.load %arg2[%c0_1, %c0_2] : memref<128x128xbf16, #tpu.memory_space<vmem>>, vector<128x128xbf16>
    %cst = arith.constant dense<0.000000e+00> : vector<256x128xf32>
    %2 = tpu.matmul %0, %1, %cst {dimension_numbers = #tpu.dot_dimension_numbers<[1], [0], [0], [1], [0, 0, 1, 1], [], []>} : vector<256x128xbf16>, vector<128x128xbf16>, vector<256x128xf32> -> vector<256x128xf32>
    %3 = arith.truncf %2 : vector<256x128xf32> to vector<256x128xbf16>
    %c0_3 = arith.constant 0 : index
    %c0_4 = arith.constant 0 : index
    %4 = vector.load %arg5[%c0_3, %c0_4] : memref<256x128xbf16, #tpu.memory_space<vmem>>, vector<256x128xbf16>
    tpu.vector_store %arg5[%c0_3, %c0_4], %3 {strides = array<i32>} : memref<256x128xbf16, #tpu.memory_space<vmem>>, vector<256x128xbf16>,
    %cst_5 = arith.constant dense<0.000000e+00> : vector<128xf32>
    %5 = vector.multi_reduction <add>, %2, %cst_5 [0] : vector<256x128xf32> to vector<128xf32>
    %6 = vector.shape_cast %5 : vector<128xf32> to vector<1x128xf32>
    %c0_6 = arith.constant 0 : index
    %c0_7 = arith.constant 0 : index
    %c0_8 = arith.constant 0 : index
    %7 = vector.load %arg6[%c0_6, %c0_7, %c0_8] : memref<1x2x128xf32, #tpu.memory_space<vmem>>, vector<1x1x128xf32>
    %8 = vector.shape_cast %7 : vector<1x1x128xf32> to vector<1x128xf32>
    %9 = vector.shape_cast %6 : vector<1x128xf32> to vector<1x1x128xf32>
    tpu.vector_store %arg6[%c0_6, %c0_7, %c0_8], %9 {strides = array<i32>} : memref<1x2x128xf32, #tpu.memory_space<vmem>>, vector<1x1x128xf32>,
    %10 = arith.mulf %2, %2 : vector<256x128xf32>
    %cst_9 = arith.constant dense<0.000000e+00> : vector<128xf32>
    %11 = vector.multi_reduction <add>, %10, %cst_9 [0] : vector<256x128xf32> to vector<128xf32>
    %12 = vector.shape_cast %11 : vector<128xf32> to vector<1x128xf32>
    %c0_10 = arith.constant 0 : index
    %c1 = arith.constant 1 : index
    %c0_11 = arith.constant 0 : index
    %13 = vector.load %arg6[%c0_10, %c1, %c0_11] : memref<1x2x128xf32, #tpu.memory_space<vmem>>, vector<1x1x128xf32>
    %14 = vector.shape_cast %13 : vector<1x1x128xf32> to vector<1x128xf32>
    %15 = vector.shape_cast %12 : vector<1x128xf32> to vector<1x1x128xf32>
    tpu.vector_store %arg6[%c0_10, %c1, %c0_11], %15 {strides = array<i32>} : memref<1x2x128xf32, #tpu.memory_space<vmem>>, vector<1x1x128xf32>,
    return
  }
  func.func @transform_0(%arg0: i32) -> (i32, i32) {
    %c0_i32 = arith.constant 0 : i32
    %c0_i32_0 = arith.constant 0 : i32
    return %arg0, %c0_i32 : i32, i32
  }
  func.func @transform_1(%arg0: i32) -> (i32, i32) {
    %c0_i32 = arith.constant 0 : i32
    %c0_i32_0 = arith.constant 0 : i32
    %c0_i32_1 = arith.constant 0 : i32
    return %c0_i32, %c0_i32_0 : i32, i32
  }
  func.func @transform_2(%arg0: i32) -> (i32, i32) {
    %c0_i32 = arith.constant 0 : i32
    %c0_i32_0 = arith.constant 0 : i32
    %c0_i32_1 = arith.constant 0 : i32
    return %c0_i32, %c0_i32_0 : i32, i32
  }
  func.func @transform_3(%arg0: i32) -> (i32, i32) {
    %c0_i32 = arith.constant 0 : i32
    %c0_i32_0 = arith.constant 0 : i32
    %c0_i32_1 = arith.constant 0 : i32
    return %c0_i32, %c0_i32_0 : i32, i32
  }
  func.func @transform_4(%arg0: i32) -> (i32, i32) {
    %c0_i32 = arith.constant 0 : i32
    %c0_i32_0 = arith.constant 0 : i32
    return %arg0, %c0_i32 : i32, i32
  }
  func.func @transform_5(%arg0: i32) -> (i32, i32, i32) {
    %c0_i32 = arith.constant 0 : i32
    %c0_i32_0 = arith.constant 0 : i32
    %c0_i32_1 = arith.constant 0 : i32
    return %arg0, %c0_i32, %c0_i32_0 : i32, i32, i32
  }
}

module attributes {stable_mosaic.version = 11 : i64} {
  func.func @_bn_residual_relu_kernel(%arg0: i32, %arg1: memref<256x128xf32, #tpu.memory_space<vmem>>, %arg2: memref<256x128xbf16, #tpu.memory_space<vmem>>, %arg3: memref<1x128xf32, #tpu.memory_space<vmem>>, %arg4: memref<1x128xf32, #tpu.memory_space<vmem>>, %arg5: memref<256x128xf32, #tpu.memory_space<vmem>>) attributes {dimension_semantics = [#tpu.dimension_semantics<parallel>], iteration_bounds = array<i64: 2>, scalar_prefetch = 0 : i64, scratch_operands = 0 : i64, tpu.core_type = #tpu.core_type<tc>, window_params = [{transform_indices = @transform_0, window_bounds = array<i64: 256, 128>}, {transform_indices = @transform_1, window_bounds = array<i64: 256, 128>}, {pipeline_mode = #tpu.pipeline_mode<synchronous>, transform_indices = @transform_2, window_bounds = array<i64: 1, 128>}, {pipeline_mode = #tpu.pipeline_mode<synchronous>, transform_indices = @transform_3, window_bounds = array<i64: 1, 128>}, {transform_indices = @transform_4, window_bounds = array<i64: 256, 128>}]} {
    %c0 = arith.constant 0 : index
    %c0_0 = arith.constant 0 : index
    %0 = vector.load %arg1[%c0, %c0_0] : memref<256x128xf32, #tpu.memory_space<vmem>>, vector<256x128xf32>
    %c0_1 = arith.constant 0 : index
    %c0_2 = arith.constant 0 : index
    %1 = vector.load %arg3[%c0_1, %c0_2] : memref<1x128xf32, #tpu.memory_space<vmem>>, vector<1x128xf32>
    %2 = vector.broadcast %1 : vector<1x128xf32> to vector<256x128xf32>
    %3 = arith.mulf %0, %2 : vector<256x128xf32>
    %c0_3 = arith.constant 0 : index
    %c0_4 = arith.constant 0 : index
    %4 = vector.load %arg4[%c0_3, %c0_4] : memref<1x128xf32, #tpu.memory_space<vmem>>, vector<1x128xf32>
    %5 = vector.broadcast %4 : vector<1x128xf32> to vector<256x128xf32>
    %6 = arith.addf %3, %5 : vector<256x128xf32>
    %c0_5 = arith.constant 0 : index
    %c0_6 = arith.constant 0 : index
    %7 = vector.load %arg2[%c0_5, %c0_6] : memref<256x128xbf16, #tpu.memory_space<vmem>>, vector<256x128xbf16>
    %8 = arith.extf %7 : vector<256x128xbf16> to vector<256x128xf32>
    %9 = arith.addf %6, %8 : vector<256x128xf32>
    %cst = arith.constant 0.000000e+00 : f32
    %10 = vector.broadcast %cst : f32 to vector<256x128xf32>
    %11 = arith.maximumf %9, %10 : vector<256x128xf32>
    %c0_7 = arith.constant 0 : index
    %c0_8 = arith.constant 0 : index
    %12 = vector.load %arg5[%c0_7, %c0_8] : memref<256x128xf32, #tpu.memory_space<vmem>>, vector<256x128xf32>
    tpu.vector_store %arg5[%c0_7, %c0_8], %11 {strides = array<i32>} : memref<256x128xf32, #tpu.memory_space<vmem>>, vector<256x128xf32>,
    return
  }
  func.func @transform_0(%arg0: i32) -> (i32, i32) {
    %c0_i32 = arith.constant 0 : i32
    %c0_i32_0 = arith.constant 0 : i32
    return %arg0, %c0_i32 : i32, i32
  }
  func.func @transform_1(%arg0: i32) -> (i32, i32) {
    %c0_i32 = arith.constant 0 : i32
    %c0_i32_0 = arith.constant 0 : i32
    return %arg0, %c0_i32 : i32, i32
  }
  func.func @transform_2(%arg0: i32) -> (i32, i32) {
    %c0_i32 = arith.constant 0 : i32
    %c0_i32_0 = arith.constant 0 : i32
    %c0_i32_1 = arith.constant 0 : i32
    return %c0_i32, %c0_i32_0 : i32, i32
  }
  func.func @transform_3(%arg0: i32) -> (i32, i32) {
    %c0_i32 = arith.constant 0 : i32
    %c0_i32_0 = arith.constant 0 : i32
    %c0_i32_1 = arith.constant 0 : i32
    return %c0_i32, %c0_i32_0 : i32, i32
  }
  func.func @transform_4(%arg0: i32) -> (i32, i32) {
    %c0_i32 = arith.constant 0 : i32
    %c0_i32_0 = arith.constant 0 : i32
    return %arg0, %c0_i32 : i32, i32
  }
}

module attributes {stable_mosaic.version = 11 : i64} {
  func.func @_mm_stats_kernel(%arg0: i32, %arg1: memref<256x128xbf16, #tpu.memory_space<vmem>>, %arg2: memref<128x128xbf16, #tpu.memory_space<vmem>>, %arg3: memref<1x128xf32, #tpu.memory_space<vmem>>, %arg4: memref<1x128xf32, #tpu.memory_space<vmem>>, %arg5: memref<256x128xf32, #tpu.memory_space<vmem>>, %arg6: memref<1x2x128xf32, #tpu.memory_space<vmem>>) attributes {dimension_semantics = [#tpu.dimension_semantics<parallel>], iteration_bounds = array<i64: 2>, scalar_prefetch = 0 : i64, scratch_operands = 0 : i64, tpu.core_type = #tpu.core_type<tc>, window_params = [{transform_indices = @transform_0, window_bounds = array<i64: 256, 128>}, {pipeline_mode = #tpu.pipeline_mode<synchronous>, transform_indices = @transform_1, window_bounds = array<i64: 128, 128>}, {pipeline_mode = #tpu.pipeline_mode<synchronous>, transform_indices = @transform_2, window_bounds = array<i64: 1, 128>}, {pipeline_mode = #tpu.pipeline_mode<synchronous>, transform_indices = @transform_3, window_bounds = array<i64: 1, 128>}, {transform_indices = @transform_4, window_bounds = array<i64: 256, 128>}, {transform_indices = @transform_5, window_bounds = array<i64: 1, 2, 128>}]} {
    %c0 = arith.constant 0 : index
    %c0_0 = arith.constant 0 : index
    %0 = vector.load %arg1[%c0, %c0_0] : memref<256x128xbf16, #tpu.memory_space<vmem>>, vector<256x128xbf16>
    %1 = arith.extf %0 : vector<256x128xbf16> to vector<256x128xf32>
    %c0_1 = arith.constant 0 : index
    %c0_2 = arith.constant 0 : index
    %2 = vector.load %arg3[%c0_1, %c0_2] : memref<1x128xf32, #tpu.memory_space<vmem>>, vector<1x128xf32>
    %3 = vector.broadcast %2 : vector<1x128xf32> to vector<256x128xf32>
    %4 = arith.mulf %1, %3 : vector<256x128xf32>
    %c0_3 = arith.constant 0 : index
    %c0_4 = arith.constant 0 : index
    %5 = vector.load %arg4[%c0_3, %c0_4] : memref<1x128xf32, #tpu.memory_space<vmem>>, vector<1x128xf32>
    %6 = vector.broadcast %5 : vector<1x128xf32> to vector<256x128xf32>
    %7 = arith.addf %4, %6 : vector<256x128xf32>
    %cst = arith.constant 0.000000e+00 : f32
    %8 = vector.broadcast %cst : f32 to vector<256x128xf32>
    %9 = arith.maximumf %7, %8 : vector<256x128xf32>
    %10 = arith.truncf %9 : vector<256x128xf32> to vector<256x128xbf16>
    %c0_5 = arith.constant 0 : index
    %c0_6 = arith.constant 0 : index
    %11 = vector.load %arg2[%c0_5, %c0_6] : memref<128x128xbf16, #tpu.memory_space<vmem>>, vector<128x128xbf16>
    %cst_7 = arith.constant dense<0.000000e+00> : vector<256x128xf32>
    %12 = tpu.matmul %10, %11, %cst_7 {dimension_numbers = #tpu.dot_dimension_numbers<[1], [0], [0], [1], [0, 0, 1, 1], [], []>} : vector<256x128xbf16>, vector<128x128xbf16>, vector<256x128xf32> -> vector<256x128xf32>
    %c0_8 = arith.constant 0 : index
    %c0_9 = arith.constant 0 : index
    %13 = vector.load %arg5[%c0_8, %c0_9] : memref<256x128xf32, #tpu.memory_space<vmem>>, vector<256x128xf32>
    tpu.vector_store %arg5[%c0_8, %c0_9], %12 {strides = array<i32>} : memref<256x128xf32, #tpu.memory_space<vmem>>, vector<256x128xf32>,
    %cst_10 = arith.constant dense<0.000000e+00> : vector<128xf32>
    %14 = vector.multi_reduction <add>, %12, %cst_10 [0] : vector<256x128xf32> to vector<128xf32>
    %15 = vector.shape_cast %14 : vector<128xf32> to vector<1x128xf32>
    %c0_11 = arith.constant 0 : index
    %c0_12 = arith.constant 0 : index
    %c0_13 = arith.constant 0 : index
    %16 = vector.load %arg6[%c0_11, %c0_12, %c0_13] : memref<1x2x128xf32, #tpu.memory_space<vmem>>, vector<1x1x128xf32>
    %17 = vector.shape_cast %16 : vector<1x1x128xf32> to vector<1x128xf32>
    %18 = vector.shape_cast %15 : vector<1x128xf32> to vector<1x1x128xf32>
    tpu.vector_store %arg6[%c0_11, %c0_12, %c0_13], %18 {strides = array<i32>} : memref<1x2x128xf32, #tpu.memory_space<vmem>>, vector<1x1x128xf32>,
    %19 = arith.mulf %12, %12 : vector<256x128xf32>
    %cst_14 = arith.constant dense<0.000000e+00> : vector<128xf32>
    %20 = vector.multi_reduction <add>, %19, %cst_14 [0] : vector<256x128xf32> to vector<128xf32>
    %21 = vector.shape_cast %20 : vector<128xf32> to vector<1x128xf32>
    %c0_15 = arith.constant 0 : index
    %c1 = arith.constant 1 : index
    %c0_16 = arith.constant 0 : index
    %22 = vector.load %arg6[%c0_15, %c1, %c0_16] : memref<1x2x128xf32, #tpu.memory_space<vmem>>, vector<1x1x128xf32>
    %23 = vector.shape_cast %22 : vector<1x1x128xf32> to vector<1x128xf32>
    %24 = vector.shape_cast %21 : vector<1x128xf32> to vector<1x1x128xf32>
    tpu.vector_store %arg6[%c0_15, %c1, %c0_16], %24 {strides = array<i32>} : memref<1x2x128xf32, #tpu.memory_space<vmem>>, vector<1x1x128xf32>,
    return
  }
  func.func @transform_0(%arg0: i32) -> (i32, i32) {
    %c0_i32 = arith.constant 0 : i32
    %c0_i32_0 = arith.constant 0 : i32
    return %arg0, %c0_i32 : i32, i32
  }
  func.func @transform_1(%arg0: i32) -> (i32, i32) {
    %c0_i32 = arith.constant 0 : i32
    %c0_i32_0 = arith.constant 0 : i32
    %c0_i32_1 = arith.constant 0 : i32
    return %c0_i32, %c0_i32_0 : i32, i32
  }
  func.func @transform_2(%arg0: i32) -> (i32, i32) {
    %c0_i32 = arith.constant 0 : i32
    %c0_i32_0 = arith.constant 0 : i32
    %c0_i32_1 = arith.constant 0 : i32
    return %c0_i32, %c0_i32_0 : i32, i32
  }
  func.func @transform_3(%arg0: i32) -> (i32, i32) {
    %c0_i32 = arith.constant 0 : i32
    %c0_i32_0 = arith.constant 0 : i32
    %c0_i32_1 = arith.constant 0 : i32
    return %c0_i32, %c0_i32_0 : i32, i32
  }
  func.func @transform_4(%arg0: i32) -> (i32, i32) {
    %c0_i32 = arith.constant 0 : i32
    %c0_i32_0 = arith.constant 0 : i32
    return %arg0, %c0_i32 : i32, i32
  }
  func.func @transform_5(%arg0: i32) -> (i32, i32, i32) {
    %c0_i32 = arith.constant 0 : i32
    %c0_i32_0 = arith.constant 0 : i32
    %c0_i32_1 = arith.constant 0 : i32
    return %arg0, %c0_i32, %c0_i32_0 : i32, i32, i32
  }
}

</mosaic_0001>

<llo_original>
// kernel: bottleneck_block_nhwc.7
$region0: #{bottleneck_block_nhwc.7}
  #allocation0 [shape = 'u32[]', space=smem, size = 0x4, offset = 0x4, fixed_abs, tag = 'smem constant byte address 0x4 - core index']
  #allocation1 [shape = 'u32[144,128]{1,0:T(1,128)}', space=vmem, size = 0x12000, scoped, tag = 'internal scratch']
  %s0 = inlined_call_operand.vmem [shape: f32[512,128], index: 0, kind: input, shape index: {}, may-alias: {0,4}]
  %s1 = inlined_call_operand.vmem [shape: bf16[512,128], index: 1, kind: input, shape index: {}]
  %s2 = inlined_call_operand.vmem [shape: f32[1,128], index: 2, kind: input, shape index: {}]
  %s3 = inlined_call_operand.vmem [shape: f32[1,128], index: 3, kind: input, shape index: {}]
  %s4 = inlined_call_operand.vmem [shape: f32[512,128], index: 4, kind: output, shape index: {}, may-alias: {0,4}]
  %s5 = sld [smem:[#allocation0]]
  $region49: #{bottleneck_block_nhwc.7} parent=0
    _
  %s7 = ssub.s32 1, %s5
  %s8 = scalar_select 0, %s7, %s5
  loop: start=0, step=1, limit=4
  $region2: #{bottleneck_block_nhwc.7} parent=0 // loop_pre_header
    _
  $region3: #{bottleneck_block_nhwc.7} parent=0 // loop_header
    %s10 = sphi 0, %s14
    %p11 = scmp.ge.s32.totalorder %s10, 4
    %s20 = sphi 0, %s22
    %s23 = sphi 0, %s20
    %s24 = sphi 0, %s23
    %s40 = sphi 0, %s24
    %s46 = sphi 0, %s48
    %s49 = sphi 0, %s46
    %s50 = sphi 0, %s49
    %s66 = sphi 0, %s50
    %s70 = sphi 0, %s70
    %s72 = sphi 0, %s70
    %s73 = sphi 0, %s72
    %s87 = sphi 0, %s73
    %s91 = sphi 0, %s91
    %s93 = sphi 0, %s91
    %s94 = sphi 0, %s93
    %s108 = sphi 0, %s94
    %s114 = sphi 0, %s116
    %s117 = sphi 0, %s114
    %s118 = sphi 0, %s117
    %s134 = sphi 0, %s118
  $region4: #{bottleneck_block_nhwc.7} parent=0 // loop_header_branch
    %13 = sbr.rel (%p11) target = $region8
  $region5: #{bottleneck_block_nhwc.7} parent=0 // loop_body
    %s15 = ssub.s32 %s10, 1
    %s16 = ssub.s32 %s10, 2
    %s17 = sadd.s32 %s10, 1
    %s18 = ssub.s32 %s10, %s17
    %p19 = scmp.eq.s32.totalorder %s18, 0
    %s21 = sadd.s32 %s20, 1
    %s22 = scalar_select %p19, %s20, %s21
    %p25 = pneg %p19
    %p26 = scmp.eq.s32.totalorder %s10, 1
    %p27 = por %p25, %p26
    %p28 = scmp.ne.s32.totalorder %s20, %s23
    %p29 = scmp.eq.s32.totalorder %s10, 0
    %p30 = por %p28, %p29
    %p31 = scmp.ne.s32.totalorder %s20, %s23
    %p32 = scmp.eq.s32.totalorder %s15, 1
    %p33 = por %p31, %p32
    %p34 = scmp.ne.s32.totalorder %s23, %s24
    %p35 = scmp.eq.s32.totalorder %s15, 0
    %p36 = por %p34, %p35
    %p37 = scmp.ne.s32.totalorder %s23, %s24
    %p38 = scmp.eq.s32.totalorder %s16, 1
    %p39 = por %p37, %p38
    %p41 = scmp.ne.s32.totalorder %s24, %s40
    %p42 = scmp.eq.s32.totalorder %s16, 0
    %p43 = por %p41, %p42
    %s44 = ssub.s32 %s10, %s17
    %p45 = scmp.eq.s32.totalorder %s44, 0
    %s47 = sadd.s32 %s46, 1
    %s48 = scalar_select %p45, %s46, %s47
    %p51 = pneg %p45
    %p52 = scmp.eq.s32.totalorder %s10, 1
    %p53 = por %p51, %p52
    %p54 = scmp.ne.s32.totalorder %s46, %s49
    %p55 = scmp.eq.s32.totalorder %s10, 0
    %p56 = por %p54, %p55
    %p57 = scmp.ne.s32.totalorder %s46, %s49
    %p58 = scmp.eq.s32.totalorder %s15, 1
    %p59 = por %p57, %p58
    %p60 = scmp.ne.s32.totalorder %s49, %s50
    %p61 = scmp.eq.s32.totalorder %s15, 0
    %p62 = por %p60, %p61
    %p63 = scmp.ne.s32.totalorder %s49, %s50
    %p64 = scmp.eq.s32.totalorder %s16, 1
    %p65 = por %p63, %p64
    %p67 = scmp.ne.s32.totalorder %s50, %s66
    %p68 = scmp.eq.s32.totalorder %s16, 0
    %p69 = por %p67, %p68
    %s71 = sadd.s32 %s70, 1
    %p74 = scmp.eq.s32.totalorder %s10, 1
    %p75 = scmp.ne.s32.totalorder %s70, %s72
    %p76 = scmp.eq.s32.totalorder %s10, 0
    %p77 = por %p75, %p76
    %p78 = scmp.ne.s32.totalorder %s70, %s72
    %p79 = scmp.eq.s32.totalorder %s15, 1
    %p80 = por %p78, %p79
    %p81 = scmp.ne.s32.totalorder %s72, %s73
    %p82 = scmp.eq.s32.totalorder %s15, 0
    %p83 = por %p81, %p82
    %p84 = scmp.ne.s32.totalorder %s72, %s73
    %p85 = scmp.eq.s32.totalorder %s16, 1
    %p86 = por %p84, %p85
    %p88 = scmp.ne.s32.totalorder %s73, %s87
    %p89 = scmp.eq.s32.totalorder %s16, 0
    %p90 = por %p88, %p89
    %s92 = sadd.s32 %s91, 1
    %p95 = scmp.eq.s32.totalorder %s10, 1
    %p96 = scmp.ne.s32.totalorder %s91, %s93
    %p97 = scmp.eq.s32.totalorder %s10, 0
    %p98 = por %p96, %p97
    %p99 = scmp.ne.s32.totalorder %s91, %s93
    %p100 = scmp.eq.s32.totalorder %s15, 1
    %p101 = por %p99, %p100
    %p102 = scmp.ne.s32.totalorder %s93, %s94
    %p103 = scmp.eq.s32.totalorder %s15, 0
    %p104 = por %p102, %p103
    %p105 = scmp.ne.s32.totalorder %s93, %s94
    %p106 = scmp.eq.s32.totalorder %s16, 1
    %p107 = por %p105, %p106
    %p109 = scmp.ne.s32.totalorder %s94, %s108
    %p110 = scmp.eq.s32.totalorder %s16, 0
    %p111 = por %p109, %p110
    %s112 = ssub.s32 %s10, %s17
    %p113 = scmp.eq.s32.totalorder %s112, 0
    %s115 = sadd.s32 %s114, 1
    %s116 = scalar_select %p113, %s114, %s115
    %p119 = pneg %p113
    %p120 = scmp.eq.s32.totalorder %s10, 1
    %p121 = por %p119, %p120
    %p122 = scmp.ne.s32.totalorder %s114, %s117
    %p123 = scmp.eq.s32.totalorder %s10, 0
    %p124 = por %p122, %p123
    %p125 = scmp.ne.s32.totalorder %s114, %s117
    %p126 = scmp.eq.s32.totalorder %s15, 1
    %p127 = por %p125, %p126
    %p128 = scmp.ne.s32.totalorder %s117, %s118
    %p129 = scmp.eq.s32.totalorder %s15, 0
    %p130 = por %p128, %p129
    %p131 = scmp.ne.s32.totalorder %s117, %s118
    %p132 = scmp.eq.s32.totalorder %s16, 1
    %p133 = por %p131, %p132
    %p135 = scmp.ne.s32.totalorder %s118, %s134
    %p136 = scmp.eq.s32.totalorder %s16, 0
    %p137 = por %p135, %p136
    %p138 = scmp.le.s32.totalorder 1, %s10
    %p139 = scmp.lt.s32.totalorder %s10, 3
    %p140 = pnand %p138, %p139
    %p141 = pneg %p140
    // Predicated region
    $region9: #{bottleneck_block_nhwc.7} parent=5 // pred_check
      _
    $region10: #{bottleneck_block_nhwc.7} parent=5 // pred_check_branch
      %143 = sbr.rel (%p140) target = $region12
    $region11: #{bottleneck_block_nhwc.7} parent=5 // pred_region
      %s144 = ssub.s32 %s10, 1
      // Predicated region
      $region13: #{bottleneck_block_nhwc.7} parent=11 // pred_check
        %p145 = pneg %p83
      $region14: #{bottleneck_block_nhwc.7} parent=11 // pred_check_branch
        %147 = sbr.rel (%p145) target = $region16
      $region15: #{bottleneck_block_nhwc.7} parent=11 // pred_region
        _
      $region16: #{bottleneck_block_nhwc.7} parent=11 // pred_fallthru
        _
      // Predicated region
      $region17: #{bottleneck_block_nhwc.7} parent=11 // pred_check
        %p148 = pneg %p104
      $region18: #{bottleneck_block_nhwc.7} parent=11 // pred_check_branch
        %150 = sbr.rel (%p148) target = $region20
      $region19: #{bottleneck_block_nhwc.7} parent=11 // pred_region
        _
      $region20: #{bottleneck_block_nhwc.7} parent=11 // pred_fallthru
        _
    $region12: #{bottleneck_block_nhwc.7} parent=5 // pred_fallthru
      _
    %p151 = scmp.lt.s32.totalorder %s10, 2
    // Predicated region
    $region21: #{bottleneck_block_nhwc.7} parent=5 // pred_check
      %p152 = pneg %p151
    $region22: #{bottleneck_block_nhwc.7} parent=5 // pred_check_branch
      %154 = sbr.rel (%p152) target = $region24
    $region23: #{bottleneck_block_nhwc.7} parent=5 // pred_region
      // Predicated region
      $region25: #{bottleneck_block_nhwc.7} parent=23 // pred_check
        %p155 = pneg %p30
      $region26: #{bottleneck_block_nhwc.7} parent=23 // pred_check_branch
        %157 = sbr.rel (%p155) target = $region28
      $region27: #{bottleneck_block_nhwc.7} parent=23 // pred_region
        %s158 = smul.u32 32, %s10
        %p159 = scmp.lt.s32.totalorder %s158, 63
        %s160 = scalar_select %p159, %s158, 63
        %s161 = smul.addr %s160, 8
        %s162 = scalar_lea.vmem %s0, %s161
        %s163 = smul.u32 32, %s10
      $region28: #{bottleneck_block_nhwc.7} parent=23 // pred_fallthru
        _
      // Predicated region
      $region29: #{bottleneck_block_nhwc.7} parent=23 // pred_check
        %p164 = pneg %p56
      $region30: #{bottleneck_block_nhwc.7} parent=23 // pred_check_branch
        %166 = sbr.rel (%p164) target = $region32
      $region31: #{bottleneck_block_nhwc.7} parent=23 // pred_region
        %s167 = smul.u32 32, %s10
        %p168 = scmp.lt.s32.totalorder %s167, 63
        %s169 = scalar_select %p168, %s167, 63
        %s170 = smul.addr %s169, 4
        %s171 = scalar_lea.vmem %s1, %s170
        %s172 = smul.u32 32, %s10
      $region32: #{bottleneck_block_nhwc.7} parent=23 // pred_fallthru
        _
    $region24: #{bottleneck_block_nhwc.7} parent=5 // pred_fallthru
      _
    %p173 = scmp.le.s32.totalorder 1, %s10
    %p174 = scmp.lt.s32.totalorder %s10, 3
    %p175 = pnand %p173, %p174
    %p176 = pneg %p175
    // Predicated region
    $region33: #{bottleneck_block_nhwc.7} parent=5 // pred_check
      _
    $region34: #{bottleneck_block_nhwc.7} parent=5 // pred_check_branch
      %178 = sbr.rel (%p175) target = $region36
    $region35: #{bottleneck_block_nhwc.7} parent=5 // pred_region
      %s179 = ssub.s32 %s10, 1
      %s180 = smul.u32 32, %s15
      %p181 = scmp.lt.s32.totalorder %s180, 63
      %s182 = scalar_select %p181, %s180, 63
      %s183 = smul.addr %s182, 8
      %s184 = scalar_lea.vmem %s0, %s183
      %p185 = pneg %p36
      %p186 = pneg %p33
      %s187 = smul.u32 32, %s15
      %p188 = scmp.lt.s32.totalorder %s187, 63
      %s189 = scalar_select %p188, %s187, 63
      %s190 = smul.addr %s189, 4
      %s191 = scalar_lea.vmem %s1, %s190
      %p192 = pneg %p62
      %p193 = pneg %p59
      %p194 = pneg %p83
      %p195 = pneg %p80
      %p196 = pneg %p104
      %p197 = pneg %p101
      %p198 = pneg %p130
      %p199 = pneg %p127
      %s200 = smul.u32 32, %s15
      %p201 = scmp.lt.s32.totalorder %s200, 63
      %s202 = scalar_select %p201, %s200, 63
      %s203 = smul.addr %s202, 8
      %s204 = scalar_lea.vmem %s4, %s203
      %s205 = smul.u32 32, %s15
      %p206 = scmp.lt.s32.totalorder %s205, 63
      %s207 = scalar_select %p206, %s205, 63
      %s208 = smul.addr %s207, 8
      %s209 = scalar_lea.vmem %s0, %s208
      %s210 = smul.u32 32, %s15
      %s211 = smul.u32 32, %s15
      %p212 = scmp.lt.s32.totalorder %s211, 63
      %s213 = scalar_select %p212, %s211, 63
      %s214 = smul.addr %s213, 4
      %s215 = scalar_lea.vmem %s1, %s214
      %s216 = smul.u32 32, %s15
      %s217 = smul.u32 32, %s15
      %p218 = scmp.lt.s32.totalorder %s217, 63
      %s219 = scalar_select %p218, %s217, 63
      %s220 = smul.addr %s219, 8
      %s221 = scalar_lea.vmem %s4, %s220
      %s222 = smul.u32 32, %s15
      %v223 = vld [vmem:[%s209] sm:$0xff]
      %v224 = vld [vmem:[%s209 + $0x8] sm:$0xff]
      %v225 = vld [vmem:[%s209 + $0x10] sm:$0xff]
      %v226 = vld [vmem:[%s209 + $0x18] sm:$0xff]
      %v227 = vld [vmem:[%s209 + $0x20] sm:$0xff]
      %v228 = vld [vmem:[%s209 + $0x28] sm:$0xff]
      %v229 = vld [vmem:[%s209 + $0x30] sm:$0xff]
      %v230 = vld [vmem:[%s209 + $0x38] sm:$0xff]
      %v231 = vld [vmem:[%s209 + $0x40] sm:$0xff]
      %v232 = vld [vmem:[%s209 + $0x48] sm:$0xff]
      %v233 = vld [vmem:[%s209 + $0x50] sm:$0xff]
      %v234 = vld [vmem:[%s209 + $0x58] sm:$0xff]
      %v235 = vld [vmem:[%s209 + $0x60] sm:$0xff]
      %v236 = vld [vmem:[%s209 + $0x68] sm:$0xff]
      %v237 = vld [vmem:[%s209 + $0x70] sm:$0xff]
      %v238 = vld [vmem:[%s209 + $0x78] sm:$0xff]
      %v239 = vld [vmem:[%s209 + $0x80] sm:$0xff]
      %v240 = vld [vmem:[%s209 + $0x88] sm:$0xff]
      %v241 = vld [vmem:[%s209 + $0x90] sm:$0xff]
      %v242 = vld [vmem:[%s209 + $0x98] sm:$0xff]
      %v243 = vld [vmem:[%s209 + $0xa0] sm:$0xff]
      %v244 = vld [vmem:[%s209 + $0xa8] sm:$0xff]
      %v245 = vld [vmem:[%s209 + $0xb0] sm:$0xff]
      %v246 = vld [vmem:[%s209 + $0xb8] sm:$0xff]
      %v247 = vld [vmem:[%s209 + $0xc0] sm:$0xff]
      %v248 = vld [vmem:[%s209 + $0xc8] sm:$0xff]
      %v249 = vld [vmem:[%s209 + $0xd0] sm:$0xff]
      %v250 = vld [vmem:[%s209 + $0xd8] sm:$0xff]
      %v251 = vld [vmem:[%s209 + $0xe0] sm:$0xff]
      %v252 = vld [vmem:[%s209 + $0xe8] sm:$0xff]
      %v253 = vld [vmem:[%s209 + $0xf0] sm:$0xff]
      %v254 = vld [vmem:[%s209 + $0xf8] sm:$0xff]
      %v255 = vld [vmem:[%s2] sm:$0x1]
      %v257 = vlaneseq
      %v258 = vshrl.u32 %v257, 7
      %v259 = vsub.s32 0, %v258
      %v260 = vrot.slane %v255, %v259
      %v262 = vmul.f32 %v223, %v260
      %v263 = vmul.f32 %v224, %v260
      %v264 = vmul.f32 %v225, %v260
      %v265 = vmul.f32 %v226, %v260
      %v266 = vmul.f32 %v227, %v260
      %v267 = vmul.f32 %v228, %v260
      %v268 = vmul.f32 %v229, %v260
      %v269 = vmul.f32 %v230, %v260
      %v270 = vmul.f32 %v231, %v260
      %v271 = vmul.f32 %v232, %v260
      %v272 = vmul.f32 %v233, %v260
      %v273 = vmul.f32 %v234, %v260
      %v274 = vmul.f32 %v235, %v260
      %v275 = vmul.f32 %v236, %v260
      %v276 = vmul.f32 %v237, %v260
      %v277 = vmul.f32 %v238, %v260
      %v278 = vmul.f32 %v239, %v260
      %v279 = vmul.f32 %v240, %v260
      %v280 = vmul.f32 %v241, %v260
      %v281 = vmul.f32 %v242, %v260
      %v282 = vmul.f32 %v243, %v260
      %v283 = vmul.f32 %v244, %v260
      %v284 = vmul.f32 %v245, %v260
      %v285 = vmul.f32 %v246, %v260
      %v286 = vmul.f32 %v247, %v260
      %v287 = vmul.f32 %v248, %v260
      %v288 = vmul.f32 %v249, %v260
      %v289 = vmul.f32 %v250, %v260
      %v290 = vmul.f32 %v251, %v260
      %v291 = vmul.f32 %v252, %v260
      %v292 = vmul.f32 %v253, %v260
      %v293 = vmul.f32 %v254, %v260
      %v294 = vld [vmem:[%s3] sm:$0x1]
      %v296 = vlaneseq
      %v297 = vshrl.u32 %v296, 7
      %v298 = vsub.s32 0, %v297
      %v299 = vrot.slane %v294, %v298
      %v301 = vadd.f32 %v262, %v299
      %v302 = vadd.f32 %v263, %v299
      %v303 = vadd.f32 %v264, %v299
      %v304 = vadd.f32 %v265, %v299
      %v305 = vadd.f32 %v266, %v299
      %v306 = vadd.f32 %v267, %v299
      %v307 = vadd.f32 %v268, %v299
      %v308 = vadd.f32 %v269, %v299
      %v309 = vadd.f32 %v270, %v299
      %v310 = vadd.f32 %v271, %v299
      %v311 = vadd.f32 %v272, %v299
      %v312 = vadd.f32 %v273, %v299
      %v313 = vadd.f32 %v274, %v299
      %v314 = vadd.f32 %v275, %v299
      %v315 = vadd.f32 %v276, %v299
      %v316 = vadd.f32 %v277, %v299
      %v317 = vadd.f32 %v278, %v299
      %v318 = vadd.f32 %v279, %v299
      %v319 = vadd.f32 %v280, %v299
      %v320 = vadd.f32 %v281, %v299
      %v321 = vadd.f32 %v282, %v299
      %v322 = vadd.f32 %v283, %v299
      %v323 = vadd.f32 %v284, %v299
      %v324 = vadd.f32 %v285, %v299
      %v325 = vadd.f32 %v286, %v299
      %v326 = vadd.f32 %v287, %v299
      %v327 = vadd.f32 %v288, %v299
      %v328 = vadd.f32 %v289, %v299
      %v329 = vadd.f32 %v290, %v299
      %v330 = vadd.f32 %v291, %v299
      %v331 = vadd.f32 %v292, %v299
      %v332 = vadd.f32 %v293, %v299
      %v333 = vld [vmem:[%s215] sm:$0xf]
      %v334 = vld [vmem:[%s215 + $0x4] sm:$0xf]
      %v335 = vld [vmem:[%s215 + $0x8] sm:$0xf]
      %v336 = vld [vmem:[%s215 + $0xc] sm:$0xf]
      %v337 = vld [vmem:[%s215 + $0x10] sm:$0xf]
      %v338 = vld [vmem:[%s215 + $0x14] sm:$0xf]
      %v339 = vld [vmem:[%s215 + $0x18] sm:$0xf]
      %v340 = vld [vmem:[%s215 + $0x1c] sm:$0xf]
      %v341 = vld [vmem:[%s215 + $0x20] sm:$0xf]
      %v342 = vld [vmem:[%s215 + $0x24] sm:$0xf]
      %v343 = vld [vmem:[%s215 + $0x28] sm:$0xf]
      %v344 = vld [vmem:[%s215 + $0x2c] sm:$0xf]
      %v345 = vld [vmem:[%s215 + $0x30] sm:$0xf]
      %v346 = vld [vmem:[%s215 + $0x34] sm:$0xf]
      %v347 = vld [vmem:[%s215 + $0x38] sm:$0xf]
      %v348 = vld [vmem:[%s215 + $0x3c] sm:$0xf]
      %v349 = vld [vmem:[%s215 + $0x40] sm:$0xf]
      %v350 = vld [vmem:[%s215 + $0x44] sm:$0xf]
      %v351 = vld [vmem:[%s215 + $0x48] sm:$0xf]
      %v352 = vld [vmem:[%s215 + $0x4c] sm:$0xf]
      %v353 = vld [vmem:[%s215 + $0x50] sm:$0xf]
      %v354 = vld [vmem:[%s215 + $0x54] sm:$0xf]
      %v355 = vld [vmem:[%s215 + $0x58] sm:$0xf]
      %v356 = vld [vmem:[%s215 + $0x5c] sm:$0xf]
      %v357 = vld [vmem:[%s215 + $0x60] sm:$0xf]
      %v358 = vld [vmem:[%s215 + $0x64] sm:$0xf]
      %v359 = vld [vmem:[%s215 + $0x68] sm:$0xf]
      %v360 = vld [vmem:[%s215 + $0x6c] sm:$0xf]
      %v361 = vld [vmem:[%s215 + $0x70] sm:$0xf]
      %v362 = vld [vmem:[%s215 + $0x74] sm:$0xf]
      %v363 = vld [vmem:[%s215 + $0x78] sm:$0xf]
      %v364 = vld [vmem:[%s215 + $0x7c] sm:$0xf]
      %v365 = vunpack.c.l.bf16 %v333
      %v366 = vunpack.c.l.bf16 %v334
      %v367 = vunpack.c.l.bf16 %v335
      %v368 = vunpack.c.l.bf16 %v336
      %v369 = vunpack.c.l.bf16 %v337
      %v370 = vunpack.c.l.bf16 %v338
      %v371 = vunpack.c.l.bf16 %v339
      %v372 = vunpack.c.l.bf16 %v340
      %v373 = vunpack.c.l.bf16 %v341
      %v374 = vunpack.c.l.bf16 %v342
      %v375 = vunpack.c.l.bf16 %v343
      %v376 = vunpack.c.l.bf16 %v344
      %v377 = vunpack.c.l.bf16 %v345
      %v378 = vunpack.c.l.bf16 %v346
      %v379 = vunpack.c.l.bf16 %v347
      %v380 = vunpack.c.l.bf16 %v348
      %v381 = vunpack.c.l.bf16 %v349
      %v382 = vunpack.c.l.bf16 %v350
      %v383 = vunpack.c.l.bf16 %v351
      %v384 = vunpack.c.l.bf16 %v352
      %v385 = vunpack.c.l.bf16 %v353
      %v386 = vunpack.c.l.bf16 %v354
      %v387 = vunpack.c.l.bf16 %v355
      %v388 = vunpack.c.l.bf16 %v356
      %v389 = vunpack.c.l.bf16 %v357
      %v390 = vunpack.c.l.bf16 %v358
      %v391 = vunpack.c.l.bf16 %v359
      %v392 = vunpack.c.l.bf16 %v360
      %v393 = vunpack.c.l.bf16 %v361
      %v394 = vunpack.c.l.bf16 %v362
      %v395 = vunpack.c.l.bf16 %v363
      %v396 = vunpack.c.l.bf16 %v364
      %v397 = vadd.f32 %v301, %v365
      %v398 = vadd.f32 %v302, %v366
      %v399 = vadd.f32 %v303, %v367
      %v400 = vadd.f32 %v304, %v368
      %v401 = vadd.f32 %v305, %v369
      %v402 = vadd.f32 %v306, %v370
      %v403 = vadd.f32 %v307, %v371
      %v404 = vadd.f32 %v308, %v372
      %v405 = vadd.f32 %v309, %v373
      %v406 = vadd.f32 %v310, %v374
      %v407 = vadd.f32 %v311, %v375
      %v408 = vadd.f32 %v312, %v376
      %v409 = vadd.f32 %v313, %v377
      %v410 = vadd.f32 %v314, %v378
      %v411 = vadd.f32 %v315, %v379
      %v412 = vadd.f32 %v316, %v380
      %v413 = vadd.f32 %v317, %v381
      %v414 = vadd.f32 %v318, %v382
      %v415 = vadd.f32 %v319, %v383
      %v416 = vadd.f32 %v320, %v384
      %v417 = vadd.f32 %v321, %v385
      %v418 = vadd.f32 %v322, %v386
      %v419 = vadd.f32 %v323, %v387
      %v420 = vadd.f32 %v324, %v388
      %v421 = vadd.f32 %v325, %v389
      %v422 = vadd.f32 %v326, %v390
      %v423 = vadd.f32 %v327, %v391
      %v424 = vadd.f32 %v328, %v392
      %v425 = vadd.f32 %v329, %v393
      %v426 = vadd.f32 %v330, %v394
      %v427 = vadd.f32 %v331, %v395
      %v428 = vadd.f32 %v332, %v396
      %v429 = vmax.f32 %v397, 0.0
      %v430 = vmax.f32 %v398, 0.0
      %v431 = vmax.f32 %v399, 0.0
      %v432 = vmax.f32 %v400, 0.0
      %v433 = vmax.f32 %v401, 0.0
      %v434 = vmax.f32 %v402, 0.0
      %v435 = vmax.f32 %v403, 0.0
      %v436 = vmax.f32 %v404, 0.0
      %v437 = vmax.f32 %v405, 0.0
      %v438 = vmax.f32 %v406, 0.0
      %v439 = vmax.f32 %v407, 0.0
      %v440 = vmax.f32 %v408, 0.0
      %v441 = vmax.f32 %v409, 0.0
      %v442 = vmax.f32 %v410, 0.0
      %v443 = vmax.f32 %v411, 0.0
      %v444 = vmax.f32 %v412, 0.0
      %v445 = vmax.f32 %v413, 0.0
      %v446 = vmax.f32 %v414, 0.0
      %v447 = vmax.f32 %v415, 0.0
      %v448 = vmax.f32 %v416, 0.0
      %v449 = vmax.f32 %v417, 0.0
      %v450 = vmax.f32 %v418, 0.0
      %v451 = vmax.f32 %v419, 0.0
      %v452 = vmax.f32 %v420, 0.0
      %v453 = vmax.f32 %v421, 0.0
      %v454 = vmax.f32 %v422, 0.0
      %v455 = vmax.f32 %v423, 0.0
      %v456 = vmax.f32 %v424, 0.0
      %v457 = vmax.f32 %v425, 0.0
      %v458 = vmax.f32 %v426, 0.0
      %v459 = vmax.f32 %v427, 0.0
      %v460 = vmax.f32 %v428, 0.0
      %461 = vst [vmem:[%s221] sm:$0xff] %v429
      %462 = vst [vmem:[%s221 + $0x8] sm:$0xff] %v430
      %463 = vst [vmem:[%s221 + $0x10] sm:$0xff] %v431
      %464 = vst [vmem:[%s221 + $0x18] sm:$0xff] %v432
      %465 = vst [vmem:[%s221 + $0x20] sm:$0xff] %v433
      %466 = vst [vmem:[%s221 + $0x28] sm:$0xff] %v434
      %467 = vst [vmem:[%s221 + $0x30] sm:$0xff] %v435
      %468 = vst [vmem:[%s221 + $0x38] sm:$0xff] %v436
      %469 = vst [vmem:[%s221 + $0x40] sm:$0xff] %v437
      %470 = vst [vmem:[%s221 + $0x48] sm:$0xff] %v438
      %471 = vst [vmem:[%s221 + $0x50] sm:$0xff] %v439
      %472 = vst [vmem:[%s221 + $0x58] sm:$0xff] %v440
      %473 = vst [vmem:[%s221 + $0x60] sm:$0xff] %v441
      %474 = vst [vmem:[%s221 + $0x68] sm:$0xff] %v442
      %475 = vst [vmem:[%s221 + $0x70] sm:$0xff] %v443
      %476 = vst [vmem:[%s221 + $0x78] sm:$0xff] %v444
      %477 = vst [vmem:[%s221 + $0x80] sm:$0xff] %v445
      %478 = vst [vmem:[%s221 + $0x88] sm:$0xff] %v446
      %479 = vst [vmem:[%s221 + $0x90] sm:$0xff] %v447
      %480 = vst [vmem:[%s221 + $0x98] sm:$0xff] %v448
      %481 = vst [vmem:[%s221 + $0xa0] sm:$0xff] %v449
      %482 = vst [vmem:[%s221 + $0xa8] sm:$0xff] %v450
      %483 = vst [vmem:[%s221 + $0xb0] sm:$0xff] %v451
      %484 = vst [vmem:[%s221 + $0xb8] sm:$0xff] %v452
      %485 = vst [vmem:[%s221 + $0xc0] sm:$0xff] %v453
      %486 = vst [vmem:[%s221 + $0xc8] sm:$0xff] %v454
      %487 = vst [vmem:[%s221 + $0xd0] sm:$0xff] %v455
      %488 = vst [vmem:[%s221 + $0xd8] sm:$0xff] %v456
      %489 = vst [vmem:[%s221 + $0xe0] sm:$0xff] %v457
      %490 = vst [vmem:[%s221 + $0xe8] sm:$0xff] %v458
      %491 = vst [vmem:[%s221 + $0xf0] sm:$0xff] %v459
      %492 = vst [vmem:[%s221 + $0xf8] sm:$0xff] %v460
      %s493 = smul.u32 32, %s15
      %p494 = scmp.lt.s32.totalorder %s493, 63
      %s495 = scalar_select %p494, %s493, 63
      %s496 = smul.addr %s495, 8
      %s497 = scalar_lea.vmem %s4, %s496
      // Predicated region
      $region37: #{bottleneck_block_nhwc.7} parent=35 // pred_check
        %p498 = pneg %p127
      $region38: #{bottleneck_block_nhwc.7} parent=35 // pred_check_branch
        %500 = sbr.rel (%p498) target = $region40
      $region39: #{bottleneck_block_nhwc.7} parent=35 // pred_region
        %s501 = smul.u32 32, %s15
      $region40: #{bottleneck_block_nhwc.7} parent=35 // pred_fallthru
        _
    $region36: #{bottleneck_block_nhwc.7} parent=5 // pred_fallthru
      _
    %p502 = scmp.le.s32.totalorder 2, %s10
    // Predicated region
    $region41: #{bottleneck_block_nhwc.7} parent=5 // pred_check
      %p503 = pneg %p502
    $region42: #{bottleneck_block_nhwc.7} parent=5 // pred_check_branch
      %505 = sbr.rel (%p503) target = $region44
    $region43: #{bottleneck_block_nhwc.7} parent=5 // pred_region
      %s506 = ssub.s32 %s10, 2
      // Predicated region
      $region45: #{bottleneck_block_nhwc.7} parent=43 // pred_check
        %p507 = pneg %p133
      $region46: #{bottleneck_block_nhwc.7} parent=43 // pred_check_branch
        %509 = sbr.rel (%p507) target = $region48
      $region47: #{bottleneck_block_nhwc.7} parent=43 // pred_region
        %s510 = smul.u32 32, %s16
        %p511 = scmp.lt.s32.totalorder %s510, 63
        %s512 = scalar_select %p511, %s510, 63
        %s513 = smul.addr %s512, 8
        %s514 = scalar_lea.vmem %s4, %s513
      $region48: #{bottleneck_block_nhwc.7} parent=43 // pred_fallthru
        _
    $region44: #{bottleneck_block_nhwc.7} parent=5 // pred_fallthru
      _
  $region6: #{bottleneck_block_nhwc.7} parent=0 // loop_footer
    %s14 = sadd.s32 1, %s10
  $region7: #{bottleneck_block_nhwc.7} parent=0 // loop_footer_branch
    %9 = sbr.rel target = $region3
  $region8: #{bottleneck_block_nhwc.7} parent=0 // loop_exit
    _

// kernel: bottleneck_block_nhwc.6
$region0: #{bottleneck_block_nhwc.6}
  #allocation0 [shape = 'u32[]', space=smem, size = 0x4, offset = 0x4, fixed_abs, tag = 'smem constant byte address 0x4 - core index']
  #allocation1 [shape = 'u32[144,128]{1,0:T(1,128)}', space=vmem, size = 0x12000, scoped, tag = 'internal scratch']
  %s0 = inlined_call_operand.vmem [shape: bf16[512,128], index: 0, kind: input, shape index: {}]
  %s1 = inlined_call_operand.vmem [shape: bf16[128,128], index: 1, kind: input, shape index: {}]
  %s2 = inlined_call_operand.vmem [shape: f32[1,128], index: 2, kind: input, shape index: {}]
  %s3 = inlined_call_operand.vmem [shape: f32[1,128], index: 3, kind: input, shape index: {}]
  %s4 = inlined_call_operand.vmem [shape: f32[512,128], index: 4, kind: output, shape index: {0}]
  %s5 = inlined_call_operand.vmem [shape: f32[2,2,128], index: 5, kind: output, shape index: {1}]
  %6 = xla_tuple %s4, %s5
  %s7 = sld [smem:[#allocation0]]
  $region57: #{bottleneck_block_nhwc.6} parent=0
    _
  %s9 = ssub.s32 1, %s7
  %s10 = scalar_select 0, %s9, %s7
  loop: start=0, step=1, limit=4
  $region2: #{bottleneck_block_nhwc.6} parent=0 // loop_pre_header
    _
  $region3: #{bottleneck_block_nhwc.6} parent=0 // loop_header
    %s12 = sphi 0, %s16
    %p13 = scmp.ge.s32.totalorder %s12, 4
    %s22 = sphi 0, %s24
    %s25 = sphi 0, %s22
    %s26 = sphi 0, %s25
    %s42 = sphi 0, %s26
    %s46 = sphi 0, %s46
    %s48 = sphi 0, %s46
    %s49 = sphi 0, %s48
    %s63 = sphi 0, %s49
    %s67 = sphi 0, %s67
    %s69 = sphi 0, %s67
    %s70 = sphi 0, %s69
    %s84 = sphi 0, %s70
    %s88 = sphi 0, %s88
    %s90 = sphi 0, %s88
    %s91 = sphi 0, %s90
    %s105 = sphi 0, %s91
    %s111 = sphi 0, %s113
    %s114 = sphi 0, %s111
    %s115 = sphi 0, %s114
    %s131 = sphi 0, %s115
    %s137 = sphi 0, %s139
    %s140 = sphi 0, %s137
    %s141 = sphi 0, %s140
    %s157 = sphi 0, %s141
  $region4: #{bottleneck_block_nhwc.6} parent=0 // loop_header_branch
    %15 = sbr.rel (%p13) target = $region8
  $region5: #{bottleneck_block_nhwc.6} parent=0 // loop_body
    %s17 = ssub.s32 %s12, 1
    %s18 = ssub.s32 %s12, 2
    %s19 = sadd.s32 %s12, 1
    %s20 = ssub.s32 %s12, %s19
    %p21 = scmp.eq.s32.totalorder %s20, 0
    %s23 = sadd.s32 %s22, 1
    %s24 = scalar_select %p21, %s22, %s23
    %p27 = pneg %p21
    %p28 = scmp.eq.s32.totalorder %s12, 1
    %p29 = por %p27, %p28
    %p30 = scmp.ne.s32.totalorder %s22, %s25
    %p31 = scmp.eq.s32.totalorder %s12, 0
    %p32 = por %p30, %p31
    %p33 = scmp.ne.s32.totalorder %s22, %s25
    %p34 = scmp.eq.s32.totalorder %s17, 1
    %p35 = por %p33, %p34
    %p36 = scmp.ne.s32.totalorder %s25, %s26
    %p37 = scmp.eq.s32.totalorder %s17, 0
    %p38 = por %p36, %p37
    %p39 = scmp.ne.s32.totalorder %s25, %s26
    %p40 = scmp.eq.s32.totalorder %s18, 1
    %p41 = por %p39, %p40
    %p43 = scmp.ne.s32.totalorder %s26, %s42
    %p44 = scmp.eq.s32.totalorder %s18, 0
    %p45 = por %p43, %p44
    %s47 = sadd.s32 %s46, 1
    %p50 = scmp.eq.s32.totalorder %s12, 1
    %p51 = scmp.ne.s32.totalorder %s46, %s48
    %p52 = scmp.eq.s32.totalorder %s12, 0
    %p53 = por %p51, %p52
    %p54 = scmp.ne.s32.totalorder %s46, %s48
    %p55 = scmp.eq.s32.totalorder %s17, 1
    %p56 = por %p54, %p55
    %p57 = scmp.ne.s32.totalorder %s48, %s49
    %p58 = scmp.eq.s32.totalorder %s17, 0
    %p59 = por %p57, %p58
    %p60 = scmp.ne.s32.totalorder %s48, %s49
    %p61 = scmp.eq.s32.totalorder %s18, 1
    %p62 = por %p60, %p61
    %p64 = scmp.ne.s32.totalorder %s49, %s63
    %p65 = scmp.eq.s32.totalorder %s18, 0
    %p66 = por %p64, %p65
    %s68 = sadd.s32 %s67, 1
    %p71 = scmp.eq.s32.totalorder %s12, 1
    %p72 = scmp.ne.s32.totalorder %s67, %s69
    %p73 = scmp.eq.s32.totalorder %s12, 0
    %p74 = por %p72, %p73
    %p75 = scmp.ne.s32.totalorder %s67, %s69
    %p76 = scmp.eq.s32.totalorder %s17, 1
    %p77 = por %p75, %p76
    %p78 = scmp.ne.s32.totalorder %s69, %s70
    %p79 = scmp.eq.s32.totalorder %s17, 0
    %p80 = por %p78, %p79
    %p81 = scmp.ne.s32.totalorder %s69, %s70
    %p82 = scmp.eq.s32.totalorder %s18, 1
    %p83 = por %p81, %p82
    %p85 = scmp.ne.s32.totalorder %s70, %s84
    %p86 = scmp.eq.s32.totalorder %s18, 0
    %p87 = por %p85, %p86
    %s89 = sadd.s32 %s88, 1
    %p92 = scmp.eq.s32.totalorder %s12, 1
    %p93 = scmp.ne.s32.totalorder %s88, %s90
    %p94 = scmp.eq.s32.totalorder %s12, 0
    %p95 = por %p93, %p94
    %p96 = scmp.ne.s32.totalorder %s88, %s90
    %p97 = scmp.eq.s32.totalorder %s17, 1
    %p98 = por %p96, %p97
    %p99 = scmp.ne.s32.totalorder %s90, %s91
    %p100 = scmp.eq.s32.totalorder %s17, 0
    %p101 = por %p99, %p100
    %p102 = scmp.ne.s32.totalorder %s90, %s91
    %p103 = scmp.eq.s32.totalorder %s18, 1
    %p104 = por %p102, %p103
    %p106 = scmp.ne.s32.totalorder %s91, %s105
    %p107 = scmp.eq.s32.totalorder %s18, 0
    %p108 = por %p106, %p107
    %s109 = ssub.s32 %s12, %s19
    %p110 = scmp.eq.s32.totalorder %s109, 0
    %s112 = sadd.s32 %s111, 1
    %s113 = scalar_select %p110, %s111, %s112
    %p116 = pneg %p110
    %p117 = scmp.eq.s32.totalorder %s12, 1
    %p118 = por %p116, %p117
    %p119 = scmp.ne.s32.totalorder %s111, %s114
    %p120 = scmp.eq.s32.totalorder %s12, 0
    %p121 = por %p119, %p120
    %p122 = scmp.ne.s32.totalorder %s111, %s114
    %p123 = scmp.eq.s32.totalorder %s17, 1
    %p124 = por %p122, %p123
    %p125 = scmp.ne.s32.totalorder %s114, %s115
    %p126 = scmp.eq.s32.totalorder %s17, 0
    %p127 = por %p125, %p126
    %p128 = scmp.ne.s32.totalorder %s114, %s115
    %p129 = scmp.eq.s32.totalorder %s18, 1
    %p130 = por %p128, %p129
    %p132 = scmp.ne.s32.totalorder %s115, %s131
    %p133 = scmp.eq.s32.totalorder %s18, 0
    %p134 = por %p132, %p133
    %s135 = ssub.s32 %s12, %s19
    %p136 = scmp.eq.s32.totalorder %s135, 0
    %s138 = sadd.s32 %s137, 1
    %s139 = scalar_select %p136, %s137, %s138
    %p142 = pneg %p136
    %p143 = scmp.eq.s32.totalorder %s12, 1
    %p144 = por %p142, %p143
    %p145 = scmp.ne.s32.totalorder %s137, %s140
    %p146 = scmp.eq.s32.totalorder %s12, 0
    %p147 = por %p145, %p146
    %p148 = scmp.ne.s32.totalorder %s137, %s140
    %p149 = scmp.eq.s32.totalorder %s17, 1
    %p150 = por %p148, %p149
    %p151 = scmp.ne.s32.totalorder %s140, %s141
    %p152 = scmp.eq.s32.totalorder %s17, 0
    %p153 = por %p151, %p152
    %p154 = scmp.ne.s32.totalorder %s140, %s141
    %p155 = scmp.eq.s32.totalorder %s18, 1
    %p156 = por %p154, %p155
    %p158 = scmp.ne.s32.totalorder %s141, %s157
    %p159 = scmp.eq.s32.totalorder %s18, 0
    %p160 = por %p158, %p159
    %p161 = scmp.le.s32.totalorder 1, %s12
    %p162 = scmp.lt.s32.totalorder %s12, 3
    %p163 = pnand %p161, %p162
    %p164 = pneg %p163
    // Predicated region
    $region9: #{bottleneck_block_nhwc.6} parent=5 // pred_check
      _
    $region10: #{bottleneck_block_nhwc.6} parent=5 // pred_check_branch
      %166 = sbr.rel (%p163) target = $region12
    $region11: #{bottleneck_block_nhwc.6} parent=5 // pred_region
      %s167 = ssub.s32 %s12, 1
      // Predicated region
      $region13: #{bottleneck_block_nhwc.6} parent=11 // pred_check
        %p168 = pneg %p59
      $region14: #{bottleneck_block_nhwc.6} parent=11 // pred_check_branch
        %170 = sbr.rel (%p168) target = $region16
      $region15: #{bottleneck_block_nhwc.6} parent=11 // pred_region
        _
      $region16: #{bottleneck_block_nhwc.6} parent=11 // pred_fallthru
        _
      // Predicated region
      $region17: #{bottleneck_block_nhwc.6} parent=11 // pred_check
        %p171 = pneg %p80
      $region18: #{bottleneck_block_nhwc.6} parent=11 // pred_check_branch
        %173 = sbr.rel (%p171) target = $region20
      $region19: #{bottleneck_block_nhwc.6} parent=11 // pred_region
        _
      $region20: #{bottleneck_block_nhwc.6} parent=11 // pred_fallthru
        _
      // Predicated region
      $region21: #{bottleneck_block_nhwc.6} parent=11 // pred_check
        %p174 = pneg %p101
      $region22: #{bottleneck_block_nhwc.6} parent=11 // pred_check_branch
        %176 = sbr.rel (%p174) target = $region24
      $region23: #{bottleneck_block_nhwc.6} parent=11 // pred_region
        _
      $region24: #{bottleneck_block_nhwc.6} parent=11 // pred_fallthru
        _
    $region12: #{bottleneck_block_nhwc.6} parent=5 // pred_fallthru
      _
    %p177 = scmp.lt.s32.totalorder %s12, 2
    // Predicated region
    $region25: #{bottleneck_block_nhwc.6} parent=5 // pred_check
      %p178 = pneg %p177
    $region26: #{bottleneck_block_nhwc.6} parent=5 // pred_check_branch
      %180 = sbr.rel (%p178) target = $region28
    $region27: #{bottleneck_block_nhwc.6} parent=5 // pred_region
      // Predicated region
      $region29: #{bottleneck_block_nhwc.6} parent=27 // pred_check
        %p181 = pneg %p32
      $region30: #{bottleneck_block_nhwc.6} parent=27 // pred_check_branch
        %183 = sbr.rel (%p181) target = $region32
      $region31: #{bottleneck_block_nhwc.6} parent=27 // pred_region
        %s184 = smul.u32 32, %s12
        %p185 = scmp.lt.s32.totalorder %s184, 63
        %s186 = scalar_select %p185, %s184, 63
        %s187 = smul.addr %s186, 4
        %s188 = scalar_lea.vmem %s0, %s187
        %s189 = smul.u32 32, %s12
      $region32: #{bottleneck_block_nhwc.6} parent=27 // pred_fallthru
        _
    $region28: #{bottleneck_block_nhwc.6} parent=5 // pred_fallthru
      _
    %p190 = scmp.le.s32.totalorder 1, %s12
    %p191 = scmp.lt.s32.totalorder %s12, 3
    %p192 = pnand %p190, %p191
    %p193 = pneg %p192
    // Predicated region
    $region33: #{bottleneck_block_nhwc.6} parent=5 // pred_check
      _
    $region34: #{bottleneck_block_nhwc.6} parent=5 // pred_check_branch
      %195 = sbr.rel (%p192) target = $region36
    $region35: #{bottleneck_block_nhwc.6} parent=5 // pred_region
      %s196 = ssub.s32 %s12, 1
      %s197 = smul.u32 32, %s17
      %p198 = scmp.lt.s32.totalorder %s197, 63
      %s199 = scalar_select %p198, %s197, 63
      %s200 = smul.addr %s199, 4
      %s201 = scalar_lea.vmem %s0, %s200
      %p202 = pneg %p38
      %p203 = pneg %p35
      %p204 = pneg %p59
      %p205 = pneg %p56
      %p206 = pneg %p80
      %p207 = pneg %p77
      %p208 = pneg %p101
      %p209 = pneg %p98
      %p210 = pneg %p127
      %p211 = pneg %p124
      %s212 = smul.u32 32, %s17
      %p213 = scmp.lt.s32.totalorder %s212, 63
      %s214 = scalar_select %p213, %s212, 63
      %s215 = smul.addr %s214, 8
      %s216 = scalar_lea.vmem %s4, %s215
      %p217 = pneg %p153
      %p218 = pneg %p150
      %p219 = scmp.lt.s32.totalorder %s17, 1
      %s220 = scalar_select %p219, %s17, 1
      %s221 = smul.addr %s220, 2
      %s222 = scalar_lea.vmem %s5, %s221
      %s223 = smul.u32 32, %s17
      %p224 = scmp.lt.s32.totalorder %s223, 63
      %s225 = scalar_select %p224, %s223, 63
      %s226 = smul.addr %s225, 4
      %s227 = scalar_lea.vmem %s0, %s226
      %s228 = smul.u32 32, %s17
      %s229 = smul.u32 32, %s17
      %p230 = scmp.lt.s32.totalorder %s229, 63
      %s231 = scalar_select %p230, %s229, 63
      %s232 = smul.addr %s231, 8
      %s233 = scalar_lea.vmem %s4, %s232
      %s234 = smul.u32 32, %s17
      %p235 = scmp.lt.s32.totalorder %s17, 1
      %s236 = scalar_select %p235, %s17, 1
      %s237 = smul.addr %s236, 2
      %s238 = scalar_lea.vmem %s5, %s237
      %v240 = vld [vmem:[%s227] sm:$0xf]
      %v241 = vld [vmem:[%s227 + $0x4] sm:$0xf]
      %v242 = vld [vmem:[%s227 + $0x8] sm:$0xf]
      %v243 = vld [vmem:[%s227 + $0xc] sm:$0xf]
      %v244 = vld [vmem:[%s227 + $0x10] sm:$0xf]
      %v245 = vld [vmem:[%s227 + $0x14] sm:$0xf]
      %v246 = vld [vmem:[%s227 + $0x18] sm:$0xf]
      %v247 = vld [vmem:[%s227 + $0x1c] sm:$0xf]
      %v248 = vld [vmem:[%s227 + $0x20] sm:$0xf]
      %v249 = vld [vmem:[%s227 + $0x24] sm:$0xf]
      %v250 = vld [vmem:[%s227 + $0x28] sm:$0xf]
      %v251 = vld [vmem:[%s227 + $0x2c] sm:$0xf]
      %v252 = vld [vmem:[%s227 + $0x30] sm:$0xf]
      %v253 = vld [vmem:[%s227 + $0x34] sm:$0xf]
      %v254 = vld [vmem:[%s227 + $0x38] sm:$0xf]
      %v255 = vld [vmem:[%s227 + $0x3c] sm:$0xf]
      %v256 = vld [vmem:[%s227 + $0x40] sm:$0xf]
      %v257 = vld [vmem:[%s227 + $0x44] sm:$0xf]
      %v258 = vld [vmem:[%s227 + $0x48] sm:$0xf]
      %v259 = vld [vmem:[%s227 + $0x4c] sm:$0xf]
      %v260 = vld [vmem:[%s227 + $0x50] sm:$0xf]
      %v261 = vld [vmem:[%s227 + $0x54] sm:$0xf]
      %v262 = vld [vmem:[%s227 + $0x58] sm:$0xf]
      %v263 = vld [vmem:[%s227 + $0x5c] sm:$0xf]
      %v264 = vld [vmem:[%s227 + $0x60] sm:$0xf]
      %v265 = vld [vmem:[%s227 + $0x64] sm:$0xf]
      %v266 = vld [vmem:[%s227 + $0x68] sm:$0xf]
      %v267 = vld [vmem:[%s227 + $0x6c] sm:$0xf]
      %v268 = vld [vmem:[%s227 + $0x70] sm:$0xf]
      %v269 = vld [vmem:[%s227 + $0x74] sm:$0xf]
      %v270 = vld [vmem:[%s227 + $0x78] sm:$0xf]
      %v271 = vld [vmem:[%s227 + $0x7c] sm:$0xf]
      %v272 = vunpack.c.l.bf16 %v240
      %v273 = vunpack.c.l.bf16 %v241
      %v274 = vunpack.c.l.bf16 %v242
      %v275 = vunpack.c.l.bf16 %v243
      %v276 = vunpack.c.l.bf16 %v244
      %v277 = vunpack.c.l.bf16 %v245
      %v278 = vunpack.c.l.bf16 %v246
      %v279 = vunpack.c.l.bf16 %v247
      %v280 = vunpack.c.l.bf16 %v248
      %v281 = vunpack.c.l.bf16 %v249
      %v282 = vunpack.c.l.bf16 %v250
      %v283 = vunpack.c.l.bf16 %v251
      %v284 = vunpack.c.l.bf16 %v252
      %v285 = vunpack.c.l.bf16 %v253
      %v286 = vunpack.c.l.bf16 %v254
      %v287 = vunpack.c.l.bf16 %v255
      %v288 = vunpack.c.l.bf16 %v256
      %v289 = vunpack.c.l.bf16 %v257
      %v290 = vunpack.c.l.bf16 %v258
      %v291 = vunpack.c.l.bf16 %v259
      %v292 = vunpack.c.l.bf16 %v260
      %v293 = vunpack.c.l.bf16 %v261
      %v294 = vunpack.c.l.bf16 %v262
      %v295 = vunpack.c.l.bf16 %v263
      %v296 = vunpack.c.l.bf16 %v264
      %v297 = vunpack.c.l.bf16 %v265
      %v298 = vunpack.c.l.bf16 %v266
      %v299 = vunpack.c.l.bf16 %v267
      %v300 = vunpack.c.l.bf16 %v268
      %v301 = vunpack.c.l.bf16 %v269
      %v302 = vunpack.c.l.bf16 %v270
      %v303 = vunpack.c.l.bf16 %v271
      %v304 = vld [vmem:[%s2] sm:$0x1]
      %v306 = vlaneseq
      %v307 = vshrl.u32 %v306, 7
      %v308 = vsub.s32 0, %v307
      %v309 = vrot.slane %v304, %v308
      %v311 = vmul.f32 %v272, %v309
      %v312 = vmul.f32 %v273, %v309
      %v313 = vmul.f32 %v274, %v309
      %v314 = vmul.f32 %v275, %v309
      %v315 = vmul.f32 %v276, %v309
      %v316 = vmul.f32 %v277, %v309
      %v317 = vmul.f32 %v278, %v309
      %v318 = vmul.f32 %v279, %v309
      %v319 = vmul.f32 %v280, %v309
      %v320 = vmul.f32 %v281, %v309
      %v321 = vmul.f32 %v282, %v309
      %v322 = vmul.f32 %v283, %v309
      %v323 = vmul.f32 %v284, %v309
      %v324 = vmul.f32 %v285, %v309
      %v325 = vmul.f32 %v286, %v309
      %v326 = vmul.f32 %v287, %v309
      %v327 = vmul.f32 %v288, %v309
      %v328 = vmul.f32 %v289, %v309
      %v329 = vmul.f32 %v290, %v309
      %v330 = vmul.f32 %v291, %v309
      %v331 = vmul.f32 %v292, %v309
      %v332 = vmul.f32 %v293, %v309
      %v333 = vmul.f32 %v294, %v309
      %v334 = vmul.f32 %v295, %v309
      %v335 = vmul.f32 %v296, %v309
      %v336 = vmul.f32 %v297, %v309
      %v337 = vmul.f32 %v298, %v309
      %v338 = vmul.f32 %v299, %v309
      %v339 = vmul.f32 %v300, %v309
      %v340 = vmul.f32 %v301, %v309
      %v341 = vmul.f32 %v302, %v309
      %v342 = vmul.f32 %v303, %v309
      %v343 = vld [vmem:[%s3] sm:$0x1]
      %v345 = vlaneseq
      %v346 = vshrl.u32 %v345, 7
      %v347 = vsub.s32 0, %v346
      %v348 = vrot.slane %v343, %v347
      %v350 = vadd.f32 %v311, %v348
      %v351 = vadd.f32 %v312, %v348
      %v352 = vadd.f32 %v313, %v348
      %v353 = vadd.f32 %v314, %v348
      %v354 = vadd.f32 %v315, %v348
      %v355 = vadd.f32 %v316, %v348
      %v356 = vadd.f32 %v317, %v348
      %v357 = vadd.f32 %v318, %v348
      %v358 = vadd.f32 %v319, %v348
      %v359 = vadd.f32 %v320, %v348
      %v360 = vadd.f32 %v321, %v348
      %v361 = vadd.f32 %v322, %v348
      %v362 = vadd.f32 %v323, %v348
      %v363 = vadd.f32 %v324, %v348
      %v364 = vadd.f32 %v325, %v348
      %v365 = vadd.f32 %v326, %v348
      %v366 = vadd.f32 %v327, %v348
      %v367 = vadd.f32 %v328, %v348
      %v368 = vadd.f32 %v329, %v348
      %v369 = vadd.f32 %v330, %v348
      %v370 = vadd.f32 %v331, %v348
      %v371 = vadd.f32 %v332, %v348
      %v372 = vadd.f32 %v333, %v348
      %v373 = vadd.f32 %v334, %v348
      %v374 = vadd.f32 %v335, %v348
      %v375 = vadd.f32 %v336, %v348
      %v376 = vadd.f32 %v337, %v348
      %v377 = vadd.f32 %v338, %v348
      %v378 = vadd.f32 %v339, %v348
      %v379 = vadd.f32 %v340, %v348
      %v380 = vadd.f32 %v341, %v348
      %v381 = vadd.f32 %v342, %v348
      %v382 = vmax.f32 %v350, 0.0
      %v383 = vmax.f32 %v351, 0.0
      %v384 = vmax.f32 %v352, 0.0
      %v385 = vmax.f32 %v353, 0.0
      %v386 = vmax.f32 %v354, 0.0
      %v387 = vmax.f32 %v355, 0.0
      %v388 = vmax.f32 %v356, 0.0
      %v389 = vmax.f32 %v357, 0.0
      %v390 = vmax.f32 %v358, 0.0
      %v391 = vmax.f32 %v359, 0.0
      %v392 = vmax.f32 %v360, 0.0
      %v393 = vmax.f32 %v361, 0.0
      %v394 = vmax.f32 %v362, 0.0
      %v395 = vmax.f32 %v363, 0.0
      %v396 = vmax.f32 %v364, 0.0
      %v397 = vmax.f32 %v365, 0.0
      %v398 = vmax.f32 %v366, 0.0
      %v399 = vmax.f32 %v367, 0.0
      %v400 = vmax.f32 %v368, 0.0
      %v401 = vmax.f32 %v369, 0.0
      %v402 = vmax.f32 %v370, 0.0
      %v403 = vmax.f32 %v371, 0.0
      %v404 = vmax.f32 %v372, 0.0
      %v405 = vmax.f32 %v373, 0.0
      %v406 = vmax.f32 %v374, 0.0
      %v407 = vmax.f32 %v375, 0.0
      %v408 = vmax.f32 %v376, 0.0
      %v409 = vmax.f32 %v377, 0.0
      %v410 = vmax.f32 %v378, 0.0
      %v411 = vmax.f32 %v379, 0.0
      %v412 = vmax.f32 %v380, 0.0
      %v413 = vmax.f32 %v381, 0.0
      %v414 = vpack.c.bf16 %v383, %v382
      %v415 = vpack.c.bf16 %v385, %v384
      %v416 = vpack.c.bf16 %v387, %v386
      %v417 = vpack.c.bf16 %v389, %v388
      %v418 = vpack.c.bf16 %v391, %v390
      %v419 = vpack.c.bf16 %v393, %v392
      %v420 = vpack.c.bf16 %v395, %v394
      %v421 = vpack.c.bf16 %v397, %v396
      %v422 = vpack.c.bf16 %v399, %v398
      %v423 = vpack.c.bf16 %v401, %v400
      %v424 = vpack.c.bf16 %v403, %v402
      %v425 = vpack.c.bf16 %v405, %v404
      %v426 = vpack.c.bf16 %v407, %v406
      %v427 = vpack.c.bf16 %v409, %v408
      %v428 = vpack.c.bf16 %v411, %v410
      %v429 = vpack.c.bf16 %v413, %v412
      %v430 = vld [vmem:[%s1] sm:$0xf]
      %v431 = vld [vmem:[%s1 + $0x4] sm:$0xf]
      %v432 = vld [vmem:[%s1 + $0x8] sm:$0xf]
      %v433 = vld [vmem:[%s1 + $0xc] sm:$0xf]
      %v434 = vld [vmem:[%s1 + $0x10] sm:$0xf]
      %v435 = vld [vmem:[%s1 + $0x14] sm:$0xf]
      %v436 = vld [vmem:[%s1 + $0x18] sm:$0xf]
      %v437 = vld [vmem:[%s1 + $0x1c] sm:$0xf]
      %v438 = vld [vmem:[%s1 + $0x20] sm:$0xf]
      %v439 = vld [vmem:[%s1 + $0x24] sm:$0xf]
      %v440 = vld [vmem:[%s1 + $0x28] sm:$0xf]
      %v441 = vld [vmem:[%s1 + $0x2c] sm:$0xf]
      %v442 = vld [vmem:[%s1 + $0x30] sm:$0xf]
      %v443 = vld [vmem:[%s1 + $0x34] sm:$0xf]
      %v444 = vld [vmem:[%s1 + $0x38] sm:$0xf]
      %v445 = vld [vmem:[%s1 + $0x3c] sm:$0xf]
      %v462 = vunpack.c.l.b16 %v430
      %v463 = vunpack.c.l.b16 %v431
      %v464 = vunpack.c.l.b16 %v432
      %v465 = vunpack.c.l.b16 %v433
      %v466 = vunpack.c.l.b16 %v434
      %v467 = vunpack.c.l.b16 %v435
      %v468 = vunpack.c.l.b16 %v436
      %v469 = vunpack.c.l.b16 %v437
      %v470 = vunpack.c.l.b16 %v438
      %v471 = vunpack.c.l.b16 %v439
      %v472 = vunpack.c.l.b16 %v440
      %v473 = vunpack.c.l.b16 %v441
      %v474 = vunpack.c.l.b16 %v442
      %v475 = vunpack.c.l.b16 %v443
      %v476 = vunpack.c.l.b16 %v444
      %v477 = vunpack.c.l.b16 %v445
      %v478 = vpack.c.b16 %v463, %v462
      %v479 = vpack.c.b16 %v465, %v464
      %v480 = vpack.c.b16 %v467, %v466
      %v481 = vpack.c.b16 %v469, %v468
      %v482 = vpack.c.b16 %v471, %v470
      %v483 = vpack.c.b16 %v473, %v472
      %v484 = vpack.c.b16 %v475, %v474
      %v485 = vpack.c.b16 %v477, %v476
      %494 = vmatprep.subr.bf16.mxu0 0
      %495 = vmatpush1.bf16.msra.mxu0 %v478
      %496 = vmatprep.subr.bf16.mxu0 0
      %497 = vmatpush1.bf16.msra.mxu0 %v479
      %498 = vmatprep.subr.bf16.mxu0 0
      %499 = vmatpush1.bf16.msra.mxu0 %v480
      %500 = vmatprep.subr.bf16.mxu0 0
      %501 = vmatpush1.bf16.msra.mxu0 %v481
      %502 = vmatprep.subr.bf16.mxu0 0
      %503 = vmatpush1.bf16.msra.mxu0 %v482
      %504 = vmatprep.subr.bf16.mxu0 0
      %505 = vmatpush1.bf16.msra.mxu0 %v483
      %506 = vmatprep.subr.bf16.mxu0 0
      %507 = vmatpush1.bf16.msra.mxu0 %v484
      %508 = vmatprep.subr.bf16.mxu0 0
      %509 = vmatpush1.bf16.msra.mxu0 %v485
      %510 = vmatprep.subr.bf16.mxu0 0
      %511 = vmatpush1.bf16.msra.mxu0 0
      %512 = vmatprep.subr.bf16.mxu0 0
      %513 = vmatpush1.bf16.msra.mxu0 0
      %514 = vmatprep.subr.bf16.mxu0 0
      %515 = vmatpush1.bf16.msra.mxu0 0
      %516 = vmatprep.subr.bf16.mxu0 0
      %517 = vmatpush1.bf16.msra.mxu0 0
      %518 = vmatprep.subr.bf16.mxu0 0
      %519 = vmatpush1.bf16.msra.mxu0 0
      %520 = vmatprep.subr.bf16.mxu0 0
      %521 = vmatpush1.bf16.msra.mxu0 0
      %522 = vmatprep.subr.bf16.mxu0 0
      %523 = vmatpush1.bf16.msra.mxu0 0
      %524 = vmatprep.subr.bf16.mxu0 0
      %525 = vmatpush1.bf16.msra.mxu0 0
      %526 = vmatprep.mubr.bf16.mxu0 0
      %527 = vmatmul.mubr.bf16.gmra.mrb[0].mxu0 %v414
      %v528 = vpop.f32.mrb[0].mxu0
      %v529 = vadd.f32 0.0, %v528
      %v530 = vpop.f32.mrb[0].mxu0
      %v531 = vpop.f32.mrb[0].mxu0
      %v532 = vadd.f32 0.0, %v531
      %v533 = vpop.f32.mrb[0].mxu0
      %534 = vmatprep.mubr.bf16.mxu0 0
      %535 = vmatmul.mubr.bf16.gmra.mrb[0].mxu0 %v415
      %v536 = vpop.f32.mrb[0].mxu0
      %v537 = vadd.f32 0.0, %v536
      %v538 = vpop.f32.mrb[0].mxu0
      %v539 = vpop.f32.mrb[0].mxu0
      %v540 = vadd.f32 0.0, %v539
      %v541 = vpop.f32.mrb[0].mxu0
      %542 = vmatprep.mubr.bf16.mxu0 0
      %543 = vmatmul.mubr.bf16.gmra.mrb[0].mxu0 %v416
      %v544 = vpop.f32.mrb[0].mxu0
      %v545 = vadd.f32 0.0, %v544
      %v546 = vpop.f32.mrb[0].mxu0
      %v547 = vpop.f32.mrb[0].mxu0
      %v548 = vadd.f32 0.0, %v547
      %v549 = vpop.f32.mrb[0].mxu0
      %550 = vmatprep.mubr.bf16.mxu0 0
      %551 = vmatmul.mubr.bf16.gmra.mrb[0].mxu0 %v417
      %v552 = vpop.f32.mrb[0].mxu0
      %v553 = vadd.f32 0.0, %v552
      %v554 = vpop.f32.mrb[0].mxu0
      %v555 = vpop.f32.mrb[0].mxu0
      %v556 = vadd.f32 0.0, %v555
      %v557 = vpop.f32.mrb[0].mxu0
      %558 = vmatprep.mubr.bf16.mxu0 0
      %559 = vmatmul.mubr.bf16.gmra.mrb[0].mxu0 %v418
      %v560 = vpop.f32.mrb[0].mxu0
      %v561 = vadd.f32 0.0, %v560
      %v562 = vpop.f32.mrb[0].mxu0
      %v563 = vpop.f32.mrb[0].mxu0
      %v564 = vadd.f32 0.0, %v563
      %v565 = vpop.f32.mrb[0].mxu0
      %566 = vmatprep.mubr.bf16.mxu0 0
      %567 = vmatmul.mubr.bf16.gmra.mrb[0].mxu0 %v419
      %v568 = vpop.f32.mrb[0].mxu0
      %v569 = vadd.f32 0.0, %v568
      %v570 = vpop.f32.mrb[0].mxu0
      %v571 = vpop.f32.mrb[0].mxu0
      %v572 = vadd.f32 0.0, %v571
      %v573 = vpop.f32.mrb[0].mxu0
      %574 = vmatprep.mubr.bf16.mxu0 0
      %575 = vmatmul.mubr.bf16.gmra.mrb[0].mxu0 %v420
      %v576 = vpop.f32.mrb[0].mxu0
      %v577 = vadd.f32 0.0, %v576
      %v578 = vpop.f32.mrb[0].mxu0
      %v579 = vpop.f32.mrb[0].mxu0
      %v580 = vadd.f32 0.0, %v579
      %v581 = vpop.f32.mrb[0].mxu0
      %582 = vmatprep.mubr.bf16.mxu0 0
      %583 = vmatmul.mubr.bf16.gmra.mrb[0].mxu0 %v421
      %v584 = vpop.f32.mrb[0].mxu0
      %v585 = vadd.f32 0.0, %v584
      %v586 = vpop.f32.mrb[0].mxu0
      %v587 = vpop.f32.mrb[0].mxu0
      %v588 = vadd.f32 0.0, %v587
      %v589 = vpop.f32.mrb[0].mxu0
      %590 = vmatprep.mubr.bf16.mxu0 0
      %591 = vmatmul.mubr.bf16.gmra.mrb[0].mxu0 %v422
      %v592 = vpop.f32.mrb[0].mxu0
      %v593 = vadd.f32 0.0, %v592
      %v594 = vpop.f32.mrb[0].mxu0
      %v595 = vpop.f32.mrb[0].mxu0
      %v596 = vadd.f32 0.0, %v595
      %v597 = vpop.f32.mrb[0].mxu0
      %598 = vmatprep.mubr.bf16.mxu0 0
      %599 = vmatmul.mubr.bf16.gmra.mrb[0].mxu0 %v423
      %v600 = vpop.f32.mrb[0].mxu0
      %v601 = vadd.f32 0.0, %v600
      %v602 = vpop.f32.mrb[0].mxu0
      %v603 = vpop.f32.mrb[0].mxu0
      %v604 = vadd.f32 0.0, %v603
      %v605 = vpop.f32.mrb[0].mxu0
      %606 = vmatprep.mubr.bf16.mxu0 0
      %607 = vmatmul.mubr.bf16.gmra.mrb[0].mxu0 %v424
      %v608 = vpop.f32.mrb[0].mxu0
      %v609 = vadd.f32 0.0, %v608
      %v610 = vpop.f32.mrb[0].mxu0
      %v611 = vpop.f32.mrb[0].mxu0
      %v612 = vadd.f32 0.0, %v611
      %v613 = vpop.f32.mrb[0].mxu0
      %614 = vmatprep.mubr.bf16.mxu0 0
      %615 = vmatmul.mubr.bf16.gmra.mrb[0].mxu0 %v425
      %v616 = vpop.f32.mrb[0].mxu0
      %v617 = vadd.f32 0.0, %v616
      %v618 = vpop.f32.mrb[0].mxu0
      %v619 = vpop.f32.mrb[0].mxu0
      %v620 = vadd.f32 0.0, %v619
      %v621 = vpop.f32.mrb[0].mxu0
      %622 = vmatprep.mubr.bf16.mxu0 0
      %623 = vmatmul.mubr.bf16.gmra.mrb[0].mxu0 %v426
      %v624 = vpop.f32.mrb[0].mxu0
      %v625 = vadd.f32 0.0, %v624
      %v626 = vpop.f32.mrb[0].mxu0
      %v627 = vpop.f32.mrb[0].mxu0
      %v628 = vadd.f32 0.0, %v627
      %v629 = vpop.f32.mrb[0].mxu0
      %630 = vmatprep.mubr.bf16.mxu0 0
      %631 = vmatmul.mubr.bf16.gmra.mrb[0].mxu0 %v427
      %v632 = vpop.f32.mrb[0].mxu0
      %v633 = vadd.f32 0.0, %v632
      %v634 = vpop.f32.mrb[0].mxu0
      %v635 = vpop.f32.mrb[0].mxu0
      %v636 = vadd.f32 0.0, %v635
      %v637 = vpop.f32.mrb[0].mxu0
      %638 = vmatprep.mubr.bf16.mxu0 0
      %639 = vmatmul.mubr.bf16.gmra.mrb[0].mxu0 %v428
      %v640 = vpop.f32.mrb[0].mxu0
      %v641 = vadd.f32 0.0, %v640
      %v642 = vpop.f32.mrb[0].mxu0
      %v643 = vpop.f32.mrb[0].mxu0
      %v644 = vadd.f32 0.0, %v643
      %v645 = vpop.f32.mrb[0].mxu0
      %646 = vmatprep.mubr.bf16.mxu0 0
      %647 = vmatmul.mubr.bf16.gmra.mrb[0].mxu0 %v429
      %v648 = vpop.f32.mrb[0].mxu0
      %v649 = vadd.f32 0.0, %v648
      %v650 = vpop.f32.mrb[0].mxu0
      %v651 = vpop.f32.mrb[0].mxu0
      %v652 = vadd.f32 0.0, %v651
      %v653 = vpop.f32.mrb[0].mxu0
      %654 = vdwg.mxu0
      %655 = vst [vmem:[%s233] sm:$0xff] %v529
      %656 = vst [vmem:[%s233 + $0x8] sm:$0xff] %v532
      %657 = vst [vmem:[%s233 + $0x10] sm:$0xff] %v537
      %658 = vst [vmem:[%s233 + $0x18] sm:$0xff] %v540
      %659 = vst [vmem:[%s233 + $0x20] sm:$0xff] %v545
      %660 = vst [vmem:[%s233 + $0x28] sm:$0xff] %v548
      %661 = vst [vmem:[%s233 + $0x30] sm:$0xff] %v553
      %662 = vst [vmem:[%s233 + $0x38] sm:$0xff] %v556
      %663 = vst [vmem:[%s233 + $0x40] sm:$0xff] %v561
      %664 = vst [vmem:[%s233 + $0x48] sm:$0xff] %v564
      %665 = vst [vmem:[%s233 + $0x50] sm:$0xff] %v569
      %666 = vst [vmem:[%s233 + $0x58] sm:$0xff] %v572
      %667 = vst [vmem:[%s233 + $0x60] sm:$0xff] %v577
      %668 = vst [vmem:[%s233 + $0x68] sm:$0xff] %v580
      %669 = vst [vmem:[%s233 + $0x70] sm:$0xff] %v585
      %670 = vst [vmem:[%s233 + $0x78] sm:$0xff] %v588
      %671 = vst [vmem:[%s233 + $0x80] sm:$0xff] %v593
      %672 = vst [vmem:[%s233 + $0x88] sm:$0xff] %v596
      %673 = vst [vmem:[%s233 + $0x90] sm:$0xff] %v601
      %674 = vst [vmem:[%s233 + $0x98] sm:$0xff] %v604
      %675 = vst [vmem:[%s233 + $0xa0] sm:$0xff] %v609
      %676 = vst [vmem:[%s233 + $0xa8] sm:$0xff] %v612
      %677 = vst [vmem:[%s233 + $0xb0] sm:$0xff] %v617
      %678 = vst [vmem:[%s233 + $0xb8] sm:$0xff] %v620
      %679 = vst [vmem:[%s233 + $0xc0] sm:$0xff] %v625
      %680 = vst [vmem:[%s233 + $0xc8] sm:$0xff] %v628
      %681 = vst [vmem:[%s233 + $0xd0] sm:$0xff] %v633
      %682 = vst [vmem:[%s233 + $0xd8] sm:$0xff] %v636
      %683 = vst [vmem:[%s233 + $0xe0] sm:$0xff] %v641
      %684 = vst [vmem:[%s233 + $0xe8] sm:$0xff] %v644
      %685 = vst [vmem:[%s233 + $0xf0] sm:$0xff] %v649
      %686 = vst [vmem:[%s233 + $0xf8] sm:$0xff] %v652
      %v687 = vadd.f32 %v529, %v532
      %v688 = vadd.f32 %v687, %v537
      %v689 = vadd.f32 %v688, %v540
      %v690 = vadd.f32 %v689, %v545
      %v691 = vadd.f32 %v690, %v548
      %v692 = vadd.f32 %v691, %v553
      %v693 = vadd.f32 %v692, %v556
      %v694 = vadd.f32 %v693, %v561
      %v695 = vadd.f32 %v694, %v564
      %v696 = vadd.f32 %v695, %v569
      %v697 = vadd.f32 %v696, %v572
      %v698 = vadd.f32 %v697, %v577
      %v699 = vadd.f32 %v698, %v580
      %v700 = vadd.f32 %v699, %v585
      %v701 = vadd.f32 %v700, %v588
      %v702 = vadd.f32 %v701, %v593
      %v703 = vadd.f32 %v702, %v596
      %v704 = vadd.f32 %v703, %v601
      %v705 = vadd.f32 %v704, %v604
      %v706 = vadd.f32 %v705, %v609
      %v707 = vadd.f32 %v706, %v612
      %v708 = vadd.f32 %v707, %v617
      %v709 = vadd.f32 %v708, %v620
      %v710 = vadd.f32 %v709, %v625
      %v711 = vadd.f32 %v710, %v628
      %v712 = vadd.f32 %v711, %v633
      %v713 = vadd.f32 %v712, %v636
      %v714 = vadd.f32 %v713, %v641
      %v715 = vadd.f32 %v714, %v644
      %v716 = vadd.f32 %v715, %v649
      %v717 = vadd.f32 %v716, %v652
      %v718 = vrot.slane %v717, 4
      %v719 = vadd.f32 %v717, %v718
      %v720 = vrot.slane %v719, 2
      %v721 = vadd.f32 %v719, %v720
      %v722 = vrot.slane %v721, 1
      %v723 = vadd.f32 %v721, %v722
      %724 = vst [vmem:[%s238] sm:$0x1] %v723
      %v725 = vmul.f32 %v529, %v529
      %v726 = vmul.f32 %v532, %v532
      %v727 = vmul.f32 %v537, %v537
      %v728 = vmul.f32 %v540, %v540
      %v729 = vmul.f32 %v545, %v545
      %v730 = vmul.f32 %v548, %v548
      %v731 = vmul.f32 %v553, %v553
      %v732 = vmul.f32 %v556, %v556
      %v733 = vmul.f32 %v561, %v561
      %v734 = vmul.f32 %v564, %v564
      %v735 = vmul.f32 %v569, %v569
      %v736 = vmul.f32 %v572, %v572
      %v737 = vmul.f32 %v577, %v577
      %v738 = vmul.f32 %v580, %v580
      %v739 = vmul.f32 %v585, %v585
      %v740 = vmul.f32 %v588, %v588
      %v741 = vmul.f32 %v593, %v593
      %v742 = vmul.f32 %v596, %v596
      %v743 = vmul.f32 %v601, %v601
      %v744 = vmul.f32 %v604, %v604
      %v745 = vmul.f32 %v609, %v609
      %v746 = vmul.f32 %v612, %v612
      %v747 = vmul.f32 %v617, %v617
      %v748 = vmul.f32 %v620, %v620
      %v749 = vmul.f32 %v625, %v625
      %v750 = vmul.f32 %v628, %v628
      %v751 = vmul.f32 %v633, %v633
      %v752 = vmul.f32 %v636, %v636
      %v753 = vmul.f32 %v641, %v641
      %v754 = vmul.f32 %v644, %v644
      %v755 = vmul.f32 %v649, %v649
      %v756 = vmul.f32 %v652, %v652
      %v757 = vadd.f32 %v725, %v726
      %v758 = vadd.f32 %v757, %v727
      %v759 = vadd.f32 %v758, %v728
      %v760 = vadd.f32 %v759, %v729
      %v761 = vadd.f32 %v760, %v730
      %v762 = vadd.f32 %v761, %v731
      %v763 = vadd.f32 %v762, %v732
      %v764 = vadd.f32 %v763, %v733
      %v765 = vadd.f32 %v764, %v734
      %v766 = vadd.f32 %v765, %v735
      %v767 = vadd.f32 %v766, %v736
      %v768 = vadd.f32 %v767, %v737
      %v769 = vadd.f32 %v768, %v738
      %v770 = vadd.f32 %v769, %v739
      %v771 = vadd.f32 %v770, %v740
      %v772 = vadd.f32 %v771, %v741
      %v773 = vadd.f32 %v772, %v742
      %v774 = vadd.f32 %v773, %v743
      %v775 = vadd.f32 %v774, %v744
      %v776 = vadd.f32 %v775, %v745
      %v777 = vadd.f32 %v776, %v746
      %v778 = vadd.f32 %v777, %v747
      %v779 = vadd.f32 %v778, %v748
      %v780 = vadd.f32 %v779, %v749
      %v781 = vadd.f32 %v780, %v750
      %v782 = vadd.f32 %v781, %v751
      %v783 = vadd.f32 %v782, %v752
      %v784 = vadd.f32 %v783, %v753
      %v785 = vadd.f32 %v784, %v754
      %v786 = vadd.f32 %v785, %v755
      %v787 = vadd.f32 %v786, %v756
      %v788 = vrot.slane %v787, 4
      %v789 = vadd.f32 %v787, %v788
      %v790 = vrot.slane %v789, 2
      %v791 = vadd.f32 %v789, %v790
      %v792 = vrot.slane %v791, 1
      %v793 = vadd.f32 %v791, %v792
      %794 = vst [vmem:[%s238 + $0x1] sm:$0x1] %v793
      %s795 = smul.u32 32, %s17
      %p796 = scmp.lt.s32.totalorder %s795, 63
      %s797 = scalar_select %p796, %s795, 63
      %s798 = smul.addr %s797, 8
      %s799 = scalar_lea.vmem %s4, %s798
      %p800 = scmp.lt.s32.totalorder %s17, 1
      %s801 = scalar_select %p800, %s17, 1
      %s802 = smul.addr %s801, 2
      %s803 = scalar_lea.vmem %s5, %s802
      // Predicated region
      $region37: #{bottleneck_block_nhwc.6} parent=35 // pred_check
        %p804 = pneg %p124
      $region38: #{bottleneck_block_nhwc.6} parent=35 // pred_check_branch
        %806 = sbr.rel (%p804) target = $region40
      $region39: #{bottleneck_block_nhwc.6} parent=35 // pred_region
        %s807 = smul.u32 32, %s17
      $region40: #{bottleneck_block_nhwc.6} parent=35 // pred_fallthru
        _
      // Predicated region
      $region41: #{bottleneck_block_nhwc.6} parent=35 // pred_check
        %p808 = pneg %p150
      $region42: #{bottleneck_block_nhwc.6} parent=35 // pred_check_branch
        %810 = sbr.rel (%p808) target = $region44
      $region43: #{bottleneck_block_nhwc.6} parent=35 // pred_region
        _
      $region44: #{bottleneck_block_nhwc.6} parent=35 // pred_fallthru
        _
    $region36: #{bottleneck_block_nhwc.6} parent=5 // pred_fallthru
      _
    %p811 = scmp.le.s32.totalorder 2, %s12
    // Predicated region
    $region45: #{bottleneck_block_nhwc.6} parent=5 // pred_check
      %p812 = pneg %p811
    $region46: #{bottleneck_block_nhwc.6} parent=5 // pred_check_branch
      %814 = sbr.rel (%p812) target = $region48
    $region47: #{bottleneck_block_nhwc.6} parent=5 // pred_region
      %s815 = ssub.s32 %s12, 2
      // Predicated region
      $region49: #{bottleneck_block_nhwc.6} parent=47 // pred_check
        %p816 = pneg %p130
      $region50: #{bottleneck_block_nhwc.6} parent=47 // pred_check_branch
        %818 = sbr.rel (%p816) target = $region52
      $region51: #{bottleneck_block_nhwc.6} parent=47 // pred_region
        %s819 = smul.u32 32, %s18
        %p820 = scmp.lt.s32.totalorder %s819, 63
        %s821 = scalar_select %p820, %s819, 63
        %s822 = smul.addr %s821, 8
        %s823 = scalar_lea.vmem %s4, %s822
      $region52: #{bottleneck_block_nhwc.6} parent=47 // pred_fallthru
        _
      // Predicated region
      $region53: #{bottleneck_block_nhwc.6} parent=47 // pred_check
        %p824 = pneg %p156
      $region54: #{bottleneck_block_nhwc.6} parent=47 // pred_check_branch
        %826 = sbr.rel (%p824) target = $region56
      $region55: #{bottleneck_block_nhwc.6} parent=47 // pred_region
        %p827 = scmp.lt.s32.totalorder %s18, 1
        %s828 = scalar_select %p827, %s18, 1
        %s829 = smul.addr %s828, 2
        %s830 = scalar_lea.vmem %s5, %s829
      $region56: #{bottleneck_block_nhwc.6} parent=47 // pred_fallthru
        _
    $region48: #{bottleneck_block_nhwc.6} parent=5 // pred_fallthru
      _
  $region6: #{bottleneck_block_nhwc.6} parent=0 // loop_footer
    %s16 = sadd.s32 1, %s12
  $region7: #{bottleneck_block_nhwc.6} parent=0 // loop_footer_branch
    %11 = sbr.rel target = $region3
  $region8: #{bottleneck_block_nhwc.6} parent=0 // loop_exit
    _

// kernel: bottleneck_block_nhwc.4
$region0: #{bottleneck_block_nhwc.4}
  #allocation0 [shape = 'u32[]', space=smem, size = 0x4, offset = 0x4, fixed_abs, tag = 'smem constant byte address 0x4 - core index']
  #allocation1 [shape = 'u32[144,128]{1,0:T(1,128)}', space=vmem, size = 0x12000, scoped, tag = 'internal scratch']
  %s0 = inlined_call_operand.vmem [shape: bf16[512,128], index: 0, kind: input, shape index: {}]
  %s1 = inlined_call_operand.vmem [shape: bf16[128,128], index: 1, kind: input, shape index: {}]
  %s2 = inlined_call_operand.vmem [shape: f32[1,128], index: 2, kind: input, shape index: {}, may-alias: {2,3}]
  %s3 = inlined_call_operand.vmem [shape: f32[1,128], index: 3, kind: input, shape index: {}, may-alias: {2,3}]
  %s4 = inlined_call_operand.vmem [shape: bf16[512,128], index: 4, kind: output, shape index: {0}]
  %s5 = inlined_call_operand.vmem [shape: f32[2,2,128], index: 5, kind: output, shape index: {1}]
  %6 = xla_tuple %s4, %s5
  %s7 = sld [smem:[#allocation0]]
  $region57: #{bottleneck_block_nhwc.4} parent=0
    _
  %s9 = ssub.s32 1, %s7
  %s10 = scalar_select 0, %s9, %s7
  loop: start=0, step=1, limit=4
  $region2: #{bottleneck_block_nhwc.4} parent=0 // loop_pre_header
    _
  $region3: #{bottleneck_block_nhwc.4} parent=0 // loop_header
    %s12 = sphi 0, %s16
    %p13 = scmp.ge.s32.totalorder %s12, 4
    %s22 = sphi 0, %s24
    %s25 = sphi 0, %s22
    %s26 = sphi 0, %s25
    %s42 = sphi 0, %s26
    %s46 = sphi 0, %s46
    %s48 = sphi 0, %s46
    %s49 = sphi 0, %s48
    %s63 = sphi 0, %s49
    %s67 = sphi 0, %s67
    %s69 = sphi 0, %s67
    %s70 = sphi 0, %s69
    %s84 = sphi 0, %s70
    %s88 = sphi 0, %s88
    %s90 = sphi 0, %s88
    %s91 = sphi 0, %s90
    %s105 = sphi 0, %s91
    %s111 = sphi 0, %s113
    %s114 = sphi 0, %s111
    %s115 = sphi 0, %s114
    %s131 = sphi 0, %s115
    %s137 = sphi 0, %s139
    %s140 = sphi 0, %s137
    %s141 = sphi 0, %s140
    %s157 = sphi 0, %s141
  $region4: #{bottleneck_block_nhwc.4} parent=0 // loop_header_branch
    %15 = sbr.rel (%p13) target = $region8
  $region5: #{bottleneck_block_nhwc.4} parent=0 // loop_body
    %s17 = ssub.s32 %s12, 1
    %s18 = ssub.s32 %s12, 2
    %s19 = sadd.s32 %s12, 1
    %s20 = ssub.s32 %s12, %s19
    %p21 = scmp.eq.s32.totalorder %s20, 0
    %s23 = sadd.s32 %s22, 1
    %s24 = scalar_select %p21, %s22, %s23
    %p27 = pneg %p21
    %p28 = scmp.eq.s32.totalorder %s12, 1
    %p29 = por %p27, %p28
    %p30 = scmp.ne.s32.totalorder %s22, %s25
    %p31 = scmp.eq.s32.totalorder %s12, 0
    %p32 = por %p30, %p31
    %p33 = scmp.ne.s32.totalorder %s22, %s25
    %p34 = scmp.eq.s32.totalorder %s17, 1
    %p35 = por %p33, %p34
    %p36 = scmp.ne.s32.totalorder %s25, %s26
    %p37 = scmp.eq.s32.totalorder %s17, 0
    %p38 = por %p36, %p37
    %p39 = scmp.ne.s32.totalorder %s25, %s26
    %p40 = scmp.eq.s32.totalorder %s18, 1
    %p41 = por %p39, %p40
    %p43 = scmp.ne.s32.totalorder %s26, %s42
    %p44 = scmp.eq.s32.totalorder %s18, 0
    %p45 = por %p43, %p44
    %s47 = sadd.s32 %s46, 1
    %p50 = scmp.eq.s32.totalorder %s12, 1
    %p51 = scmp.ne.s32.totalorder %s46, %s48
    %p52 = scmp.eq.s32.totalorder %s12, 0
    %p53 = por %p51, %p52
    %p54 = scmp.ne.s32.totalorder %s46, %s48
    %p55 = scmp.eq.s32.totalorder %s17, 1
    %p56 = por %p54, %p55
    %p57 = scmp.ne.s32.totalorder %s48, %s49
    %p58 = scmp.eq.s32.totalorder %s17, 0
    %p59 = por %p57, %p58
    %p60 = scmp.ne.s32.totalorder %s48, %s49
    %p61 = scmp.eq.s32.totalorder %s18, 1
    %p62 = por %p60, %p61
    %p64 = scmp.ne.s32.totalorder %s49, %s63
    %p65 = scmp.eq.s32.totalorder %s18, 0
    %p66 = por %p64, %p65
    %s68 = sadd.s32 %s67, 1
    %p71 = scmp.eq.s32.totalorder %s12, 1
    %p72 = scmp.ne.s32.totalorder %s67, %s69
    %p73 = scmp.eq.s32.totalorder %s12, 0
    %p74 = por %p72, %p73
    %p75 = scmp.ne.s32.totalorder %s67, %s69
    %p76 = scmp.eq.s32.totalorder %s17, 1
    %p77 = por %p75, %p76
    %p78 = scmp.ne.s32.totalorder %s69, %s70
    %p79 = scmp.eq.s32.totalorder %s17, 0
    %p80 = por %p78, %p79
    %p81 = scmp.ne.s32.totalorder %s69, %s70
    %p82 = scmp.eq.s32.totalorder %s18, 1
    %p83 = por %p81, %p82
    %p85 = scmp.ne.s32.totalorder %s70, %s84
    %p86 = scmp.eq.s32.totalorder %s18, 0
    %p87 = por %p85, %p86
    %s89 = sadd.s32 %s88, 1
    %p92 = scmp.eq.s32.totalorder %s12, 1
    %p93 = scmp.ne.s32.totalorder %s88, %s90
    %p94 = scmp.eq.s32.totalorder %s12, 0
    %p95 = por %p93, %p94
    %p96 = scmp.ne.s32.totalorder %s88, %s90
    %p97 = scmp.eq.s32.totalorder %s17, 1
    %p98 = por %p96, %p97
    %p99 = scmp.ne.s32.totalorder %s90, %s91
    %p100 = scmp.eq.s32.totalorder %s17, 0
    %p101 = por %p99, %p100
    %p102 = scmp.ne.s32.totalorder %s90, %s91
    %p103 = scmp.eq.s32.totalorder %s18, 1
    %p104 = por %p102, %p103
    %p106 = scmp.ne.s32.totalorder %s91, %s105
    %p107 = scmp.eq.s32.totalorder %s18, 0
    %p108 = por %p106, %p107
    %s109 = ssub.s32 %s12, %s19
    %p110 = scmp.eq.s32.totalorder %s109, 0
    %s112 = sadd.s32 %s111, 1
    %s113 = scalar_select %p110, %s111, %s112
    %p116 = pneg %p110
    %p117 = scmp.eq.s32.totalorder %s12, 1
    %p118 = por %p116, %p117
    %p119 = scmp.ne.s32.totalorder %s111, %s114
    %p120 = scmp.eq.s32.totalorder %s12, 0
    %p121 = por %p119, %p120
    %p122 = scmp.ne.s32.totalorder %s111, %s114
    %p123 = scmp.eq.s32.totalorder %s17, 1
    %p124 = por %p122, %p123
    %p125 = scmp.ne.s32.totalorder %s114, %s115
    %p126 = scmp.eq.s32.totalorder %s17, 0
    %p127 = por %p125, %p126
    %p128 = scmp.ne.s32.totalorder %s114, %s115
    %p129 = scmp.eq.s32.totalorder %s18, 1
    %p130 = por %p128, %p129
    %p132 = scmp.ne.s32.totalorder %s115, %s131
    %p133 = scmp.eq.s32.totalorder %s18, 0
    %p134 = por %p132, %p133
    %s135 = ssub.s32 %s12, %s19
    %p136 = scmp.eq.s32.totalorder %s135, 0
    %s138 = sadd.s32 %s137, 1
    %s139 = scalar_select %p136, %s137, %s138
    %p142 = pneg %p136
    %p143 = scmp.eq.s32.totalorder %s12, 1
    %p144 = por %p142, %p143
    %p145 = scmp.ne.s32.totalorder %s137, %s140
    %p146 = scmp.eq.s32.totalorder %s12, 0
    %p147 = por %p145, %p146
    %p148 = scmp.ne.s32.totalorder %s137, %s140
    %p149 = scmp.eq.s32.totalorder %s17, 1
    %p150 = por %p148, %p149
    %p151 = scmp.ne.s32.totalorder %s140, %s141
    %p152 = scmp.eq.s32.totalorder %s17, 0
    %p153 = por %p151, %p152
    %p154 = scmp.ne.s32.totalorder %s140, %s141
    %p155 = scmp.eq.s32.totalorder %s18, 1
    %p156 = por %p154, %p155
    %p158 = scmp.ne.s32.totalorder %s141, %s157
    %p159 = scmp.eq.s32.totalorder %s18, 0
    %p160 = por %p158, %p159
    %p161 = scmp.le.s32.totalorder 1, %s12
    %p162 = scmp.lt.s32.totalorder %s12, 3
    %p163 = pnand %p161, %p162
    %p164 = pneg %p163
    // Predicated region
    $region9: #{bottleneck_block_nhwc.4} parent=5 // pred_check
      _
    $region10: #{bottleneck_block_nhwc.4} parent=5 // pred_check_branch
      %166 = sbr.rel (%p163) target = $region12
    $region11: #{bottleneck_block_nhwc.4} parent=5 // pred_region
      %s167 = ssub.s32 %s12, 1
      // Predicated region
      $region13: #{bottleneck_block_nhwc.4} parent=11 // pred_check
        %p168 = pneg %p59
      $region14: #{bottleneck_block_nhwc.4} parent=11 // pred_check_branch
        %170 = sbr.rel (%p168) target = $region16
      $region15: #{bottleneck_block_nhwc.4} parent=11 // pred_region
        _
      $region16: #{bottleneck_block_nhwc.4} parent=11 // pred_fallthru
        _
      // Predicated region
      $region17: #{bottleneck_block_nhwc.4} parent=11 // pred_check
        %p171 = pneg %p80
      $region18: #{bottleneck_block_nhwc.4} parent=11 // pred_check_branch
        %173 = sbr.rel (%p171) target = $region20
      $region19: #{bottleneck_block_nhwc.4} parent=11 // pred_region
        _
      $region20: #{bottleneck_block_nhwc.4} parent=11 // pred_fallthru
        _
      // Predicated region
      $region21: #{bottleneck_block_nhwc.4} parent=11 // pred_check
        %p174 = pneg %p101
      $region22: #{bottleneck_block_nhwc.4} parent=11 // pred_check_branch
        %176 = sbr.rel (%p174) target = $region24
      $region23: #{bottleneck_block_nhwc.4} parent=11 // pred_region
        _
      $region24: #{bottleneck_block_nhwc.4} parent=11 // pred_fallthru
        _
    $region12: #{bottleneck_block_nhwc.4} parent=5 // pred_fallthru
      _
    %p177 = scmp.lt.s32.totalorder %s12, 2
    // Predicated region
    $region25: #{bottleneck_block_nhwc.4} parent=5 // pred_check
      %p178 = pneg %p177
    $region26: #{bottleneck_block_nhwc.4} parent=5 // pred_check_branch
      %180 = sbr.rel (%p178) target = $region28
    $region27: #{bottleneck_block_nhwc.4} parent=5 // pred_region
      // Predicated region
      $region29: #{bottleneck_block_nhwc.4} parent=27 // pred_check
        %p181 = pneg %p32
      $region30: #{bottleneck_block_nhwc.4} parent=27 // pred_check_branch
        %183 = sbr.rel (%p181) target = $region32
      $region31: #{bottleneck_block_nhwc.4} parent=27 // pred_region
        %s184 = smul.u32 32, %s12
        %p185 = scmp.lt.s32.totalorder %s184, 63
        %s186 = scalar_select %p185, %s184, 63
        %s187 = smul.addr %s186, 4
        %s188 = scalar_lea.vmem %s0, %s187
        %s189 = smul.u32 32, %s12
      $region32: #{bottleneck_block_nhwc.4} parent=27 // pred_fallthru
        _
    $region28: #{bottleneck_block_nhwc.4} parent=5 // pred_fallthru
      _
    %p190 = scmp.le.s32.totalorder 1, %s12
    %p191 = scmp.lt.s32.totalorder %s12, 3
    %p192 = pnand %p190, %p191
    %p193 = pneg %p192
    // Predicated region
    $region33: #{bottleneck_block_nhwc.4} parent=5 // pred_check
      _
    $region34: #{bottleneck_block_nhwc.4} parent=5 // pred_check_branch
      %195 = sbr.rel (%p192) target = $region36
    $region35: #{bottleneck_block_nhwc.4} parent=5 // pred_region
      %s196 = ssub.s32 %s12, 1
      %s197 = smul.u32 32, %s17
      %p198 = scmp.lt.s32.totalorder %s197, 63
      %s199 = scalar_select %p198, %s197, 63
      %s200 = smul.addr %s199, 4
      %s201 = scalar_lea.vmem %s0, %s200
      %p202 = pneg %p38
      %p203 = pneg %p35
      %p204 = pneg %p59
      %p205 = pneg %p56
      %p206 = pneg %p80
      %p207 = pneg %p77
      %p208 = pneg %p101
      %p209 = pneg %p98
      %p210 = pneg %p127
      %p211 = pneg %p124
      %s212 = smul.u32 32, %s17
      %p213 = scmp.lt.s32.totalorder %s212, 63
      %s214 = scalar_select %p213, %s212, 63
      %s215 = smul.addr %s214, 4
      %s216 = scalar_lea.vmem %s4, %s215
      %p217 = pneg %p153
      %p218 = pneg %p150
      %p219 = scmp.lt.s32.totalorder %s17, 1
      %s220 = scalar_select %p219, %s17, 1
      %s221 = smul.addr %s220, 2
      %s222 = scalar_lea.vmem %s5, %s221
      %s223 = smul.u32 32, %s17
      %p224 = scmp.lt.s32.totalorder %s223, 63
      %s225 = scalar_select %p224, %s223, 63
      %s226 = smul.addr %s225, 4
      %s227 = scalar_lea.vmem %s0, %s226
      %s228 = smul.u32 32, %s17
      %s229 = smul.u32 32, %s17
      %p230 = scmp.lt.s32.totalorder %s229, 63
      %s231 = scalar_select %p230, %s229, 63
      %s232 = smul.addr %s231, 4
      %s233 = scalar_lea.vmem %s4, %s232
      %s234 = smul.u32 32, %s17
      %p235 = scmp.lt.s32.totalorder %s17, 1
      %s236 = scalar_select %p235, %s17, 1
      %s237 = smul.addr %s236, 2
      %s238 = scalar_lea.vmem %s5, %s237
      %v240 = vld [vmem:[%s227] sm:$0xf]
      %v241 = vld [vmem:[%s227 + $0x4] sm:$0xf]
      %v242 = vld [vmem:[%s227 + $0x8] sm:$0xf]
      %v243 = vld [vmem:[%s227 + $0xc] sm:$0xf]
      %v244 = vld [vmem:[%s227 + $0x10] sm:$0xf]
      %v245 = vld [vmem:[%s227 + $0x14] sm:$0xf]
      %v246 = vld [vmem:[%s227 + $0x18] sm:$0xf]
      %v247 = vld [vmem:[%s227 + $0x1c] sm:$0xf]
      %v248 = vld [vmem:[%s227 + $0x20] sm:$0xf]
      %v249 = vld [vmem:[%s227 + $0x24] sm:$0xf]
      %v250 = vld [vmem:[%s227 + $0x28] sm:$0xf]
      %v251 = vld [vmem:[%s227 + $0x2c] sm:$0xf]
      %v252 = vld [vmem:[%s227 + $0x30] sm:$0xf]
      %v253 = vld [vmem:[%s227 + $0x34] sm:$0xf]
      %v254 = vld [vmem:[%s227 + $0x38] sm:$0xf]
      %v255 = vld [vmem:[%s227 + $0x3c] sm:$0xf]
      %v256 = vld [vmem:[%s227 + $0x40] sm:$0xf]
      %v257 = vld [vmem:[%s227 + $0x44] sm:$0xf]
      %v258 = vld [vmem:[%s227 + $0x48] sm:$0xf]
      %v259 = vld [vmem:[%s227 + $0x4c] sm:$0xf]
      %v260 = vld [vmem:[%s227 + $0x50] sm:$0xf]
      %v261 = vld [vmem:[%s227 + $0x54] sm:$0xf]
      %v262 = vld [vmem:[%s227 + $0x58] sm:$0xf]
      %v263 = vld [vmem:[%s227 + $0x5c] sm:$0xf]
      %v264 = vld [vmem:[%s227 + $0x60] sm:$0xf]
      %v265 = vld [vmem:[%s227 + $0x64] sm:$0xf]
      %v266 = vld [vmem:[%s227 + $0x68] sm:$0xf]
      %v267 = vld [vmem:[%s227 + $0x6c] sm:$0xf]
      %v268 = vld [vmem:[%s227 + $0x70] sm:$0xf]
      %v269 = vld [vmem:[%s227 + $0x74] sm:$0xf]
      %v270 = vld [vmem:[%s227 + $0x78] sm:$0xf]
      %v271 = vld [vmem:[%s227 + $0x7c] sm:$0xf]
      %v272 = vld [vmem:[%s1] sm:$0xf]
      %v273 = vld [vmem:[%s1 + $0x4] sm:$0xf]
      %v274 = vld [vmem:[%s1 + $0x8] sm:$0xf]
      %v275 = vld [vmem:[%s1 + $0xc] sm:$0xf]
      %v276 = vld [vmem:[%s1 + $0x10] sm:$0xf]
      %v277 = vld [vmem:[%s1 + $0x14] sm:$0xf]
      %v278 = vld [vmem:[%s1 + $0x18] sm:$0xf]
      %v279 = vld [vmem:[%s1 + $0x1c] sm:$0xf]
      %v280 = vld [vmem:[%s1 + $0x20] sm:$0xf]
      %v281 = vld [vmem:[%s1 + $0x24] sm:$0xf]
      %v282 = vld [vmem:[%s1 + $0x28] sm:$0xf]
      %v283 = vld [vmem:[%s1 + $0x2c] sm:$0xf]
      %v284 = vld [vmem:[%s1 + $0x30] sm:$0xf]
      %v285 = vld [vmem:[%s1 + $0x34] sm:$0xf]
      %v286 = vld [vmem:[%s1 + $0x38] sm:$0xf]
      %v287 = vld [vmem:[%s1 + $0x3c] sm:$0xf]
      %v320 = vunpack.c.l.b16 %v240
      %v321 = vunpack.c.l.b16 %v241
      %v322 = vunpack.c.l.b16 %v242
      %v323 = vunpack.c.l.b16 %v243
      %v324 = vunpack.c.l.b16 %v244
      %v325 = vunpack.c.l.b16 %v245
      %v326 = vunpack.c.l.b16 %v246
      %v327 = vunpack.c.l.b16 %v247
      %v328 = vunpack.c.l.b16 %v248
      %v329 = vunpack.c.l.b16 %v249
      %v330 = vunpack.c.l.b16 %v250
      %v331 = vunpack.c.l.b16 %v251
      %v332 = vunpack.c.l.b16 %v252
      %v333 = vunpack.c.l.b16 %v253
      %v334 = vunpack.c.l.b16 %v254
      %v335 = vunpack.c.l.b16 %v255
      %v336 = vunpack.c.l.b16 %v256
      %v337 = vunpack.c.l.b16 %v257
      %v338 = vunpack.c.l.b16 %v258
      %v339 = vunpack.c.l.b16 %v259
      %v340 = vunpack.c.l.b16 %v260
      %v341 = vunpack.c.l.b16 %v261
      %v342 = vunpack.c.l.b16 %v262
      %v343 = vunpack.c.l.b16 %v263
      %v344 = vunpack.c.l.b16 %v264
      %v345 = vunpack.c.l.b16 %v265
      %v346 = vunpack.c.l.b16 %v266
      %v347 = vunpack.c.l.b16 %v267
      %v348 = vunpack.c.l.b16 %v268
      %v349 = vunpack.c.l.b16 %v269
      %v350 = vunpack.c.l.b16 %v270
      %v351 = vunpack.c.l.b16 %v271
      %v352 = vpack.c.b16 %v321, %v320
      %v353 = vpack.c.b16 %v323, %v322
      %v354 = vpack.c.b16 %v325, %v324
      %v355 = vpack.c.b16 %v327, %v326
      %v356 = vpack.c.b16 %v329, %v328
      %v357 = vpack.c.b16 %v331, %v330
      %v358 = vpack.c.b16 %v333, %v332
      %v359 = vpack.c.b16 %v335, %v334
      %v360 = vpack.c.b16 %v337, %v336
      %v361 = vpack.c.b16 %v339, %v338
      %v362 = vpack.c.b16 %v341, %v340
      %v363 = vpack.c.b16 %v343, %v342
      %v364 = vpack.c.b16 %v345, %v344
      %v365 = vpack.c.b16 %v347, %v346
      %v366 = vpack.c.b16 %v349, %v348
      %v367 = vpack.c.b16 %v351, %v350
      %v400 = vunpack.c.l.b16 %v272
      %v401 = vunpack.c.l.b16 %v273
      %v402 = vunpack.c.l.b16 %v274
      %v403 = vunpack.c.l.b16 %v275
      %v404 = vunpack.c.l.b16 %v276
      %v405 = vunpack.c.l.b16 %v277
      %v406 = vunpack.c.l.b16 %v278
      %v407 = vunpack.c.l.b16 %v279
      %v408 = vunpack.c.l.b16 %v280
      %v409 = vunpack.c.l.b16 %v281
      %v410 = vunpack.c.l.b16 %v282
      %v411 = vunpack.c.l.b16 %v283
      %v412 = vunpack.c.l.b16 %v284
      %v413 = vunpack.c.l.b16 %v285
      %v414 = vunpack.c.l.b16 %v286
      %v415 = vunpack.c.l.b16 %v287
      %v416 = vpack.c.b16 %v401, %v400
      %v417 = vpack.c.b16 %v403, %v402
      %v418 = vpack.c.b16 %v405, %v404
      %v419 = vpack.c.b16 %v407, %v406
      %v420 = vpack.c.b16 %v409, %v408
      %v421 = vpack.c.b16 %v411, %v410
      %v422 = vpack.c.b16 %v413, %v412
      %v423 = vpack.c.b16 %v415, %v414
      %432 = vmatprep.subr.bf16.mxu0 0
      %433 = vmatpush1.bf16.msra.mxu0 %v416
      %434 = vmatprep.subr.bf16.mxu0 0
      %435 = vmatpush1.bf16.msra.mxu0 %v417
      %436 = vmatprep.subr.bf16.mxu0 0
      %437 = vmatpush1.bf16.msra.mxu0 %v418
      %438 = vmatprep.subr.bf16.mxu0 0
      %439 = vmatpush1.bf16.msra.mxu0 %v419
      %440 = vmatprep.subr.bf16.mxu0 0
      %441 = vmatpush1.bf16.msra.mxu0 %v420
      %442 = vmatprep.subr.bf16.mxu0 0
      %443 = vmatpush1.bf16.msra.mxu0 %v421
      %444 = vmatprep.subr.bf16.mxu0 0
      %445 = vmatpush1.bf16.msra.mxu0 %v422
      %446 = vmatprep.subr.bf16.mxu0 0
      %447 = vmatpush1.bf16.msra.mxu0 %v423
      %448 = vmatprep.subr.bf16.mxu0 0
      %449 = vmatpush1.bf16.msra.mxu0 0
      %450 = vmatprep.subr.bf16.mxu0 0
      %451 = vmatpush1.bf16.msra.mxu0 0
      %452 = vmatprep.subr.bf16.mxu0 0
      %453 = vmatpush1.bf16.msra.mxu0 0
      %454 = vmatprep.subr.bf16.mxu0 0
      %455 = vmatpush1.bf16.msra.mxu0 0
      %456 = vmatprep.subr.bf16.mxu0 0
      %457 = vmatpush1.bf16.msra.mxu0 0
      %458 = vmatprep.subr.bf16.mxu0 0
      %459 = vmatpush1.bf16.msra.mxu0 0
      %460 = vmatprep.subr.bf16.mxu0 0
      %461 = vmatpush1.bf16.msra.mxu0 0
      %462 = vmatprep.subr.bf16.mxu0 0
      %463 = vmatpush1.bf16.msra.mxu0 0
      %464 = vmatprep.mubr.bf16.mxu0 0
      %465 = vmatmul.mubr.bf16.gmra.mrb[0].mxu0 %v352
      %v466 = vpop.f32.mrb[0].mxu0
      %v467 = vadd.f32 0.0, %v466
      %v468 = vpop.f32.mrb[0].mxu0
      %v469 = vpop.f32.mrb[0].mxu0
      %v470 = vadd.f32 0.0, %v469
      %v471 = vpop.f32.mrb[0].mxu0
      %472 = vmatprep.mubr.bf16.mxu0 0
      %473 = vmatmul.mubr.bf16.gmra.mrb[0].mxu0 %v353
      %v474 = vpop.f32.mrb[0].mxu0
      %v475 = vadd.f32 0.0, %v474
      %v476 = vpop.f32.mrb[0].mxu0
      %v477 = vpop.f32.mrb[0].mxu0
      %v478 = vadd.f32 0.0, %v477
      %v479 = vpop.f32.mrb[0].mxu0
      %480 = vmatprep.mubr.bf16.mxu0 0
      %481 = vmatmul.mubr.bf16.gmra.mrb[0].mxu0 %v354
      %v482 = vpop.f32.mrb[0].mxu0
      %v483 = vadd.f32 0.0, %v482
      %v484 = vpop.f32.mrb[0].mxu0
      %v485 = vpop.f32.mrb[0].mxu0
      %v486 = vadd.f32 0.0, %v485
      %v487 = vpop.f32.mrb[0].mxu0
      %488 = vmatprep.mubr.bf16.mxu0 0
      %489 = vmatmul.mubr.bf16.gmra.mrb[0].mxu0 %v355
      %v490 = vpop.f32.mrb[0].mxu0
      %v491 = vadd.f32 0.0, %v490
      %v492 = vpop.f32.mrb[0].mxu0
      %v493 = vpop.f32.mrb[0].mxu0
      %v494 = vadd.f32 0.0, %v493
      %v495 = vpop.f32.mrb[0].mxu0
      %496 = vmatprep.mubr.bf16.mxu0 0
      %497 = vmatmul.mubr.bf16.gmra.mrb[0].mxu0 %v356
      %v498 = vpop.f32.mrb[0].mxu0
      %v499 = vadd.f32 0.0, %v498
      %v500 = vpop.f32.mrb[0].mxu0
      %v501 = vpop.f32.mrb[0].mxu0
      %v502 = vadd.f32 0.0, %v501
      %v503 = vpop.f32.mrb[0].mxu0
      %504 = vmatprep.mubr.bf16.mxu0 0
      %505 = vmatmul.mubr.bf16.gmra.mrb[0].mxu0 %v357
      %v506 = vpop.f32.mrb[0].mxu0
      %v507 = vadd.f32 0.0, %v506
      %v508 = vpop.f32.mrb[0].mxu0
      %v509 = vpop.f32.mrb[0].mxu0
      %v510 = vadd.f32 0.0, %v509
      %v511 = vpop.f32.mrb[0].mxu0
      %512 = vmatprep.mubr.bf16.mxu0 0
      %513 = vmatmul.mubr.bf16.gmra.mrb[0].mxu0 %v358
      %v514 = vpop.f32.mrb[0].mxu0
      %v515 = vadd.f32 0.0, %v514
      %v516 = vpop.f32.mrb[0].mxu0
      %v517 = vpop.f32.mrb[0].mxu0
      %v518 = vadd.f32 0.0, %v517
      %v519 = vpop.f32.mrb[0].mxu0
      %520 = vmatprep.mubr.bf16.mxu0 0
      %521 = vmatmul.mubr.bf16.gmra.mrb[0].mxu0 %v359
      %v522 = vpop.f32.mrb[0].mxu0
      %v523 = vadd.f32 0.0, %v522
      %v524 = vpop.f32.mrb[0].mxu0
      %v525 = vpop.f32.mrb[0].mxu0
      %v526 = vadd.f32 0.0, %v525
      %v527 = vpop.f32.mrb[0].mxu0
      %528 = vmatprep.mubr.bf16.mxu0 0
      %529 = vmatmul.mubr.bf16.gmra.mrb[0].mxu0 %v360
      %v530 = vpop.f32.mrb[0].mxu0
      %v531 = vadd.f32 0.0, %v530
      %v532 = vpop.f32.mrb[0].mxu0
      %v533 = vpop.f32.mrb[0].mxu0
      %v534 = vadd.f32 0.0, %v533
      %v535 = vpop.f32.mrb[0].mxu0
      %536 = vmatprep.mubr.bf16.mxu0 0
      %537 = vmatmul.mubr.bf16.gmra.mrb[0].mxu0 %v361
      %v538 = vpop.f32.mrb[0].mxu0
      %v539 = vadd.f32 0.0, %v538
      %v540 = vpop.f32.mrb[0].mxu0
      %v541 = vpop.f32.mrb[0].mxu0
      %v542 = vadd.f32 0.0, %v541
      %v543 = vpop.f32.mrb[0].mxu0
      %544 = vmatprep.mubr.bf16.mxu0 0
      %545 = vmatmul.mubr.bf16.gmra.mrb[0].mxu0 %v362
      %v546 = vpop.f32.mrb[0].mxu0
      %v547 = vadd.f32 0.0, %v546
      %v548 = vpop.f32.mrb[0].mxu0
      %v549 = vpop.f32.mrb[0].mxu0
      %v550 = vadd.f32 0.0, %v549
      %v551 = vpop.f32.mrb[0].mxu0
      %552 = vmatprep.mubr.bf16.mxu0 0
      %553 = vmatmul.mubr.bf16.gmra.mrb[0].mxu0 %v363
      %v554 = vpop.f32.mrb[0].mxu0
      %v555 = vadd.f32 0.0, %v554
      %v556 = vpop.f32.mrb[0].mxu0
      %v557 = vpop.f32.mrb[0].mxu0
      %v558 = vadd.f32 0.0, %v557
      %v559 = vpop.f32.mrb[0].mxu0
      %560 = vmatprep.mubr.bf16.mxu0 0
      %561 = vmatmul.mubr.bf16.gmra.mrb[0].mxu0 %v364
      %v562 = vpop.f32.mrb[0].mxu0
      %v563 = vadd.f32 0.0, %v562
      %v564 = vpop.f32.mrb[0].mxu0
      %v565 = vpop.f32.mrb[0].mxu0
      %v566 = vadd.f32 0.0, %v565
      %v567 = vpop.f32.mrb[0].mxu0
      %568 = vmatprep.mubr.bf16.mxu0 0
      %569 = vmatmul.mubr.bf16.gmra.mrb[0].mxu0 %v365
      %v570 = vpop.f32.mrb[0].mxu0
      %v571 = vadd.f32 0.0, %v570
      %v572 = vpop.f32.mrb[0].mxu0
      %v573 = vpop.f32.mrb[0].mxu0
      %v574 = vadd.f32 0.0, %v573
      %v575 = vpop.f32.mrb[0].mxu0
      %576 = vmatprep.mubr.bf16.mxu0 0
      %577 = vmatmul.mubr.bf16.gmra.mrb[0].mxu0 %v366
      %v578 = vpop.f32.mrb[0].mxu0
      %v579 = vadd.f32 0.0, %v578
      %v580 = vpop.f32.mrb[0].mxu0
      %v581 = vpop.f32.mrb[0].mxu0
      %v582 = vadd.f32 0.0, %v581
      %v583 = vpop.f32.mrb[0].mxu0
      %584 = vmatprep.mubr.bf16.mxu0 0
      %585 = vmatmul.mubr.bf16.gmra.mrb[0].mxu0 %v367
      %v586 = vpop.f32.mrb[0].mxu0
      %v587 = vadd.f32 0.0, %v586
      %v588 = vpop.f32.mrb[0].mxu0
      %v589 = vpop.f32.mrb[0].mxu0
      %v590 = vadd.f32 0.0, %v589
      %v591 = vpop.f32.mrb[0].mxu0
      %592 = vdwg.mxu0
      %v593 = vpack.c.bf16 %v470, %v467
      %v594 = vpack.c.bf16 %v478, %v475
      %v595 = vpack.c.bf16 %v486, %v483
      %v596 = vpack.c.bf16 %v494, %v491
      %v597 = vpack.c.bf16 %v502, %v499
      %v598 = vpack.c.bf16 %v510, %v507
      %v599 = vpack.c.bf16 %v518, %v515
      %v600 = vpack.c.bf16 %v526, %v523
      %v601 = vpack.c.bf16 %v534, %v531
      %v602 = vpack.c.bf16 %v542, %v539
      %v603 = vpack.c.bf16 %v550, %v547
      %v604 = vpack.c.bf16 %v558, %v555
      %v605 = vpack.c.bf16 %v566, %v563
      %v606 = vpack.c.bf16 %v574, %v571
      %v607 = vpack.c.bf16 %v582, %v579
      %v608 = vpack.c.bf16 %v590, %v587
      %v625 = vunpack.c.l.b16 %v593
      %v626 = vunpack.c.h.b16 %v593
      %v627 = vunpack.c.l.b16 %v594
      %v628 = vunpack.c.h.b16 %v594
      %v629 = vunpack.c.l.b16 %v595
      %v630 = vunpack.c.h.b16 %v595
      %v631 = vunpack.c.l.b16 %v596
      %v632 = vunpack.c.h.b16 %v596
      %v633 = vunpack.c.l.b16 %v597
      %v634 = vunpack.c.h.b16 %v597
      %v635 = vunpack.c.l.b16 %v598
      %v636 = vunpack.c.h.b16 %v598
      %v637 = vunpack.c.l.b16 %v599
      %v638 = vunpack.c.h.b16 %v599
      %v639 = vunpack.c.l.b16 %v600
      %v640 = vunpack.c.h.b16 %v600
      %v641 = vunpack.c.l.b16 %v601
      %v642 = vunpack.c.h.b16 %v601
      %v643 = vunpack.c.l.b16 %v602
      %v644 = vunpack.c.h.b16 %v602
      %v645 = vunpack.c.l.b16 %v603
      %v646 = vunpack.c.h.b16 %v603
      %v647 = vunpack.c.l.b16 %v604
      %v648 = vunpack.c.h.b16 %v604
      %v649 = vunpack.c.l.b16 %v605
      %v650 = vunpack.c.h.b16 %v605
      %v651 = vunpack.c.l.b16 %v606
      %v652 = vunpack.c.h.b16 %v606
      %v653 = vunpack.c.l.b16 %v607
      %v654 = vunpack.c.h.b16 %v607
      %v655 = vunpack.c.l.b16 %v608
      %v656 = vunpack.c.h.b16 %v608
      %v657 = vpack.c.b16 %v625, %v625
      %v658 = vpack.c.b16 %v626, %v626
      %v659 = vpack.c.b16 %v627, %v627
      %v660 = vpack.c.b16 %v628, %v628
      %v661 = vpack.c.b16 %v629, %v629
      %v662 = vpack.c.b16 %v630, %v630
      %v663 = vpack.c.b16 %v631, %v631
      %v664 = vpack.c.b16 %v632, %v632
      %v665 = vpack.c.b16 %v633, %v633
      %v666 = vpack.c.b16 %v634, %v634
      %v667 = vpack.c.b16 %v635, %v635
      %v668 = vpack.c.b16 %v636, %v636
      %v669 = vpack.c.b16 %v637, %v637
      %v670 = vpack.c.b16 %v638, %v638
      %v671 = vpack.c.b16 %v639, %v639
      %v672 = vpack.c.b16 %v640, %v640
      %v673 = vpack.c.b16 %v641, %v641
      %v674 = vpack.c.b16 %v642, %v642
      %v675 = vpack.c.b16 %v643, %v643
      %v676 = vpack.c.b16 %v644, %v644
      %v677 = vpack.c.b16 %v645, %v645
      %v678 = vpack.c.b16 %v646, %v646
      %v679 = vpack.c.b16 %v647, %v647
      %v680 = vpack.c.b16 %v648, %v648
      %v681 = vpack.c.b16 %v649, %v649
      %v682 = vpack.c.b16 %v650, %v650
      %v683 = vpack.c.b16 %v651, %v651
      %v684 = vpack.c.b16 %v652, %v652
      %v685 = vpack.c.b16 %v653, %v653
      %v686 = vpack.c.b16 %v654, %v654
      %v687 = vpack.c.b16 %v655, %v655
      %v688 = vpack.c.b16 %v656, %v656
      %721 = vst [vmem:[%s233] sm:$0xf] %v657
      %722 = vst [vmem:[%s233 + $0x4] sm:$0xf] %v658
      %723 = vst [vmem:[%s233 + $0x8] sm:$0xf] %v659
      %724 = vst [vmem:[%s233 + $0xc] sm:$0xf] %v660
      %725 = vst [vmem:[%s233 + $0x10] sm:$0xf] %v661
      %726 = vst [vmem:[%s233 + $0x14] sm:$0xf] %v662
      %727 = vst [vmem:[%s233 + $0x18] sm:$0xf] %v663
      %728 = vst [vmem:[%s233 + $0x1c] sm:$0xf] %v664
      %729 = vst [vmem:[%s233 + $0x20] sm:$0xf] %v665
      %730 = vst [vmem:[%s233 + $0x24] sm:$0xf] %v666
      %731 = vst [vmem:[%s233 + $0x28] sm:$0xf] %v667
      %732 = vst [vmem:[%s233 + $0x2c] sm:$0xf] %v668
      %733 = vst [vmem:[%s233 + $0x30] sm:$0xf] %v669
      %734 = vst [vmem:[%s233 + $0x34] sm:$0xf] %v670
      %735 = vst [vmem:[%s233 + $0x38] sm:$0xf] %v671
      %736 = vst [vmem:[%s233 + $0x3c] sm:$0xf] %v672
      %737 = vst [vmem:[%s233 + $0x40] sm:$0xf] %v673
      %738 = vst [vmem:[%s233 + $0x44] sm:$0xf] %v674
      %739 = vst [vmem:[%s233 + $0x48] sm:$0xf] %v675
      %740 = vst [vmem:[%s233 + $0x4c] sm:$0xf] %v676
      %741 = vst [vmem:[%s233 + $0x50] sm:$0xf] %v677
      %742 = vst [vmem:[%s233 + $0x54] sm:$0xf] %v678
      %743 = vst [vmem:[%s233 + $0x58] sm:$0xf] %v679
      %744 = vst [vmem:[%s233 + $0x5c] sm:$0xf] %v680
      %745 = vst [vmem:[%s233 + $0x60] sm:$0xf] %v681
      %746 = vst [vmem:[%s233 + $0x64] sm:$0xf] %v682
      %747 = vst [vmem:[%s233 + $0x68] sm:$0xf] %v683
      %748 = vst [vmem:[%s233 + $0x6c] sm:$0xf] %v684
      %749 = vst [vmem:[%s233 + $0x70] sm:$0xf] %v685
      %750 = vst [vmem:[%s233 + $0x74] sm:$0xf] %v686
      %751 = vst [vmem:[%s233 + $0x78] sm:$0xf] %v687
      %752 = vst [vmem:[%s233 + $0x7c] sm:$0xf] %v688
      %v753 = vadd.f32 %v467, %v470
      %v754 = vadd.f32 %v753, %v475
      %v755 = vadd.f32 %v754, %v478
      %v756 = vadd.f32 %v755, %v483
      %v757 = vadd.f32 %v756, %v486
      %v758 = vadd.f32 %v757, %v491
      %v759 = vadd.f32 %v758, %v494
      %v760 = vadd.f32 %v759, %v499
      %v761 = vadd.f32 %v760, %v502
      %v762 = vadd.f32 %v761, %v507
      %v763 = vadd.f32 %v762, %v510
      %v764 = vadd.f32 %v763, %v515
      %v765 = vadd.f32 %v764, %v518
      %v766 = vadd.f32 %v765, %v523
      %v767 = vadd.f32 %v766, %v526
      %v768 = vadd.f32 %v767, %v531
      %v769 = vadd.f32 %v768, %v534
      %v770 = vadd.f32 %v769, %v539
      %v771 = vadd.f32 %v770, %v542
      %v772 = vadd.f32 %v771, %v547
      %v773 = vadd.f32 %v772, %v550
      %v774 = vadd.f32 %v773, %v555
      %v775 = vadd.f32 %v774, %v558
      %v776 = vadd.f32 %v775, %v563
      %v777 = vadd.f32 %v776, %v566
      %v778 = vadd.f32 %v777, %v571
      %v779 = vadd.f32 %v778, %v574
      %v780 = vadd.f32 %v779, %v579
      %v781 = vadd.f32 %v780, %v582
      %v782 = vadd.f32 %v781, %v587
      %v783 = vadd.f32 %v782, %v590
      %v784 = vrot.slane %v783, 4
      %v785 = vadd.f32 %v783, %v784
      %v786 = vrot.slane %v785, 2
      %v787 = vadd.f32 %v785, %v786
      %v788 = vrot.slane %v787, 1
      %v789 = vadd.f32 %v787, %v788
      %790 = vst [vmem:[%s238] sm:$0x1] %v789
      %v791 = vmul.f32 %v467, %v467
      %v792 = vmul.f32 %v470, %v470
      %v793 = vmul.f32 %v475, %v475
      %v794 = vmul.f32 %v478, %v478
      %v795 = vmul.f32 %v483, %v483
      %v796 = vmul.f32 %v486, %v486
      %v797 = vmul.f32 %v491, %v491
      %v798 = vmul.f32 %v494, %v494
      %v799 = vmul.f32 %v499, %v499
      %v800 = vmul.f32 %v502, %v502
      %v801 = vmul.f32 %v507, %v507
      %v802 = vmul.f32 %v510, %v510
      %v803 = vmul.f32 %v515, %v515
      %v804 = vmul.f32 %v518, %v518
      %v805 = vmul.f32 %v523, %v523
      %v806 = vmul.f32 %v526, %v526
      %v807 = vmul.f32 %v531, %v531
      %v808 = vmul.f32 %v534, %v534
      %v809 = vmul.f32 %v539, %v539
      %v810 = vmul.f32 %v542, %v542
      %v811 = vmul.f32 %v547, %v547
      %v812 = vmul.f32 %v550, %v550
      %v813 = vmul.f32 %v555, %v555
      %v814 = vmul.f32 %v558, %v558
      %v815 = vmul.f32 %v563, %v563
      %v816 = vmul.f32 %v566, %v566
      %v817 = vmul.f32 %v571, %v571
      %v818 = vmul.f32 %v574, %v574
      %v819 = vmul.f32 %v579, %v579
      %v820 = vmul.f32 %v582, %v582
      %v821 = vmul.f32 %v587, %v587
      %v822 = vmul.f32 %v590, %v590
      %v823 = vadd.f32 %v791, %v792
      %v824 = vadd.f32 %v823, %v793
      %v825 = vadd.f32 %v824, %v794
      %v826 = vadd.f32 %v825, %v795
      %v827 = vadd.f32 %v826, %v796
      %v828 = vadd.f32 %v827, %v797
      %v829 = vadd.f32 %v828, %v798
      %v830 = vadd.f32 %v829, %v799
      %v831 = vadd.f32 %v830, %v800
      %v832 = vadd.f32 %v831, %v801
      %v833 = vadd.f32 %v832, %v802
      %v834 = vadd.f32 %v833, %v803
      %v835 = vadd.f32 %v834, %v804
      %v836 = vadd.f32 %v835, %v805
      %v837 = vadd.f32 %v836, %v806
      %v838 = vadd.f32 %v837, %v807
      %v839 = vadd.f32 %v838, %v808
      %v840 = vadd.f32 %v839, %v809
      %v841 = vadd.f32 %v840, %v810
      %v842 = vadd.f32 %v841, %v811
      %v843 = vadd.f32 %v842, %v812
      %v844 = vadd.f32 %v843, %v813
      %v845 = vadd.f32 %v844, %v814
      %v846 = vadd.f32 %v845, %v815
      %v847 = vadd.f32 %v846, %v816
      %v848 = vadd.f32 %v847, %v817
      %v849 = vadd.f32 %v848, %v818
      %v850 = vadd.f32 %v849, %v819
      %v851 = vadd.f32 %v850, %v820
      %v852 = vadd.f32 %v851, %v821
      %v853 = vadd.f32 %v852, %v822
      %v854 = vrot.slane %v853, 4
      %v855 = vadd.f32 %v853, %v854
      %v856 = vrot.slane %v855, 2
      %v857 = vadd.f32 %v855, %v856
      %v858 = vrot.slane %v857, 1
      %v859 = vadd.f32 %v857, %v858
      %860 = vst [vmem:[%s238 + $0x1] sm:$0x1] %v859
      %s861 = smul.u32 32, %s17
      %p862 = scmp.lt.s32.totalorder %s861, 63
      %s863 = scalar_select %p862, %s861, 63
      %s864 = smul.addr %s863, 4
      %s865 = scalar_lea.vmem %s4, %s864
      %p866 = scmp.lt.s32.totalorder %s17, 1
      %s867 = scalar_select %p866, %s17, 1
      %s868 = smul.addr %s867, 2
      %s869 = scalar_lea.vmem %s5, %s868
      // Predicated region
      $region37: #{bottleneck_block_nhwc.4} parent=35 // pred_check
        %p870 = pneg %p124
      $region38: #{bottleneck_block_nhwc.4} parent=35 // pred_check_branch
        %872 = sbr.rel (%p870) target = $region40
      $region39: #{bottleneck_block_nhwc.4} parent=35 // pred_region
        %s873 = smul.u32 32, %s17
      $region40: #{bottleneck_block_nhwc.4} parent=35 // pred_fallthru
        _
      // Predicated region
      $region41: #{bottleneck_block_nhwc.4} parent=35 // pred_check
        %p874 = pneg %p150
      $region42: #{bottleneck_block_nhwc.4} parent=35 // pred_check_branch
        %876 = sbr.rel (%p874) target = $region44
      $region43: #{bottleneck_block_nhwc.4} parent=35 // pred_region
        _
      $region44: #{bottleneck_block_nhwc.4} parent=35 // pred_fallthru
        _
    $region36: #{bottleneck_block_nhwc.4} parent=5 // pred_fallthru
      _
    %p877 = scmp.le.s32.totalorder 2, %s12
    // Predicated region
    $region45: #{bottleneck_block_nhwc.4} parent=5 // pred_check
      %p878 = pneg %p877
    $region46: #{bottleneck_block_nhwc.4} parent=5 // pred_check_branch
      %880 = sbr.rel (%p878) target = $region48
    $region47: #{bottleneck_block_nhwc.4} parent=5 // pred_region
      %s881 = ssub.s32 %s12, 2
      // Predicated region
      $region49: #{bottleneck_block_nhwc.4} parent=47 // pred_check
        %p882 = pneg %p130
      $region50: #{bottleneck_block_nhwc.4} parent=47 // pred_check_branch
        %884 = sbr.rel (%p882) target = $region52
      $region51: #{bottleneck_block_nhwc.4} parent=47 // pred_region
        %s885 = smul.u32 32, %s18
        %p886 = scmp.lt.s32.totalorder %s885, 63
        %s887 = scalar_select %p886, %s885, 63
        %s888 = smul.addr %s887, 4
        %s889 = scalar_lea.vmem %s4, %s888
      $region52: #{bottleneck_block_nhwc.4} parent=47 // pred_fallthru
        _
      // Predicated region
      $region53: #{bottleneck_block_nhwc.4} parent=47 // pred_check
        %p890 = pneg %p156
      $region54: #{bottleneck_block_nhwc.4} parent=47 // pred_check_branch
        %892 = sbr.rel (%p890) target = $region56
      $region55: #{bottleneck_block_nhwc.4} parent=47 // pred_region
        %p893 = scmp.lt.s32.totalorder %s18, 1
        %s894 = scalar_select %p893, %s18, 1
        %s895 = smul.addr %s894, 2
        %s896 = scalar_lea.vmem %s5, %s895
      $region56: #{bottleneck_block_nhwc.4} parent=47 // pred_fallthru
        _
    $region48: #{bottleneck_block_nhwc.4} parent=5 // pred_fallthru
      _
  $region6: #{bottleneck_block_nhwc.4} parent=0 // loop_footer
    %s16 = sadd.s32 1, %s12
  $region7: #{bottleneck_block_nhwc.4} parent=0 // loop_footer_branch
    %11 = sbr.rel target = $region3
  $region8: #{bottleneck_block_nhwc.4} parent=0 // loop_exit
    _

// kernel: bottleneck_block_nhwc.5
$region0: #{bottleneck_block_nhwc.5}
  #allocation0 [shape = 'u32[]', space=smem, size = 0x4, offset = 0x4, fixed_abs, tag = 'smem constant byte address 0x4 - core index']
  #allocation1 [shape = 'u32[144,128]{1,0:T(1,128)}', space=vmem, size = 0x12000, scoped, tag = 'internal scratch']
  %s0 = inlined_call_operand.vmem [shape: bf16[2,16,16,128], index: 0, kind: input, shape index: {}, may-alias: {0,1,2}]
  %s1 = inlined_call_operand.vmem [shape: bf16[2,16,16,128], index: 1, kind: input, shape index: {}, may-alias: {0,1,2}]
  %s2 = inlined_call_operand.vmem [shape: bf16[2,16,16,128], index: 2, kind: input, shape index: {}, may-alias: {0,1,2}]
  %s3 = inlined_call_operand.vmem [shape: bf16[3,3,128,128], index: 3, kind: input, shape index: {}]
  %s4 = inlined_call_operand.vmem [shape: f32[1,128], index: 4, kind: input, shape index: {}]
  %s5 = inlined_call_operand.vmem [shape: f32[1,128], index: 5, kind: input, shape index: {}]
  %s6 = inlined_call_operand.vmem [shape: bf16[2,16,16,128], index: 6, kind: output, shape index: {0}]
  %s7 = inlined_call_operand.vmem [shape: f32[2,2,128], index: 7, kind: output, shape index: {1}]
  %8 = xla_tuple %s6, %s7
  %s9 = sld [smem:[#allocation0]]
  $region65: #{bottleneck_block_nhwc.5} parent=0
    _
  %s11 = ssub.s32 1, %s9
  %s12 = scalar_select 0, %s11, %s9
  loop: start=0, step=1, limit=4
  $region2: #{bottleneck_block_nhwc.5} parent=0 // loop_pre_header
    _
  $region3: #{bottleneck_block_nhwc.5} parent=0 // loop_header
    %s14 = sphi 0, %s18
    %p15 = scmp.ge.s32.totalorder %s14, 4
    %s21 = sphi 0, %s33
    %s22 = sphi 0, %s29
    %s23 = sphi 0, %s21
    %s24 = sphi 0, %s22
    %s25 = sphi 0, %s23
    %s26 = sphi 0, %s24
    %s38 = sphi 0, %s40
    %s41 = sphi 0, %s38
    %s42 = sphi 0, %s41
    %s58 = sphi 0, %s42
    %s74 = sphi 0, %s76
    %s77 = sphi 0, %s74
    %s78 = sphi 0, %s77
    %s94 = sphi 0, %s78
    %s110 = sphi 0, %s112
    %s113 = sphi 0, %s110
    %s114 = sphi 0, %s113
    %s130 = sphi 0, %s114
    %s134 = sphi 0, %s134
    %s136 = sphi 0, %s134
    %s137 = sphi 0, %s136
    %s151 = sphi 0, %s137
    %s155 = sphi 0, %s155
    %s157 = sphi 0, %s155
    %s158 = sphi 0, %s157
    %s172 = sphi 0, %s158
    %s176 = sphi 0, %s176
    %s178 = sphi 0, %s176
    %s179 = sphi 0, %s178
    %s193 = sphi 0, %s179
    %s201 = sphi 0, %s203
    %s204 = sphi 0, %s201
    %s205 = sphi 0, %s204
    %s221 = sphi 0, %s205
    %s229 = sphi 0, %s231
    %s232 = sphi 0, %s229
    %s233 = sphi 0, %s232
    %s249 = sphi 0, %s233
  $region4: #{bottleneck_block_nhwc.5} parent=0 // loop_header_branch
    %17 = sbr.rel (%p15) target = $region8
  $region5: #{bottleneck_block_nhwc.5} parent=0 // loop_body
    %s19 = ssub.s32 %s14, 1
    %s20 = ssub.s32 %s14, 2
    %s27 = sadd.s32 1, %s22
    %p28 = scmp.ge.s32.totalorder %s27, 1
    %s29 = scalar_select %p28, 0, %s27
    %s30 = sadd.s32 1, %s21
    %s31 = scalar_select %p28, %s30, %s21
    %p32 = scmp.ge.s32.totalorder %s31, 2
    %s33 = scalar_select %p32, 0, %s31
    %s34 = ssub.s32 %s21, %s33
    %s35 = ssub.s32 %s22, %s29
    %s36 = sor.u32 %s34, %s35
    %p37 = scmp.eq.s32.totalorder %s36, 0
    %s39 = sadd.s32 %s38, 1
    %s40 = scalar_select %p37, %s38, %s39
    %p43 = pneg %p37
    %p44 = scmp.eq.s32.totalorder %s14, 1
    %p45 = por %p43, %p44
    %p46 = scmp.ne.s32.totalorder %s38, %s41
    %p47 = scmp.eq.s32.totalorder %s14, 0
    %p48 = por %p46, %p47
    %p49 = scmp.ne.s32.totalorder %s38, %s41
    %p50 = scmp.eq.s32.totalorder %s19, 1
    %p51 = por %p49, %p50
    %p52 = scmp.ne.s32.totalorder %s41, %s42
    %p53 = scmp.eq.s32.totalorder %s19, 0
    %p54 = por %p52, %p53
    %p55 = scmp.ne.s32.totalorder %s41, %s42
    %p56 = scmp.eq.s32.totalorder %s20, 1
    %p57 = por %p55, %p56
    %p59 = scmp.ne.s32.totalorder %s42, %s58
    %p60 = scmp.eq.s32.totalorder %s20, 0
    %p61 = por %p59, %p60
    %s62 = smul.u32 %s22, 16
    %s63 = ssub.s32 %s62, 1
    %p64 = scmp.gt.s32.totalorder %s63, 0
    %s65 = scalar_select %p64, %s63, 0
    %s66 = smul.u32 %s29, 16
    %s67 = ssub.s32 %s66, 1
    %p68 = scmp.gt.s32.totalorder %s67, 0
    %s69 = scalar_select %p68, %s67, 0
    %s70 = ssub.s32 %s21, %s33
    %s71 = ssub.s32 %s65, %s69
    %s72 = sor.u32 %s70, %s71
    %p73 = scmp.eq.s32.totalorder %s72, 0
    %s75 = sadd.s32 %s74, 1
    %s76 = scalar_select %p73, %s74, %s75
    %p79 = pneg %p73
    %p80 = scmp.eq.s32.totalorder %s14, 1
    %p81 = por %p79, %p80
    %p82 = scmp.ne.s32.totalorder %s74, %s77
    %p83 = scmp.eq.s32.totalorder %s14, 0
    %p84 = por %p82, %p83
    %p85 = scmp.ne.s32.totalorder %s74, %s77
    %p86 = scmp.eq.s32.totalorder %s19, 1
    %p87 = por %p85, %p86
    %p88 = scmp.ne.s32.totalorder %s77, %s78
    %p89 = scmp.eq.s32.totalorder %s19, 0
    %p90 = por %p88, %p89
    %p91 = scmp.ne.s32.totalorder %s77, %s78
    %p92 = scmp.eq.s32.totalorder %s20, 1
    %p93 = por %p91, %p92
    %p95 = scmp.ne.s32.totalorder %s78, %s94
    %p96 = scmp.eq.s32.totalorder %s20, 0
    %p97 = por %p95, %p96
    %s98 = smul.u32 %s22, 16
    %s99 = sadd.s32 %s98, 16
    %p100 = scmp.lt.s32.totalorder %s99, 15
    %s101 = scalar_select %p100, %s99, 15
    %s102 = smul.u32 %s29, 16
    %s103 = sadd.s32 %s102, 16
    %p104 = scmp.lt.s32.totalorder %s103, 15
    %s105 = scalar_select %p104, %s103, 15
    %s106 = ssub.s32 %s21, %s33
    %s107 = ssub.s32 %s101, %s105
    %s108 = sor.u32 %s106, %s107
    %p109 = scmp.eq.s32.totalorder %s108, 0
    %s111 = sadd.s32 %s110, 1
    %s112 = scalar_select %p109, %s110, %s111
    %p115 = pneg %p109
    %p116 = scmp.eq.s32.totalorder %s14, 1
    %p117 = por %p115, %p116
    %p118 = scmp.ne.s32.totalorder %s110, %s113
    %p119 = scmp.eq.s32.totalorder %s14, 0
    %p120 = por %p118, %p119
    %p121 = scmp.ne.s32.totalorder %s110, %s113
    %p122 = scmp.eq.s32.totalorder %s19, 1
    %p123 = por %p121, %p122
    %p124 = scmp.ne.s32.totalorder %s113, %s114
    %p125 = scmp.eq.s32.totalorder %s19, 0
    %p126 = por %p124, %p125
    %p127 = scmp.ne.s32.totalorder %s113, %s114
    %p128 = scmp.eq.s32.totalorder %s20, 1
    %p129 = por %p127, %p128
    %p131 = scmp.ne.s32.totalorder %s114, %s130
    %p132 = scmp.eq.s32.totalorder %s20, 0
    %p133 = por %p131, %p132
    %s135 = sadd.s32 %s134, 1
    %p138 = scmp.eq.s32.totalorder %s14, 1
    %p139 = scmp.ne.s32.totalorder %s134, %s136
    %p140 = scmp.eq.s32.totalorder %s14, 0
    %p141 = por %p139, %p140
    %p142 = scmp.ne.s32.totalorder %s134, %s136
    %p143 = scmp.eq.s32.totalorder %s19, 1
    %p144 = por %p142, %p143
    %p145 = scmp.ne.s32.totalorder %s136, %s137
    %p146 = scmp.eq.s32.totalorder %s19, 0
    %p147 = por %p145, %p146
    %p148 = scmp.ne.s32.totalorder %s136, %s137
    %p149 = scmp.eq.s32.totalorder %s20, 1
    %p150 = por %p148, %p149
    %p152 = scmp.ne.s32.totalorder %s137, %s151
    %p153 = scmp.eq.s32.totalorder %s20, 0
    %p154 = por %p152, %p153
    %s156 = sadd.s32 %s155, 1
    %p159 = scmp.eq.s32.totalorder %s14, 1
    %p160 = scmp.ne.s32.totalorder %s155, %s157
    %p161 = scmp.eq.s32.totalorder %s14, 0
    %p162 = por %p160, %p161
    %p163 = scmp.ne.s32.totalorder %s155, %s157
    %p164 = scmp.eq.s32.totalorder %s19, 1
    %p165 = por %p163, %p164
    %p166 = scmp.ne.s32.totalorder %s157, %s158
    %p167 = scmp.eq.s32.totalorder %s19, 0
    %p168 = por %p166, %p167
    %p169 = scmp.ne.s32.totalorder %s157, %s158
    %p170 = scmp.eq.s32.totalorder %s20, 1
    %p171 = por %p169, %p170
    %p173 = scmp.ne.s32.totalorder %s158, %s172
    %p174 = scmp.eq.s32.totalorder %s20, 0
    %p175 = por %p173, %p174
    %s177 = sadd.s32 %s176, 1
    %p180 = scmp.eq.s32.totalorder %s14, 1
    %p181 = scmp.ne.s32.totalorder %s176, %s178
    %p182 = scmp.eq.s32.totalorder %s14, 0
    %p183 = por %p181, %p182
    %p184 = scmp.ne.s32.totalorder %s176, %s178
    %p185 = scmp.eq.s32.totalorder %s19, 1
    %p186 = por %p184, %p185
    %p187 = scmp.ne.s32.totalorder %s178, %s179
    %p188 = scmp.eq.s32.totalorder %s19, 0
    %p189 = por %p187, %p188
    %p190 = scmp.ne.s32.totalorder %s178, %s179
    %p191 = scmp.eq.s32.totalorder %s20, 1
    %p192 = por %p190, %p191
    %p194 = scmp.ne.s32.totalorder %s179, %s193
    %p195 = scmp.eq.s32.totalorder %s20, 0
    %p196 = por %p194, %p195
    %s197 = ssub.s32 %s21, %s33
    %s198 = ssub.s32 %s22, %s29
    %s199 = sor.u32 %s197, %s198
    %p200 = scmp.eq.s32.totalorder %s199, 0
    %s202 = sadd.s32 %s201, 1
    %s203 = scalar_select %p200, %s201, %s202
    %p206 = pneg %p200
    %p207 = scmp.eq.s32.totalorder %s14, 1
    %p208 = por %p206, %p207
    %p209 = scmp.ne.s32.totalorder %s201, %s204
    %p210 = scmp.eq.s32.totalorder %s14, 0
    %p211 = por %p209, %p210
    %p212 = scmp.ne.s32.totalorder %s201, %s204
    %p213 = scmp.eq.s32.totalorder %s19, 1
    %p214 = por %p212, %p213
    %p215 = scmp.ne.s32.totalorder %s204, %s205
    %p216 = scmp.eq.s32.totalorder %s19, 0
    %p217 = por %p215, %p216
    %p218 = scmp.ne.s32.totalorder %s204, %s205
    %p219 = scmp.eq.s32.totalorder %s20, 1
    %p220 = por %p218, %p219
    %p222 = scmp.ne.s32.totalorder %s205, %s221
    %p223 = scmp.eq.s32.totalorder %s20, 0
    %p224 = por %p222, %p223
    %s225 = sadd.s32 %s21, %s22
    %s226 = sadd.s32 %s33, %s29
    %s227 = ssub.s32 %s225, %s226
    %p228 = scmp.eq.s32.totalorder %s227, 0
    %s230 = sadd.s32 %s229, 1
    %s231 = scalar_select %p228, %s229, %s230
    %p234 = pneg %p228
    %p235 = scmp.eq.s32.totalorder %s14, 1
    %p236 = por %p234, %p235
    %p237 = scmp.ne.s32.totalorder %s229, %s232
    %p238 = scmp.eq.s32.totalorder %s14, 0
    %p239 = por %p237, %p238
    %p240 = scmp.ne.s32.totalorder %s229, %s232
    %p241 = scmp.eq.s32.totalorder %s19, 1
    %p242 = por %p240, %p241
    %p243 = scmp.ne.s32.totalorder %s232, %s233
    %p244 = scmp.eq.s32.totalorder %s19, 0
    %p245 = por %p243, %p244
    %p246 = scmp.ne.s32.totalorder %s232, %s233
    %p247 = scmp.eq.s32.totalorder %s20, 1
    %p248 = por %p246, %p247
    %p250 = scmp.ne.s32.totalorder %s233, %s249
    %p251 = scmp.eq.s32.totalorder %s20, 0
    %p252 = por %p250, %p251
    %p253 = scmp.le.s32.totalorder 1, %s14
    %p254 = scmp.lt.s32.totalorder %s14, 3
    %p255 = pnand %p253, %p254
    %p256 = pneg %p255
    // Predicated region
    $region9: #{bottleneck_block_nhwc.5} parent=5 // pred_check
      _
    $region10: #{bottleneck_block_nhwc.5} parent=5 // pred_check_branch
      %258 = sbr.rel (%p255) target = $region12
    $region11: #{bottleneck_block_nhwc.5} parent=5 // pred_region
      %s259 = ssub.s32 %s14, 1
      // Predicated region
      $region13: #{bottleneck_block_nhwc.5} parent=11 // pred_check
        %p260 = pneg %p147
      $region14: #{bottleneck_block_nhwc.5} parent=11 // pred_check_branch
        %262 = sbr.rel (%p260) target = $region16
      $region15: #{bottleneck_block_nhwc.5} parent=11 // pred_region
        _
      $region16: #{bottleneck_block_nhwc.5} parent=11 // pred_fallthru
        _
      // Predicated region
      $region17: #{bottleneck_block_nhwc.5} parent=11 // pred_check
        %p263 = pneg %p168
      $region18: #{bottleneck_block_nhwc.5} parent=11 // pred_check_branch
        %265 = sbr.rel (%p263) target = $region20
      $region19: #{bottleneck_block_nhwc.5} parent=11 // pred_region
        _
      $region20: #{bottleneck_block_nhwc.5} parent=11 // pred_fallthru
        _
      // Predicated region
      $region21: #{bottleneck_block_nhwc.5} parent=11 // pred_check
        %p266 = pneg %p189
      $region22: #{bottleneck_block_nhwc.5} parent=11 // pred_check_branch
        %268 = sbr.rel (%p266) target = $region24
      $region23: #{bottleneck_block_nhwc.5} parent=11 // pred_region
        _
      $region24: #{bottleneck_block_nhwc.5} parent=11 // pred_fallthru
        _
    $region12: #{bottleneck_block_nhwc.5} parent=5 // pred_fallthru
      _
    %p269 = scmp.lt.s32.totalorder %s14, 2
    // Predicated region
    $region25: #{bottleneck_block_nhwc.5} parent=5 // pred_check
      %p270 = pneg %p269
    $region26: #{bottleneck_block_nhwc.5} parent=5 // pred_check_branch
      %272 = sbr.rel (%p270) target = $region28
    $region27: #{bottleneck_block_nhwc.5} parent=5 // pred_region
      // Predicated region
      $region29: #{bottleneck_block_nhwc.5} parent=27 // pred_check
        %p273 = pneg %p48
      $region30: #{bottleneck_block_nhwc.5} parent=27 // pred_check_branch
        %275 = sbr.rel (%p273) target = $region32
      $region31: #{bottleneck_block_nhwc.5} parent=27 // pred_region
        %s276 = smul.u32 16, %s22
        %p277 = scmp.lt.s32.totalorder %s21, 1
        %s278 = scalar_select %p277, %s21, 1
        %p279 = scmp.lt.s32.totalorder %s276, 15
        %s280 = scalar_select %p279, %s276, 15
        %s281 = smul.addr %s280, 2
        %s282 = smul.addr %s278, 32
        %s283 = sadd.s32 %s281, %s282
        %s284 = smul.addr %s283, 4
        %s285 = scalar_lea.vmem %s0, %s284
        %s286 = smul.u32 16, %s22
      $region32: #{bottleneck_block_nhwc.5} parent=27 // pred_fallthru
        _
      // Predicated region
      $region33: #{bottleneck_block_nhwc.5} parent=27 // pred_check
        %p287 = pneg %p84
      $region34: #{bottleneck_block_nhwc.5} parent=27 // pred_check_branch
        %289 = sbr.rel (%p287) target = $region36
      $region35: #{bottleneck_block_nhwc.5} parent=27 // pred_region
        %s290 = smul.u32 %s22, 16
        %s291 = ssub.s32 %s290, 1
        %p292 = scmp.gt.s32.totalorder %s291, 0
        %s293 = scalar_select %p292, %s291, 0
        %p294 = scmp.lt.s32.totalorder %s21, 1
        %s295 = scalar_select %p294, %s21, 1
        %p296 = scmp.lt.s32.totalorder %s293, 15
        %s297 = scalar_select %p296, %s293, 15
        %s298 = smul.addr %s297, 2
        %s299 = smul.addr %s295, 32
        %s300 = sadd.s32 %s298, %s299
        %s301 = smul.addr %s300, 4
        %s302 = scalar_lea.vmem %s1, %s301
        %s303 = smul.u32 %s22, 16
        %s304 = ssub.s32 %s303, 1
        %p305 = scmp.gt.s32.totalorder %s304, 0
        %s306 = scalar_select %p305, %s304, 0
      $region36: #{bottleneck_block_nhwc.5} parent=27 // pred_fallthru
        _
      // Predicated region
      $region37: #{bottleneck_block_nhwc.5} parent=27 // pred_check
        %p307 = pneg %p120
      $region38: #{bottleneck_block_nhwc.5} parent=27 // pred_check_branch
        %309 = sbr.rel (%p307) target = $region40
      $region39: #{bottleneck_block_nhwc.5} parent=27 // pred_region
        %s310 = smul.u32 %s22, 16
        %s311 = sadd.s32 %s310, 16
        %p312 = scmp.lt.s32.totalorder %s311, 15
        %s313 = scalar_select %p312, %s311, 15
        %p314 = scmp.lt.s32.totalorder %s21, 1
        %s315 = scalar_select %p314, %s21, 1
        %p316 = scmp.lt.s32.totalorder %s313, 15
        %s317 = scalar_select %p316, %s313, 15
        %s318 = smul.addr %s317, 2
        %s319 = smul.addr %s315, 32
        %s320 = sadd.s32 %s318, %s319
        %s321 = smul.addr %s320, 4
        %s322 = scalar_lea.vmem %s2, %s321
        %s323 = smul.u32 %s22, 16
        %s324 = sadd.s32 %s323, 16
        %p325 = scmp.lt.s32.totalorder %s324, 15
        %s326 = scalar_select %p325, %s324, 15
      $region40: #{bottleneck_block_nhwc.5} parent=27 // pred_fallthru
        _
    $region28: #{bottleneck_block_nhwc.5} parent=5 // pred_fallthru
      _
    %p327 = scmp.le.s32.totalorder 1, %s14
    %p328 = scmp.lt.s32.totalorder %s14, 3
    %p329 = pnand %p327, %p328
    %p330 = pneg %p329
    // Predicated region
    $region41: #{bottleneck_block_nhwc.5} parent=5 // pred_check
      _
    $region42: #{bottleneck_block_nhwc.5} parent=5 // pred_check_branch
      %332 = sbr.rel (%p329) target = $region44
    $region43: #{bottleneck_block_nhwc.5} parent=5 // pred_region
      %s333 = ssub.s32 %s14, 1
      %s334 = smul.u32 16, %s24
      %p335 = scmp.lt.s32.totalorder %s23, 1
      %s336 = scalar_select %p335, %s23, 1
      %p337 = scmp.lt.s32.totalorder %s334, 15
      %s338 = scalar_select %p337, %s334, 15
      %s339 = smul.addr %s338, 2
      %s340 = smul.addr %s336, 32
      %s341 = sadd.s32 %s339, %s340
      %s342 = smul.addr %s341, 4
      %s343 = scalar_lea.vmem %s0, %s342
      %p344 = pneg %p54
      %p345 = pneg %p51
      %s346 = smul.u32 %s24, 16
      %s347 = ssub.s32 %s346, 1
      %p348 = scmp.gt.s32.totalorder %s347, 0
      %s349 = scalar_select %p348, %s347, 0
      %p350 = scmp.lt.s32.totalorder %s23, 1
      %s351 = scalar_select %p350, %s23, 1
      %p352 = scmp.lt.s32.totalorder %s349, 15
      %s353 = scalar_select %p352, %s349, 15
      %s354 = smul.addr %s353, 2
      %s355 = smul.addr %s351, 32
      %s356 = sadd.s32 %s354, %s355
      %s357 = smul.addr %s356, 4
      %s358 = scalar_lea.vmem %s1, %s357
      %p359 = pneg %p90
      %p360 = pneg %p87
      %s361 = smul.u32 %s24, 16
      %s362 = sadd.s32 %s361, 16
      %p363 = scmp.lt.s32.totalorder %s362, 15
      %s364 = scalar_select %p363, %s362, 15
      %p365 = scmp.lt.s32.totalorder %s23, 1
      %s366 = scalar_select %p365, %s23, 1
      %p367 = scmp.lt.s32.totalorder %s364, 15
      %s368 = scalar_select %p367, %s364, 15
      %s369 = smul.addr %s368, 2
      %s370 = smul.addr %s366, 32
      %s371 = sadd.s32 %s369, %s370
      %s372 = smul.addr %s371, 4
      %s373 = scalar_lea.vmem %s2, %s372
      %p374 = pneg %p126
      %p375 = pneg %p123
      %p376 = pneg %p147
      %p377 = pneg %p144
      %p378 = pneg %p168
      %p379 = pneg %p165
      %p380 = pneg %p189
      %p381 = pneg %p186
      %p382 = pneg %p217
      %p383 = pneg %p214
      %s384 = smul.u32 16, %s24
      %p385 = scmp.lt.s32.totalorder %s23, 1
      %s386 = scalar_select %p385, %s23, 1
      %p387 = scmp.lt.s32.totalorder %s384, 15
      %s388 = scalar_select %p387, %s384, 15
      %s389 = smul.addr %s388, 2
      %s390 = smul.addr %s386, 32
      %s391 = sadd.s32 %s389, %s390
      %s392 = smul.addr %s391, 4
      %s393 = scalar_lea.vmem %s6, %s392
      %p394 = pneg %p245
      %p395 = pneg %p242
      %s396 = sadd.s32 %s23, %s24
      %p397 = scmp.lt.s32.totalorder %s396, 1
      %s398 = scalar_select %p397, %s396, 1
      %s399 = smul.addr %s398, 2
      %s400 = scalar_lea.vmem %s7, %s399
      %s401 = smul.u32 16, %s24
      %p402 = scmp.lt.s32.totalorder %s23, 1
      %s403 = scalar_select %p402, %s23, 1
      %p404 = scmp.lt.s32.totalorder %s401, 15
      %s405 = scalar_select %p404, %s401, 15
      %s406 = smul.addr %s405, 2
      %s407 = smul.addr %s403, 32
      %s408 = sadd.s32 %s406, %s407
      %s409 = smul.addr %s408, 4
      %s410 = scalar_lea.vmem %s0, %s409
      %s411 = smul.u32 16, %s24
      %s412 = smul.u32 %s24, 16
      %s413 = ssub.s32 %s412, 1
      %p414 = scmp.gt.s32.totalorder %s413, 0
      %s415 = scalar_select %p414, %s413, 0
      %p416 = scmp.lt.s32.totalorder %s23, 1
      %s417 = scalar_select %p416, %s23, 1
      %p418 = scmp.lt.s32.totalorder %s415, 15
      %s419 = scalar_select %p418, %s415, 15
      %s420 = smul.addr %s419, 2
      %s421 = smul.addr %s417, 32
      %s422 = sadd.s32 %s420, %s421
      %s423 = smul.addr %s422, 4
      %s424 = scalar_lea.vmem %s1, %s423
      %s425 = smul.u32 %s24, 16
      %s426 = ssub.s32 %s425, 1
      %p427 = scmp.gt.s32.totalorder %s426, 0
      %s428 = scalar_select %p427, %s426, 0
      %s429 = smul.u32 %s24, 16
      %s430 = sadd.s32 %s429, 16
      %p431 = scmp.lt.s32.totalorder %s430, 15
      %s432 = scalar_select %p431, %s430, 15
      %p433 = scmp.lt.s32.totalorder %s23, 1
      %s434 = scalar_select %p433, %s23, 1
      %p435 = scmp.lt.s32.totalorder %s432, 15
      %s436 = scalar_select %p435, %s432, 15
      %s437 = smul.addr %s436, 2
      %s438 = smul.addr %s434, 32
      %s439 = sadd.s32 %s437, %s438
      %s440 = smul.addr %s439, 4
      %s441 = scalar_lea.vmem %s2, %s440
      %s442 = smul.u32 %s24, 16
      %s443 = sadd.s32 %s442, 16
      %p444 = scmp.lt.s32.totalorder %s443, 15
      %s445 = scalar_select %p444, %s443, 15
      %s446 = smul.u32 16, %s24
      %p447 = scmp.lt.s32.totalorder %s23, 1
      %s448 = scalar_select %p447, %s23, 1
      %p449 = scmp.lt.s32.totalorder %s446, 15
      %s450 = scalar_select %p449, %s446, 15
      %s451 = smul.addr %s450, 2
      %s452 = smul.addr %s448, 32
      %s453 = sadd.s32 %s451, %s452
      %s454 = smul.addr %s453, 4
      %s455 = scalar_lea.vmem %s6, %s454
      %s456 = smul.u32 16, %s24
      %s457 = sadd.s32 %s23, %s24
      %p458 = scmp.lt.s32.totalorder %s457, 1
      %s459 = scalar_select %p458, %s457, 1
      %s460 = smul.addr %s459, 2
      %s461 = scalar_lea.vmem %s7, %s460
      %s462 = sadd.s32 %s23, %s24
      %v464 = vld [vmem:[%s4] sm:$0x1]
      %v465 = vld [vmem:[%s5] sm:$0x1]
      %p466 = scmp.eq.s32.totalorder %s24, 0
      %v467 = vld [vmem:[%s424] sm:$0xf]
      %v468 = vld [vmem:[%s424 + $0x4] sm:$0xf]
      %v469 = vunpack.c.l.bf16 %v467
      %v470 = vunpack.c.l.bf16 %v468
      %v472 = vlaneseq
      %v473 = vshrl.u32 %v472, 7
      %v474 = vsub.s32 0, %v473
      %v475 = vrot.slane %v464, %v474
      %v477 = vmul.f32 %v469, %v475
      %v478 = vmul.f32 %v470, %v475
      %v480 = vlaneseq
      %v481 = vshrl.u32 %v480, 7
      %v482 = vsub.s32 0, %v481
      %v483 = vrot.slane %v465, %v482
      %v485 = vadd.f32 %v477, %v483
      %v486 = vadd.f32 %v478, %v483
      %v487 = vmax.f32 %v485, 0.0
      %v488 = vmax.f32 %v486, 0.0
      %s489 = scalar_select %p466, 1, 0
      %v490 = vstv %s489
      %vm491 = vcmp.eq.s32.totalorder %v490, 1
      %v492 = vsel %vm491, 0.0, %v487
      %v493 = vsel %vm491, 0.0, %v488
      %v494 = vld [vmem:[%s441] sm:$0xf]
      %v495 = vld [vmem:[%s441 + $0x4] sm:$0xf]
      %v496 = vunpack.c.l.bf16 %v494
      %v497 = vunpack.c.l.bf16 %v495
      %v498 = vmul.f32 %v496, %v475
      %v499 = vmul.f32 %v497, %v475
      %v500 = vadd.f32 %v498, %v483
      %v501 = vadd.f32 %v499, %v483
      %v502 = vmax.f32 %v500, 0.0
      %v503 = vmax.f32 %v501, 0.0
      %v504 = vsel %vm491, 0.0, %v502
      %v505 = vsel %vm491, 0.0, %v503
      %v506 = vld [vmem:[%s410] sm:$0xf]
      %v507 = vld [vmem:[%s410 + $0x4] sm:$0xf]
      %v508 = vld [vmem:[%s410 + $0x8] sm:$0xf]
      %v509 = vld [vmem:[%s410 + $0xc] sm:$0xf]
      %v510 = vld [vmem:[%s410 + $0x10] sm:$0xf]
      %v511 = vld [vmem:[%s410 + $0x14] sm:$0xf]
      %v512 = vld [vmem:[%s410 + $0x18] sm:$0xf]
      %v513 = vld [vmem:[%s410 + $0x1c] sm:$0xf]
      %v514 = vld [vmem:[%s410 + $0x20] sm:$0xf]
      %v515 = vld [vmem:[%s410 + $0x24] sm:$0xf]
      %v516 = vld [vmem:[%s410 + $0x28] sm:$0xf]
      %v517 = vld [vmem:[%s410 + $0x2c] sm:$0xf]
      %v518 = vld [vmem:[%s410 + $0x30] sm:$0xf]
      %v519 = vld [vmem:[%s410 + $0x34] sm:$0xf]
      %v520 = vld [vmem:[%s410 + $0x38] sm:$0xf]
      %v521 = vld [vmem:[%s410 + $0x3c] sm:$0xf]
      %v522 = vld [vmem:[%s410 + $0x40] sm:$0xf]
      %v523 = vld [vmem:[%s410 + $0x44] sm:$0xf]
      %v524 = vld [vmem:[%s410 + $0x48] sm:$0xf]
      %v525 = vld [vmem:[%s410 + $0x4c] sm:$0xf]
      %v526 = vld [vmem:[%s410 + $0x50] sm:$0xf]
      %v527 = vld [vmem:[%s410 + $0x54] sm:$0xf]
      %v528 = vld [vmem:[%s410 + $0x58] sm:$0xf]
      %v529 = vld [vmem:[%s410 + $0x5c] sm:$0xf]
      %v530 = vld [vmem:[%s410 + $0x60] sm:$0xf]
      %v531 = vld [vmem:[%s410 + $0x64] sm:$0xf]
      %v532 = vld [vmem:[%s410 + $0x68] sm:$0xf]
      %v533 = vld [vmem:[%s410 + $0x6c] sm:$0xf]
      %v534 = vld [vmem:[%s410 + $0x70] sm:$0xf]
      %v535 = vld [vmem:[%s410 + $0x74] sm:$0xf]
      %v536 = vld [vmem:[%s410 + $0x78] sm:$0xf]
      %v537 = vld [vmem:[%s410 + $0x7c] sm:$0xf]
      %v538 = vunpack.c.l.bf16 %v506
      %v539 = vunpack.c.l.bf16 %v507
      %v540 = vunpack.c.l.bf16 %v508
      %v541 = vunpack.c.l.bf16 %v509
      %v542 = vunpack.c.l.bf16 %v510
      %v543 = vunpack.c.l.bf16 %v511
      %v544 = vunpack.c.l.bf16 %v512
      %v545 = vunpack.c.l.bf16 %v513
      %v546 = vunpack.c.l.bf16 %v514
      %v547 = vunpack.c.l.bf16 %v515
      %v548 = vunpack.c.l.bf16 %v516
      %v549 = vunpack.c.l.bf16 %v517
      %v550 = vunpack.c.l.bf16 %v518
      %v551 = vunpack.c.l.bf16 %v519
      %v552 = vunpack.c.l.bf16 %v520
      %v553 = vunpack.c.l.bf16 %v521
      %v554 = vunpack.c.l.bf16 %v522
      %v555 = vunpack.c.l.bf16 %v523
      %v556 = vunpack.c.l.bf16 %v524
      %v557 = vunpack.c.l.bf16 %v525
      %v558 = vunpack.c.l.bf16 %v526
      %v559 = vunpack.c.l.bf16 %v527
      %v560 = vunpack.c.l.bf16 %v528
      %v561 = vunpack.c.l.bf16 %v529
      %v562 = vunpack.c.l.bf16 %v530
      %v563 = vunpack.c.l.bf16 %v531
      %v564 = vunpack.c.l.bf16 %v532
      %v565 = vunpack.c.l.bf16 %v533
      %v566 = vunpack.c.l.bf16 %v534
      %v567 = vunpack.c.l.bf16 %v535
      %v568 = vunpack.c.l.bf16 %v536
      %v569 = vunpack.c.l.bf16 %v537
      %v570 = vmul.f32 %v538, %v475
      %v571 = vmul.f32 %v539, %v475
      %v572 = vmul.f32 %v540, %v475
      %v573 = vmul.f32 %v541, %v475
      %v574 = vmul.f32 %v542, %v475
      %v575 = vmul.f32 %v543, %v475
      %v576 = vmul.f32 %v544, %v475
      %v577 = vmul.f32 %v545, %v475
      %v578 = vmul.f32 %v546, %v475
      %v579 = vmul.f32 %v547, %v475
      %v580 = vmul.f32 %v548, %v475
      %v581 = vmul.f32 %v549, %v475
      %v582 = vmul.f32 %v550, %v475
      %v583 = vmul.f32 %v551, %v475
      %v584 = vmul.f32 %v552, %v475
      %v585 = vmul.f32 %v553, %v475
      %v586 = vmul.f32 %v554, %v475
      %v587 = vmul.f32 %v555, %v475
      %v588 = vmul.f32 %v556, %v475
      %v589 = vmul.f32 %v557, %v475
      %v590 = vmul.f32 %v558, %v475
      %v591 = vmul.f32 %v559, %v475
      %v592 = vmul.f32 %v560, %v475
      %v593 = vmul.f32 %v561, %v475
      %v594 = vmul.f32 %v562, %v475
      %v595 = vmul.f32 %v563, %v475
      %v596 = vmul.f32 %v564, %v475
      %v597 = vmul.f32 %v565, %v475
      %v598 = vmul.f32 %v566, %v475
      %v599 = vmul.f32 %v567, %v475
      %v600 = vmul.f32 %v568, %v475
      %v601 = vmul.f32 %v569, %v475
      %v602 = vadd.f32 %v570, %v483
      %v603 = vadd.f32 %v571, %v483
      %v604 = vadd.f32 %v572, %v483
      %v605 = vadd.f32 %v573, %v483
      %v606 = vadd.f32 %v574, %v483
      %v607 = vadd.f32 %v575, %v483
      %v608 = vadd.f32 %v576, %v483
      %v609 = vadd.f32 %v577, %v483
      %v610 = vadd.f32 %v578, %v483
      %v611 = vadd.f32 %v579, %v483
      %v612 = vadd.f32 %v580, %v483
      %v613 = vadd.f32 %v581, %v483
      %v614 = vadd.f32 %v582, %v483
      %v615 = vadd.f32 %v583, %v483
      %v616 = vadd.f32 %v584, %v483
      %v617 = vadd.f32 %v585, %v483
      %v618 = vadd.f32 %v586, %v483
      %v619 = vadd.f32 %v587, %v483
      %v620 = vadd.f32 %v588, %v483
      %v621 = vadd.f32 %v589, %v483
      %v622 = vadd.f32 %v590, %v483
      %v623 = vadd.f32 %v591, %v483
      %v624 = vadd.f32 %v592, %v483
      %v625 = vadd.f32 %v593, %v483
      %v626 = vadd.f32 %v594, %v483
      %v627 = vadd.f32 %v595, %v483
      %v628 = vadd.f32 %v596, %v483
      %v629 = vadd.f32 %v597, %v483
      %v630 = vadd.f32 %v598, %v483
      %v631 = vadd.f32 %v599, %v483
      %v632 = vadd.f32 %v600, %v483
      %v633 = vadd.f32 %v601, %v483
      %v634 = vmax.f32 %v602, 0.0
      %v635 = vmax.f32 %v603, 0.0
      %v636 = vmax.f32 %v604, 0.0
      %v637 = vmax.f32 %v605, 0.0
      %v638 = vmax.f32 %v606, 0.0
      %v639 = vmax.f32 %v607, 0.0
      %v640 = vmax.f32 %v608, 0.0
      %v641 = vmax.f32 %v609, 0.0
      %v642 = vmax.f32 %v610, 0.0
      %v643 = vmax.f32 %v611, 0.0
      %v644 = vmax.f32 %v612, 0.0
      %v645 = vmax.f32 %v613, 0.0
      %v646 = vmax.f32 %v614, 0.0
      %v647 = vmax.f32 %v615, 0.0
      %v648 = vmax.f32 %v616, 0.0
      %v649 = vmax.f32 %v617, 0.0
      %v650 = vmax.f32 %v618, 0.0
      %v651 = vmax.f32 %v619, 0.0
      %v652 = vmax.f32 %v620, 0.0
      %v653 = vmax.f32 %v621, 0.0
      %v654 = vmax.f32 %v622, 0.0
      %v655 = vmax.f32 %v623, 0.0
      %v656 = vmax.f32 %v624, 0.0
      %v657 = vmax.f32 %v625, 0.0
      %v658 = vmax.f32 %v626, 0.0
      %v659 = vmax.f32 %v627, 0.0
      %v660 = vmax.f32 %v628, 0.0
      %v661 = vmax.f32 %v629, 0.0
      %v662 = vmax.f32 %v630, 0.0
      %v663 = vmax.f32 %v631, 0.0
      %v664 = vmax.f32 %v632, 0.0
      %v665 = vmax.f32 %v633, 0.0
      %vm702 = vcmask 1040384
      %v703 = vrot.slane %v492, 7
      %v704 = vrot.slane %v493, 7
      %v705 = vsel %vm702, %v703, %v704
      %v706 = vrot.slane %v634, 7
      %v707 = vrot.slane %v635, 7
      %v708 = vsel %vm702, %v706, %v707
      %v709 = vrot.slane %v636, 7
      %v710 = vrot.slane %v637, 7
      %v711 = vsel %vm702, %v709, %v710
      %v712 = vrot.slane %v638, 7
      %v713 = vrot.slane %v639, 7
      %v714 = vsel %vm702, %v712, %v713
      %v715 = vrot.slane %v640, 7
      %v716 = vrot.slane %v641, 7
      %v717 = vsel %vm702, %v715, %v716
      %v718 = vrot.slane %v642, 7
      %v719 = vrot.slane %v643, 7
      %v720 = vsel %vm702, %v718, %v719
      %v721 = vrot.slane %v644, 7
      %v722 = vrot.slane %v645, 7
      %v723 = vsel %vm702, %v721, %v722
      %v724 = vrot.slane %v646, 7
      %v725 = vrot.slane %v647, 7
      %v726 = vsel %vm702, %v724, %v725
      %v727 = vrot.slane %v648, 7
      %v728 = vrot.slane %v649, 7
      %v729 = vsel %vm702, %v727, %v728
      %v730 = vrot.slane %v650, 7
      %v731 = vrot.slane %v651, 7
      %v732 = vsel %vm702, %v730, %v731
      %v733 = vrot.slane %v652, 7
      %v734 = vrot.slane %v653, 7
      %v735 = vsel %vm702, %v733, %v734
      %v736 = vrot.slane %v654, 7
      %v737 = vrot.slane %v655, 7
      %v738 = vsel %vm702, %v736, %v737
      %v739 = vrot.slane %v656, 7
      %v740 = vrot.slane %v657, 7
      %v741 = vsel %vm702, %v739, %v740
      %v742 = vrot.slane %v658, 7
      %v743 = vrot.slane %v659, 7
      %v744 = vsel %vm702, %v742, %v743
      %v745 = vrot.slane %v660, 7
      %v746 = vrot.slane %v661, 7
      %v747 = vsel %vm702, %v745, %v746
      %v748 = vrot.slane %v662, 7
      %v749 = vrot.slane %v663, 7
      %v750 = vsel %vm702, %v748, %v749
      %v751 = vrot.slane %v664, 7
      %v752 = vrot.slane %v665, 7
      %v753 = vsel %vm702, %v751, %v752
      %v754 = vrot.slane %v504, 7
      %v755 = vrot.slane %v505, 7
      %v756 = vsel %vm702, %v754, %v755
      %v811 = vsel %vm702, 0.0, %v703
      %v812 = vsel %vm702, 0.0, %v706
      %v813 = vsel %vm702, 0.0, %v709
      %v814 = vsel %vm702, 0.0, %v712
      %v815 = vsel %vm702, 0.0, %v715
      %v816 = vsel %vm702, 0.0, %v718
      %v817 = vsel %vm702, 0.0, %v721
      %v818 = vsel %vm702, 0.0, %v724
      %v819 = vsel %vm702, 0.0, %v727
      %v820 = vsel %vm702, 0.0, %v730
      %v821 = vsel %vm702, 0.0, %v733
      %v822 = vsel %vm702, 0.0, %v736
      %v823 = vsel %vm702, 0.0, %v739
      %v824 = vsel %vm702, 0.0, %v742
      %v825 = vsel %vm702, 0.0, %v745
      %v826 = vsel %vm702, 0.0, %v748
      %v827 = vsel %vm702, 0.0, %v751
      %v828 = vsel %vm702, 0.0, %v754
      %v829 = vsel %vm702, %v704, 0.0
      %v830 = vsel %vm702, %v707, 0.0
      %v831 = vsel %vm702, %v710, 0.0
      %v832 = vsel %vm702, %v713, 0.0
      %v833 = vsel %vm702, %v716, 0.0
      %v834 = vsel %vm702, %v719, 0.0
      %v835 = vsel %vm702, %v722, 0.0
      %v836 = vsel %vm702, %v725, 0.0
      %v837 = vsel %vm702, %v728, 0.0
      %v838 = vsel %vm702, %v731, 0.0
      %v839 = vsel %vm702, %v734, 0.0
      %v840 = vsel %vm702, %v737, 0.0
      %v841 = vsel %vm702, %v740, 0.0
      %v842 = vsel %vm702, %v743, 0.0
      %v843 = vsel %vm702, %v746, 0.0
      %v844 = vsel %vm702, %v749, 0.0
      %v845 = vsel %vm702, %v752, 0.0
      %v846 = vsel %vm702, %v755, 0.0
      %v847 = vpack.c.bf16 %v705, %v811
      %v848 = vpack.c.bf16 %v708, %v812
      %v849 = vpack.c.bf16 %v711, %v813
      %v850 = vpack.c.bf16 %v714, %v814
      %v851 = vpack.c.bf16 %v717, %v815
      %v852 = vpack.c.bf16 %v720, %v816
      %v853 = vpack.c.bf16 %v723, %v817
      %v854 = vpack.c.bf16 %v726, %v818
      %v855 = vpack.c.bf16 %v729, %v819
      %v856 = vpack.c.bf16 %v732, %v820
      %v857 = vpack.c.bf16 %v735, %v821
      %v858 = vpack.c.bf16 %v738, %v822
      %v859 = vpack.c.bf16 %v741, %v823
      %v860 = vpack.c.bf16 %v744, %v824
      %v861 = vpack.c.bf16 %v747, %v825
      %v862 = vpack.c.bf16 %v750, %v826
      %v863 = vld [vmem:[%s3] sm:$0xf]
      %v864 = vld [vmem:[%s3 + $0x4] sm:$0xf]
      %v865 = vld [vmem:[%s3 + $0x8] sm:$0xf]
      %v866 = vld [vmem:[%s3 + $0xc] sm:$0xf]
      %v867 = vld [vmem:[%s3 + $0x10] sm:$0xf]
      %v868 = vld [vmem:[%s3 + $0x14] sm:$0xf]
      %v869 = vld [vmem:[%s3 + $0x18] sm:$0xf]
      %v870 = vld [vmem:[%s3 + $0x1c] sm:$0xf]
      %v871 = vld [vmem:[%s3 + $0x20] sm:$0xf]
      %v872 = vld [vmem:[%s3 + $0x24] sm:$0xf]
      %v873 = vld [vmem:[%s3 + $0x28] sm:$0xf]
      %v874 = vld [vmem:[%s3 + $0x2c] sm:$0xf]
      %v875 = vld [vmem:[%s3 + $0x30] sm:$0xf]
      %v876 = vld [vmem:[%s3 + $0x34] sm:$0xf]
      %v877 = vld [vmem:[%s3 + $0x38] sm:$0xf]
      %v878 = vld [vmem:[%s3 + $0x3c] sm:$0xf]
      %vm911 = vcmask 1046528
      %v912 = vrot.slane %v811, 1
      %v913 = vrot.slane %v705, 1
      %v914 = vsel %vm911, %v912, %v913
      %v915 = vrot.slane %v829, 1
      %v916 = vsel %vm911, %v913, %v915
      %v917 = vrot.slane %v812, 1
      %v918 = vrot.slane %v708, 1
      %v919 = vsel %vm911, %v917, %v918
      %v920 = vrot.slane %v830, 1
      %v921 = vsel %vm911, %v918, %v920
      %v922 = vrot.slane %v813, 1
      %v923 = vrot.slane %v711, 1
      %v924 = vsel %vm911, %v922, %v923
      %v925 = vrot.slane %v831, 1
      %v926 = vsel %vm911, %v923, %v925
      %v927 = vrot.slane %v814, 1
      %v928 = vrot.slane %v714, 1
      %v929 = vsel %vm911, %v927, %v928
      %v930 = vrot.slane %v832, 1
      %v931 = vsel %vm911, %v928, %v930
      %v932 = vrot.slane %v815, 1
      %v933 = vrot.slane %v717, 1
      %v934 = vsel %vm911, %v932, %v933
      %v935 = vrot.slane %v833, 1
      %v936 = vsel %vm911, %v933, %v935
      %v937 = vrot.slane %v816, 1
      %v938 = vrot.slane %v720, 1
      %v939 = vsel %vm911, %v937, %v938
      %v940 = vrot.slane %v834, 1
      %v941 = vsel %vm911, %v938, %v940
      %v942 = vrot.slane %v817, 1
      %v943 = vrot.slane %v723, 1
      %v944 = vsel %vm911, %v942, %v943
      %v945 = vrot.slane %v835, 1
      %v946 = vsel %vm911, %v943, %v945
      %v947 = vrot.slane %v818, 1
      %v948 = vrot.slane %v726, 1
      %v949 = vsel %vm911, %v947, %v948
      %v950 = vrot.slane %v836, 1
      %v951 = vsel %vm911, %v948, %v950
      %v952 = vrot.slane %v819, 1
      %v953 = vrot.slane %v729, 1
      %v954 = vsel %vm911, %v952, %v953
      %v955 = vrot.slane %v837, 1
      %v956 = vsel %vm911, %v953, %v955
      %v957 = vrot.slane %v820, 1
      %v958 = vrot.slane %v732, 1
      %v959 = vsel %vm911, %v957, %v958
      %v960 = vrot.slane %v838, 1
      %v961 = vsel %vm911, %v958, %v960
      %v962 = vrot.slane %v821, 1
      %v963 = vrot.slane %v735, 1
      %v964 = vsel %vm911, %v962, %v963
      %v965 = vrot.slane %v839, 1
      %v966 = vsel %vm911, %v963, %v965
      %v967 = vrot.slane %v822, 1
      %v968 = vrot.slane %v738, 1
      %v969 = vsel %vm911, %v967, %v968
      %v970 = vrot.slane %v840, 1
      %v971 = vsel %vm911, %v968, %v970
      %v972 = vrot.slane %v823, 1
      %v973 = vrot.slane %v741, 1
      %v974 = vsel %vm911, %v972, %v973
      %v975 = vrot.slane %v841, 1
      %v976 = vsel %vm911, %v973, %v975
      %v977 = vrot.slane %v824, 1
      %v978 = vrot.slane %v744, 1
      %v979 = vsel %vm911, %v977, %v978
      %v980 = vrot.slane %v842, 1
      %v981 = vsel %vm911, %v978, %v980
      %v982 = vrot.slane %v825, 1
      %v983 = vrot.slane %v747, 1
      %v984 = vsel %vm911, %v982, %v983
      %v985 = vrot.slane %v843, 1
      %v986 = vsel %vm911, %v983, %v985
      %v987 = vrot.slane %v826, 1
      %v988 = vrot.slane %v750, 1
      %v989 = vsel %vm911, %v987, %v988
      %v990 = vrot.slane %v844, 1
      %v991 = vsel %vm911, %v988, %v990
      %v1024 = vpack.c.bf16 %v916, %v914
      %v1025 = vpack.c.bf16 %v921, %v919
      %v1026 = vpack.c.bf16 %v926, %v924
      %v1027 = vpack.c.bf16 %v931, %v929
      %v1028 = vpack.c.bf16 %v936, %v934
      %v1029 = vpack.c.bf16 %v941, %v939
      %v1030 = vpack.c.bf16 %v946, %v944
      %v1031 = vpack.c.bf16 %v951, %v949
      %v1032 = vpack.c.bf16 %v956, %v954
      %v1033 = vpack.c.bf16 %v961, %v959
      %v1034 = vpack.c.bf16 %v966, %v964
      %v1035 = vpack.c.bf16 %v971, %v969
      %v1036 = vpack.c.bf16 %v976, %v974
      %v1037 = vpack.c.bf16 %v981, %v979
      %v1038 = vpack.c.bf16 %v986, %v984
      %v1039 = vpack.c.bf16 %v991, %v989
      %s1040 = scalar_lea.vmem %s3, 64
      %v1041 = vld [vmem:[%s1040] sm:$0xf]
      %v1042 = vld [vmem:[%s1040 + $0x4] sm:$0xf]
      %v1043 = vld [vmem:[%s1040 + $0x8] sm:$0xf]
      %v1044 = vld [vmem:[%s1040 + $0xc] sm:$0xf]
      %v1045 = vld [vmem:[%s1040 + $0x10] sm:$0xf]
      %v1046 = vld [vmem:[%s1040 + $0x14] sm:$0xf]
      %v1047 = vld [vmem:[%s1040 + $0x18] sm:$0xf]
      %v1048 = vld [vmem:[%s1040 + $0x1c] sm:$0xf]
      %v1049 = vld [vmem:[%s1040 + $0x20] sm:$0xf]
      %v1050 = vld [vmem:[%s1040 + $0x24] sm:$0xf]
      %v1051 = vld [vmem:[%s1040 + $0x28] sm:$0xf]
      %v1052 = vld [vmem:[%s1040 + $0x2c] sm:$0xf]
      %v1053 = vld [vmem:[%s1040 + $0x30] sm:$0xf]
      %v1054 = vld [vmem:[%s1040 + $0x34] sm:$0xf]
      %v1055 = vld [vmem:[%s1040 + $0x38] sm:$0xf]
      %v1056 = vld [vmem:[%s1040 + $0x3c] sm:$0xf]
      %v1073 = vunpack.c.l.b16 %v1041
      %v1074 = vunpack.c.l.b16 %v1042
      %v1075 = vunpack.c.l.b16 %v1043
      %v1076 = vunpack.c.l.b16 %v1044
      %v1077 = vunpack.c.l.b16 %v1045
      %v1078 = vunpack.c.l.b16 %v1046
      %v1079 = vunpack.c.l.b16 %v1047
      %v1080 = vunpack.c.l.b16 %v1048
      %v1081 = vunpack.c.l.b16 %v1049
      %v1082 = vunpack.c.l.b16 %v1050
      %v1083 = vunpack.c.l.b16 %v1051
      %v1084 = vunpack.c.l.b16 %v1052
      %v1085 = vunpack.c.l.b16 %v1053
      %v1086 = vunpack.c.l.b16 %v1054
      %v1087 = vunpack.c.l.b16 %v1055
      %v1088 = vunpack.c.l.b16 %v1056
      %v1089 = vpack.c.b16 %v1074, %v1073
      %v1090 = vpack.c.b16 %v1076, %v1075
      %v1091 = vpack.c.b16 %v1078, %v1077
      %v1092 = vpack.c.b16 %v1080, %v1079
      %v1093 = vpack.c.b16 %v1082, %v1081
      %v1094 = vpack.c.b16 %v1084, %v1083
      %v1095 = vpack.c.b16 %v1086, %v1085
      %v1096 = vpack.c.b16 %v1088, %v1087
      %1105 = vmatprep.subr.bf16.mxu0 0
      %1106 = vmatpush1.bf16.msra.mxu0 %v1089
      %1107 = vmatprep.subr.bf16.mxu0 0
      %1108 = vmatpush1.bf16.msra.mxu0 %v1090
      %1109 = vmatprep.subr.bf16.mxu0 0
      %1110 = vmatpush1.bf16.msra.mxu0 %v1091
      %1111 = vmatprep.subr.bf16.mxu0 0
      %1112 = vmatpush1.bf16.msra.mxu0 %v1092
      %1113 = vmatprep.subr.bf16.mxu0 0
      %1114 = vmatpush1.bf16.msra.mxu0 %v1093
      %1115 = vmatprep.subr.bf16.mxu0 0
      %1116 = vmatpush1.bf16.msra.mxu0 %v1094
      %1117 = vmatprep.subr.bf16.mxu0 0
      %1118 = vmatpush1.bf16.msra.mxu0 %v1095
      %1119 = vmatprep.subr.bf16.mxu0 0
      %1120 = vmatpush1.bf16.msra.mxu0 %v1096
      %1121 = vmatprep.subr.bf16.mxu0 0
      %1122 = vmatpush1.bf16.msra.mxu0 0
      %1123 = vmatprep.subr.bf16.mxu0 0
      %1124 = vmatpush1.bf16.msra.mxu0 0
      %1125 = vmatprep.subr.bf16.mxu0 0
      %1126 = vmatpush1.bf16.msra.mxu0 0
      %1127 = vmatprep.subr.bf16.mxu0 0
      %1128 = vmatpush1.bf16.msra.mxu0 0
      %1129 = vmatprep.subr.bf16.mxu0 0
      %1130 = vmatpush1.bf16.msra.mxu0 0
      %1131 = vmatprep.subr.bf16.mxu0 0
      %1132 = vmatpush1.bf16.msra.mxu0 0
      %1133 = vmatprep.subr.bf16.mxu0 0
      %1134 = vmatpush1.bf16.msra.mxu0 0
      %1135 = vmatprep.subr.bf16.mxu0 0
      %1136 = vmatpush1.bf16.msra.mxu0 0
      %1137 = vmatprep.mubr.bf16.mxu0 0
      %1138 = vmatmul.mubr.bf16.gmra.mrb[0].mxu0 %v1024
      %v1139 = vpop.f32.mrb[0].mxu0
      %v1140 = vadd.f32 0.0, %v1139
      %v1141 = vpop.f32.mrb[0].mxu0
      %v1142 = vpop.f32.mrb[0].mxu0
      %v1143 = vadd.f32 0.0, %v1142
      %v1144 = vpop.f32.mrb[0].mxu0
      %1145 = vmatprep.mubr.bf16.mxu0 0
      %1146 = vmatmul.mubr.bf16.gmra.mrb[0].mxu0 %v1025
      %v1147 = vpop.f32.mrb[0].mxu0
      %v1148 = vadd.f32 0.0, %v1147
      %v1149 = vpop.f32.mrb[0].mxu0
      %v1150 = vpop.f32.mrb[0].mxu0
      %v1151 = vadd.f32 0.0, %v1150
      %v1152 = vpop.f32.mrb[0].mxu0
      %1153 = vmatprep.mubr.bf16.mxu0 0
      %1154 = vmatmul.mubr.bf16.gmra.mrb[0].mxu0 %v1026
      %v1155 = vpop.f32.mrb[0].mxu0
      %v1156 = vadd.f32 0.0, %v1155
      %v1157 = vpop.f32.mrb[0].mxu0
      %v1158 = vpop.f32.mrb[0].mxu0
      %v1159 = vadd.f32 0.0, %v1158
      %v1160 = vpop.f32.mrb[0].mxu0
      %1161 = vmatprep.mubr.bf16.mxu0 0
      %1162 = vmatmul.mubr.bf16.gmra.mrb[0].mxu0 %v1027
      %v1163 = vpop.f32.mrb[0].mxu0
      %v1164 = vadd.f32 0.0, %v1163
      %v1165 = vpop.f32.mrb[0].mxu0
      %v1166 = vpop.f32.mrb[0].mxu0
      %v1167 = vadd.f32 0.0, %v1166
      %v1168 = vpop.f32.mrb[0].mxu0
      %1169 = vmatprep.mubr.bf16.mxu0 0
      %1170 = vmatmul.mubr.bf16.gmra.mrb[0].mxu0 %v1028
      %v1171 = vpop.f32.mrb[0].mxu0
      %v1172 = vadd.f32 0.0, %v1171
      %v1173 = vpop.f32.mrb[0].mxu0
      %v1174 = vpop.f32.mrb[0].mxu0
      %v1175 = vadd.f32 0.0, %v1174
      %v1176 = vpop.f32.mrb[0].mxu0
      %1177 = vmatprep.mubr.bf16.mxu0 0
      %1178 = vmatmul.mubr.bf16.gmra.mrb[0].mxu0 %v1029
      %v1179 = vpop.f32.mrb[0].mxu0
      %v1180 = vadd.f32 0.0, %v1179
      %v1181 = vpop.f32.mrb[0].mxu0
      %v1182 = vpop.f32.mrb[0].mxu0
      %v1183 = vadd.f32 0.0, %v1182
      %v1184 = vpop.f32.mrb[0].mxu0
      %1185 = vmatprep.mubr.bf16.mxu0 0
      %1186 = vmatmul.mubr.bf16.gmra.mrb[0].mxu0 %v1030
      %v1187 = vpop.f32.mrb[0].mxu0
      %v1188 = vadd.f32 0.0, %v1187
      %v1189 = vpop.f32.mrb[0].mxu0
      %v1190 = vpop.f32.mrb[0].mxu0
      %v1191 = vadd.f32 0.0, %v1190
      %v1192 = vpop.f32.mrb[0].mxu0
      %1193 = vmatprep.mubr.bf16.mxu0 0
      %1194 = vmatmul.mubr.bf16.gmra.mrb[0].mxu0 %v1031
      %v1195 = vpop.f32.mrb[0].mxu0
      %v1196 = vadd.f32 0.0, %v1195
      %v1197 = vpop.f32.mrb[0].mxu0
      %v1198 = vpop.f32.mrb[0].mxu0
      %v1199 = vadd.f32 0.0, %v1198
      %v1200 = vpop.f32.mrb[0].mxu0
      %1201 = vmatprep.mubr.bf16.mxu0 0
      %1202 = vmatmul.mubr.bf16.gmra.mrb[0].mxu0 %v1032
      %v1203 = vpop.f32.mrb[0].mxu0
      %v1204 = vadd.f32 0.0, %v1203
      %v1205 = vpop.f32.mrb[0].mxu0
      %v1206 = vpop.f32.mrb[0].mxu0
      %v1207 = vadd.f32 0.0, %v1206
      %v1208 = vpop.f32.mrb[0].mxu0
      %1209 = vmatprep.mubr.bf16.mxu0 0
      %1210 = vmatmul.mubr.bf16.gmra.mrb[0].mxu0 %v1033
      %v1211 = vpop.f32.mrb[0].mxu0
      %v1212 = vadd.f32 0.0, %v1211
      %v1213 = vpop.f32.mrb[0].mxu0
      %v1214 = vpop.f32.mrb[0].mxu0
      %v1215 = vadd.f32 0.0, %v1214
      %v1216 = vpop.f32.mrb[0].mxu0
      %1217 = vmatprep.mubr.bf16.mxu0 0
      %1218 = vmatmul.mubr.bf16.gmra.mrb[0].mxu0 %v1034
      %v1219 = vpop.f32.mrb[0].mxu0
      %v1220 = vadd.f32 0.0, %v1219
      %v1221 = vpop.f32.mrb[0].mxu0
      %v1222 = vpop.f32.mrb[0].mxu0
      %v1223 = vadd.f32 0.0, %v1222
      %v1224 = vpop.f32.mrb[0].mxu0
      %1225 = vmatprep.mubr.bf16.mxu0 0
      %1226 = vmatmul.mubr.bf16.gmra.mrb[0].mxu0 %v1035
      %v1227 = vpop.f32.mrb[0].mxu0
      %v1228 = vadd.f32 0.0, %v1227
      %v1229 = vpop.f32.mrb[0].mxu0
      %v1230 = vpop.f32.mrb[0].mxu0
      %v1231 = vadd.f32 0.0, %v1230
      %v1232 = vpop.f32.mrb[0].mxu0
      %1233 = vmatprep.mubr.bf16.mxu0 0
      %1234 = vmatmul.mubr.bf16.gmra.mrb[0].mxu0 %v1036
      %v1235 = vpop.f32.mrb[0].mxu0
      %v1236 = vadd.f32 0.0, %v1235
      %v1237 = vpop.f32.mrb[0].mxu0
      %v1238 = vpop.f32.mrb[0].mxu0
      %v1239 = vadd.f32 0.0, %v1238
      %v1240 = vpop.f32.mrb[0].mxu0
      %1241 = vmatprep.mubr.bf16.mxu0 0
      %1242 = vmatmul.mubr.bf16.gmra.mrb[0].mxu0 %v1037
      %v1243 = vpop.f32.mrb[0].mxu0
      %v1244 = vadd.f32 0.0, %v1243
      %v1245 = vpop.f32.mrb[0].mxu0
      %v1246 = vpop.f32.mrb[0].mxu0
      %v1247 = vadd.f32 0.0, %v1246
      %v1248 = vpop.f32.mrb[0].mxu0
      %1249 = vmatprep.mubr.bf16.mxu0 0
      %1250 = vmatmul.mubr.bf16.gmra.mrb[0].mxu0 %v1038
      %v1251 = vpop.f32.mrb[0].mxu0
      %v1252 = vadd.f32 0.0, %v1251
      %v1253 = vpop.f32.mrb[0].mxu0
      %v1254 = vpop.f32.mrb[0].mxu0
      %v1255 = vadd.f32 0.0, %v1254
      %v1256 = vpop.f32.mrb[0].mxu0
      %1257 = vmatprep.mubr.bf16.mxu0 0
      %1258 = vmatmul.mubr.bf16.gmra.mrb[0].mxu0 %v1039
      %v1259 = vpop.f32.mrb[0].mxu0
      %v1260 = vadd.f32 0.0, %v1259
      %v1261 = vpop.f32.mrb[0].mxu0
      %v1262 = vpop.f32.mrb[0].mxu0
      %v1263 = vadd.f32 0.0, %v1262
      %v1264 = vpop.f32.mrb[0].mxu0
      %1265 = vdwg.mxu0
      %v1282 = vunpack.c.l.b16 %v863
      %v1283 = vunpack.c.l.b16 %v864
      %v1284 = vunpack.c.l.b16 %v865
      %v1285 = vunpack.c.l.b16 %v866
      %v1286 = vunpack.c.l.b16 %v867
      %v1287 = vunpack.c.l.b16 %v868
      %v1288 = vunpack.c.l.b16 %v869
      %v1289 = vunpack.c.l.b16 %v870
      %v1290 = vunpack.c.l.b16 %v871
      %v1291 = vunpack.c.l.b16 %v872
      %v1292 = vunpack.c.l.b16 %v873
      %v1293 = vunpack.c.l.b16 %v874
      %v1294 = vunpack.c.l.b16 %v875
      %v1295 = vunpack.c.l.b16 %v876
      %v1296 = vunpack.c.l.b16 %v877
      %v1297 = vunpack.c.l.b16 %v878
      %v1298 = vpack.c.b16 %v1283, %v1282
      %v1299 = vpack.c.b16 %v1285, %v1284
      %v1300 = vpack.c.b16 %v1287, %v1286
      %v1301 = vpack.c.b16 %v1289, %v1288
      %v1302 = vpack.c.b16 %v1291, %v1290
      %v1303 = vpack.c.b16 %v1293, %v1292
      %v1304 = vpack.c.b16 %v1295, %v1294
      %v1305 = vpack.c.b16 %v1297, %v1296
      %1314 = vmatprep.subr.bf16.mxu0 0
      %1315 = vmatpush1.bf16.msra.mxu0 %v1298
      %1316 = vmatprep.subr.bf16.mxu0 0
      %1317 = vmatpush1.bf16.msra.mxu0 %v1299
      %1318 = vmatprep.subr.bf16.mxu0 0
      %1319 = vmatpush1.bf16.msra.mxu0 %v1300
      %1320 = vmatprep.subr.bf16.mxu0 0
      %1321 = vmatpush1.bf16.msra.mxu0 %v1301
      %1322 = vmatprep.subr.bf16.mxu0 0
      %1323 = vmatpush1.bf16.msra.mxu0 %v1302
      %1324 = vmatprep.subr.bf16.mxu0 0
      %1325 = vmatpush1.bf16.msra.mxu0 %v1303
      %1326 = vmatprep.subr.bf16.mxu0 0
      %1327 = vmatpush1.bf16.msra.mxu0 %v1304
      %1328 = vmatprep.subr.bf16.mxu0 0
      %1329 = vmatpush1.bf16.msra.mxu0 %v1305
      %1330 = vmatprep.subr.bf16.mxu0 0
      %1331 = vmatpush1.bf16.msra.mxu0 0
      %1332 = vmatprep.subr.bf16.mxu0 0
      %1333 = vmatpush1.bf16.msra.mxu0 0
      %1334 = vmatprep.subr.bf16.mxu0 0
      %1335 = vmatpush1.bf16.msra.mxu0 0
      %1336 = vmatprep.subr.bf16.mxu0 0
      %1337 = vmatpush1.bf16.msra.mxu0 0
      %1338 = vmatprep.subr.bf16.mxu0 0
      %1339 = vmatpush1.bf16.msra.mxu0 0
      %1340 = vmatprep.subr.bf16.mxu0 0
      %1341 = vmatpush1.bf16.msra.mxu0 0
      %1342 = vmatprep.subr.bf16.mxu0 0
      %1343 = vmatpush1.bf16.msra.mxu0 0
      %1344 = vmatprep.subr.bf16.mxu0 0
      %1345 = vmatpush1.bf16.msra.mxu0 0
      %1346 = vmatprep.mubr.bf16.mxu0 0
      %1347 = vmatmul.mubr.bf16.gmra.mrb[0].mxu0 %v847
      %v1348 = vpop.f32.mrb[0].mxu0
      %v1349 = vadd.f32 %v1140, %v1348
      %v1350 = vpop.f32.mrb[0].mxu0
      %v1351 = vpop.f32.mrb[0].mxu0
      %v1352 = vadd.f32 %v1143, %v1351
      %v1353 = vpop.f32.mrb[0].mxu0
      %1354 = vmatprep.mubr.bf16.mxu0 0
      %1355 = vmatmul.mubr.bf16.gmra.mrb[0].mxu0 %v848
      %v1356 = vpop.f32.mrb[0].mxu0
      %v1357 = vadd.f32 %v1148, %v1356
      %v1358 = vpop.f32.mrb[0].mxu0
      %v1359 = vpop.f32.mrb[0].mxu0
      %v1360 = vadd.f32 %v1151, %v1359
      %v1361 = vpop.f32.mrb[0].mxu0
      %1362 = vmatprep.mubr.bf16.mxu0 0
      %1363 = vmatmul.mubr.bf16.gmra.mrb[0].mxu0 %v849
      %v1364 = vpop.f32.mrb[0].mxu0
      %v1365 = vadd.f32 %v1156, %v1364
      %v1366 = vpop.f32.mrb[0].mxu0
      %v1367 = vpop.f32.mrb[0].mxu0
      %v1368 = vadd.f32 %v1159, %v1367
      %v1369 = vpop.f32.mrb[0].mxu0
      %1370 = vmatprep.mubr.bf16.mxu0 0
      %1371 = vmatmul.mubr.bf16.gmra.mrb[0].mxu0 %v850
      %v1372 = vpop.f32.mrb[0].mxu0
      %v1373 = vadd.f32 %v1164, %v1372
      %v1374 = vpop.f32.mrb[0].mxu0
      %v1375 = vpop.f32.mrb[0].mxu0
      %v1376 = vadd.f32 %v1167, %v1375
      %v1377 = vpop.f32.mrb[0].mxu0
      %1378 = vmatprep.mubr.bf16.mxu0 0
      %1379 = vmatmul.mubr.bf16.gmra.mrb[0].mxu0 %v851
      %v1380 = vpop.f32.mrb[0].mxu0
      %v1381 = vadd.f32 %v1172, %v1380
      %v1382 = vpop.f32.mrb[0].mxu0
      %v1383 = vpop.f32.mrb[0].mxu0
      %v1384 = vadd.f32 %v1175, %v1383
      %v1385 = vpop.f32.mrb[0].mxu0
      %1386 = vmatprep.mubr.bf16.mxu0 0
      %1387 = vmatmul.mubr.bf16.gmra.mrb[0].mxu0 %v852
      %v1388 = vpop.f32.mrb[0].mxu0
      %v1389 = vadd.f32 %v1180, %v1388
      %v1390 = vpop.f32.mrb[0].mxu0
      %v1391 = vpop.f32.mrb[0].mxu0
      %v1392 = vadd.f32 %v1183, %v1391
      %v1393 = vpop.f32.mrb[0].mxu0
      %1394 = vmatprep.mubr.bf16.mxu0 0
      %1395 = vmatmul.mubr.bf16.gmra.mrb[0].mxu0 %v853
      %v1396 = vpop.f32.mrb[0].mxu0
      %v1397 = vadd.f32 %v1188, %v1396
      %v1398 = vpop.f32.mrb[0].mxu0
      %v1399 = vpop.f32.mrb[0].mxu0
      %v1400 = vadd.f32 %v1191, %v1399
      %v1401 = vpop.f32.mrb[0].mxu0
      %1402 = vmatprep.mubr.bf16.mxu0 0
      %1403 = vmatmul.mubr.bf16.gmra.mrb[0].mxu0 %v854
      %v1404 = vpop.f32.mrb[0].mxu0
      %v1405 = vadd.f32 %v1196, %v1404
      %v1406 = vpop.f32.mrb[0].mxu0
      %v1407 = vpop.f32.mrb[0].mxu0
      %v1408 = vadd.f32 %v1199, %v1407
      %v1409 = vpop.f32.mrb[0].mxu0
      %1410 = vmatprep.mubr.bf16.mxu0 0
      %1411 = vmatmul.mubr.bf16.gmra.mrb[0].mxu0 %v855
      %v1412 = vpop.f32.mrb[0].mxu0
      %v1413 = vadd.f32 %v1204, %v1412
      %v1414 = vpop.f32.mrb[0].mxu0
      %v1415 = vpop.f32.mrb[0].mxu0
      %v1416 = vadd.f32 %v1207, %v1415
      %v1417 = vpop.f32.mrb[0].mxu0
      %1418 = vmatprep.mubr.bf16.mxu0 0
      %1419 = vmatmul.mubr.bf16.gmra.mrb[0].mxu0 %v856
      %v1420 = vpop.f32.mrb[0].mxu0
      %v1421 = vadd.f32 %v1212, %v1420
      %v1422 = vpop.f32.mrb[0].mxu0
      %v1423 = vpop.f32.mrb[0].mxu0
      %v1424 = vadd.f32 %v1215, %v1423
      %v1425 = vpop.f32.mrb[0].mxu0
      %1426 = vmatprep.mubr.bf16.mxu0 0
      %1427 = vmatmul.mubr.bf16.gmra.mrb[0].mxu0 %v857
      %v1428 = vpop.f32.mrb[0].mxu0
      %v1429 = vadd.f32 %v1220, %v1428
      %v1430 = vpop.f32.mrb[0].mxu0
      %v1431 = vpop.f32.mrb[0].mxu0
      %v1432 = vadd.f32 %v1223, %v1431
      %v1433 = vpop.f32.mrb[0].mxu0
      %1434 = vmatprep.mubr.bf16.mxu0 0
      %1435 = vmatmul.mubr.bf16.gmra.mrb[0].mxu0 %v858
      %v1436 = vpop.f32.mrb[0].mxu0
      %v1437 = vadd.f32 %v1228, %v1436
      %v1438 = vpop.f32.mrb[0].mxu0
      %v1439 = vpop.f32.mrb[0].mxu0
      %v1440 = vadd.f32 %v1231, %v1439
      %v1441 = vpop.f32.mrb[0].mxu0
      %1442 = vmatprep.mubr.bf16.mxu0 0
      %1443 = vmatmul.mubr.bf16.gmra.mrb[0].mxu0 %v859
      %v1444 = vpop.f32.mrb[0].mxu0
      %v1445 = vadd.f32 %v1236, %v1444
      %v1446 = vpop.f32.mrb[0].mxu0
      %v1447 = vpop.f32.mrb[0].mxu0
      %v1448 = vadd.f32 %v1239, %v1447
      %v1449 = vpop.f32.mrb[0].mxu0
      %1450 = vmatprep.mubr.bf16.mxu0 0
      %1451 = vmatmul.mubr.bf16.gmra.mrb[0].mxu0 %v860
      %v1452 = vpop.f32.mrb[0].mxu0
      %v1453 = vadd.f32 %v1244, %v1452
      %v1454 = vpop.f32.mrb[0].mxu0
      %v1455 = vpop.f32.mrb[0].mxu0
      %v1456 = vadd.f32 %v1247, %v1455
      %v1457 = vpop.f32.mrb[0].mxu0
      %1458 = vmatprep.mubr.bf16.mxu0 0
      %1459 = vmatmul.mubr.bf16.gmra.mrb[0].mxu0 %v861
      %v1460 = vpop.f32.mrb[0].mxu0
      %v1461 = vadd.f32 %v1252, %v1460
      %v1462 = vpop.f32.mrb[0].mxu0
      %v1463 = vpop.f32.mrb[0].mxu0
      %v1464 = vadd.f32 %v1255, %v1463
      %v1465 = vpop.f32.mrb[0].mxu0
      %1466 = vmatprep.mubr.bf16.mxu0 0
      %1467 = vmatmul.mubr.bf16.gmra.mrb[0].mxu0 %v862
      %v1468 = vpop.f32.mrb[0].mxu0
      %v1469 = vadd.f32 %v1260, %v1468
      %v1470 = vpop.f32.mrb[0].mxu0
      %v1471 = vpop.f32.mrb[0].mxu0
      %v1472 = vadd.f32 %v1263, %v1471
      %v1473 = vpop.f32.mrb[0].mxu0
      %1474 = vdwg.mxu0
      %vm1475 = vcmask 1045504
      %v1476 = vrot.slane %v811, 2
      %v1477 = vrot.slane %v705, 2
      %v1478 = vsel %vm1475, %v1476, %v1477
      %v1479 = vrot.slane %v829, 2
      %v1480 = vsel %vm1475, %v1477, %v1479
      %v1481 = vrot.slane %v812, 2
      %v1482 = vrot.slane %v708, 2
      %v1483 = vsel %vm1475, %v1481, %v1482
      %v1484 = vrot.slane %v830, 2
      %v1485 = vsel %vm1475, %v1482, %v1484
      %v1486 = vrot.slane %v813, 2
      %v1487 = vrot.slane %v711, 2
      %v1488 = vsel %vm1475, %v1486, %v1487
      %v1489 = vrot.slane %v831, 2
      %v1490 = vsel %vm1475, %v1487, %v1489
      %v1491 = vrot.slane %v814, 2
      %v1492 = vrot.slane %v714, 2
      %v1493 = vsel %vm1475, %v1491, %v1492
      %v1494 = vrot.slane %v832, 2
      %v1495 = vsel %vm1475, %v1492, %v1494
      %v1496 = vrot.slane %v815, 2
      %v1497 = vrot.slane %v717, 2
      %v1498 = vsel %vm1475, %v1496, %v1497
      %v1499 = vrot.slane %v833, 2
      %v1500 = vsel %vm1475, %v1497, %v1499
      %v1501 = vrot.slane %v816, 2
      %v1502 = vrot.slane %v720, 2
      %v1503 = vsel %vm1475, %v1501, %v1502
      %v1504 = vrot.slane %v834, 2
      %v1505 = vsel %vm1475, %v1502, %v1504
      %v1506 = vrot.slane %v817, 2
      %v1507 = vrot.slane %v723, 2
      %v1508 = vsel %vm1475, %v1506, %v1507
      %v1509 = vrot.slane %v835, 2
      %v1510 = vsel %vm1475, %v1507, %v1509
      %v1511 = vrot.slane %v818, 2
      %v1512 = vrot.slane %v726, 2
      %v1513 = vsel %vm1475, %v1511, %v1512
      %v1514 = vrot.slane %v836, 2
      %v1515 = vsel %vm1475, %v1512, %v1514
      %v1516 = vrot.slane %v819, 2
      %v1517 = vrot.slane %v729, 2
      %v1518 = vsel %vm1475, %v1516, %v1517
      %v1519 = vrot.slane %v837, 2
      %v1520 = vsel %vm1475, %v1517, %v1519
      %v1521 = vrot.slane %v820, 2
      %v1522 = vrot.slane %v732, 2
      %v1523 = vsel %vm1475, %v1521, %v1522
      %v1524 = vrot.slane %v838, 2
      %v1525 = vsel %vm1475, %v1522, %v1524
      %v1526 = vrot.slane %v821, 2
      %v1527 = vrot.slane %v735, 2
      %v1528 = vsel %vm1475, %v1526, %v1527
      %v1529 = vrot.slane %v839, 2
      %v1530 = vsel %vm1475, %v1527, %v1529
      %v1531 = vrot.slane %v822, 2
      %v1532 = vrot.slane %v738, 2
      %v1533 = vsel %vm1475, %v1531, %v1532
      %v1534 = vrot.slane %v840, 2
      %v1535 = vsel %vm1475, %v1532, %v1534
      %v1536 = vrot.slane %v823, 2
      %v1537 = vrot.slane %v741, 2
      %v1538 = vsel %vm1475, %v1536, %v1537
      %v1539 = vrot.slane %v841, 2
      %v1540 = vsel %vm1475, %v1537, %v1539
      %v1541 = vrot.slane %v824, 2
      %v1542 = vrot.slane %v744, 2
      %v1543 = vsel %vm1475, %v1541, %v1542
      %v1544 = vrot.slane %v842, 2
      %v1545 = vsel %vm1475, %v1542, %v1544
      %v1546 = vrot.slane %v825, 2
      %v1547 = vrot.slane %v747, 2
      %v1548 = vsel %vm1475, %v1546, %v1547
      %v1549 = vrot.slane %v843, 2
      %v1550 = vsel %vm1475, %v1547, %v1549
      %v1551 = vrot.slane %v826, 2
      %v1552 = vrot.slane %v750, 2
      %v1553 = vsel %vm1475, %v1551, %v1552
      %v1554 = vrot.slane %v844, 2
      %v1555 = vsel %vm1475, %v1552, %v1554
      %v1588 = vpack.c.bf16 %v1480, %v1478
      %v1589 = vpack.c.bf16 %v1485, %v1483
      %v1590 = vpack.c.bf16 %v1490, %v1488
      %v1591 = vpack.c.bf16 %v1495, %v1493
      %v1592 = vpack.c.bf16 %v1500, %v1498
      %v1593 = vpack.c.bf16 %v1505, %v1503
      %v1594 = vpack.c.bf16 %v1510, %v1508
      %v1595 = vpack.c.bf16 %v1515, %v1513
      %v1596 = vpack.c.bf16 %v1520, %v1518
      %v1597 = vpack.c.bf16 %v1525, %v1523
      %v1598 = vpack.c.bf16 %v1530, %v1528
      %v1599 = vpack.c.bf16 %v1535, %v1533
      %v1600 = vpack.c.bf16 %v1540, %v1538
      %v1601 = vpack.c.bf16 %v1545, %v1543
      %v1602 = vpack.c.bf16 %v1550, %v1548
      %v1603 = vpack.c.bf16 %v1555, %v1553
      %s1604 = scalar_lea.vmem %s3, 128
      %v1605 = vld [vmem:[%s1604] sm:$0xf]
      %v1606 = vld [vmem:[%s1604 + $0x4] sm:$0xf]
      %v1607 = vld [vmem:[%s1604 + $0x8] sm:$0xf]
      %v1608 = vld [vmem:[%s1604 + $0xc] sm:$0xf]
      %v1609 = vld [vmem:[%s1604 + $0x10] sm:$0xf]
      %v1610 = vld [vmem:[%s1604 + $0x14] sm:$0xf]
      %v1611 = vld [vmem:[%s1604 + $0x18] sm:$0xf]
      %v1612 = vld [vmem:[%s1604 + $0x1c] sm:$0xf]
      %v1613 = vld [vmem:[%s1604 + $0x20] sm:$0xf]
      %v1614 = vld [vmem:[%s1604 + $0x24] sm:$0xf]
      %v1615 = vld [vmem:[%s1604 + $0x28] sm:$0xf]
      %v1616 = vld [vmem:[%s1604 + $0x2c] sm:$0xf]
      %v1617 = vld [vmem:[%s1604 + $0x30] sm:$0xf]
      %v1618 = vld [vmem:[%s1604 + $0x34] sm:$0xf]
      %v1619 = vld [vmem:[%s1604 + $0x38] sm:$0xf]
      %v1620 = vld [vmem:[%s1604 + $0x3c] sm:$0xf]
      %v1637 = vunpack.c.l.b16 %v1605
      %v1638 = vunpack.c.l.b16 %v1606
      %v1639 = vunpack.c.l.b16 %v1607
      %v1640 = vunpack.c.l.b16 %v1608
      %v1641 = vunpack.c.l.b16 %v1609
      %v1642 = vunpack.c.l.b16 %v1610
      %v1643 = vunpack.c.l.b16 %v1611
      %v1644 = vunpack.c.l.b16 %v1612
      %v1645 = vunpack.c.l.b16 %v1613
      %v1646 = vunpack.c.l.b16 %v1614
      %v1647 = vunpack.c.l.b16 %v1615
      %v1648 = vunpack.c.l.b16 %v1616
      %v1649 = vunpack.c.l.b16 %v1617
      %v1650 = vunpack.c.l.b16 %v1618
      %v1651 = vunpack.c.l.b16 %v1619
      %v1652 = vunpack.c.l.b16 %v1620
      %v1653 = vpack.c.b16 %v1638, %v1637
      %v1654 = vpack.c.b16 %v1640, %v1639
      %v1655 = vpack.c.b16 %v1642, %v1641
      %v1656 = vpack.c.b16 %v1644, %v1643
      %v1657 = vpack.c.b16 %v1646, %v1645
      %v1658 = vpack.c.b16 %v1648, %v1647
      %v1659 = vpack.c.b16 %v1650, %v1649
      %v1660 = vpack.c.b16 %v1652, %v1651
      %1669 = vmatprep.subr.bf16.mxu0 0
      %1670 = vmatpush1.bf16.msra.mxu0 %v1653
      %1671 = vmatprep.subr.bf16.mxu0 0
      %1672 = vmatpush1.bf16.msra.mxu0 %v1654
      %1673 = vmatprep.subr.bf16.mxu0 0
      %1674 = vmatpush1.bf16.msra.mxu0 %v1655
      %1675 = vmatprep.subr.bf16.mxu0 0
      %1676 = vmatpush1.bf16.msra.mxu0 %v1656
      %1677 = vmatprep.subr.bf16.mxu0 0
      %1678 = vmatpush1.bf16.msra.mxu0 %v1657
      %1679 = vmatprep.subr.bf16.mxu0 0
      %1680 = vmatpush1.bf16.msra.mxu0 %v1658
      %1681 = vmatprep.subr.bf16.mxu0 0
      %1682 = vmatpush1.bf16.msra.mxu0 %v1659
      %1683 = vmatprep.subr.bf16.mxu0 0
      %1684 = vmatpush1.bf16.msra.mxu0 %v1660
      %1685 = vmatprep.subr.bf16.mxu0 0
      %1686 = vmatpush1.bf16.msra.mxu0 0
      %1687 = vmatprep.subr.bf16.mxu0 0
      %1688 = vmatpush1.bf16.msra.mxu0 0
      %1689 = vmatprep.subr.bf16.mxu0 0
      %1690 = vmatpush1.bf16.msra.mxu0 0
      %1691 = vmatprep.subr.bf16.mxu0 0
      %1692 = vmatpush1.bf16.msra.mxu0 0
      %1693 = vmatprep.subr.bf16.mxu0 0
      %1694 = vmatpush1.bf16.msra.mxu0 0
      %1695 = vmatprep.subr.bf16.mxu0 0
      %1696 = vmatpush1.bf16.msra.mxu0 0
      %1697 = vmatprep.subr.bf16.mxu0 0
      %1698 = vmatpush1.bf16.msra.mxu0 0
      %1699 = vmatprep.subr.bf16.mxu0 0
      %1700 = vmatpush1.bf16.msra.mxu0 0
      %1701 = vmatprep.mubr.bf16.mxu0 0
      %1702 = vmatmul.mubr.bf16.gmra.mrb[0].mxu0 %v1588
      %v1703 = vpop.f32.mrb[0].mxu0
      %v1704 = vadd.f32 0.0, %v1703
      %v1705 = vpop.f32.mrb[0].mxu0
      %v1706 = vpop.f32.mrb[0].mxu0
      %v1707 = vadd.f32 0.0, %v1706
      %v1708 = vpop.f32.mrb[0].mxu0
      %1709 = vmatprep.mubr.bf16.mxu0 0
      %1710 = vmatmul.mubr.bf16.gmra.mrb[0].mxu0 %v1589
      %v1711 = vpop.f32.mrb[0].mxu0
      %v1712 = vadd.f32 0.0, %v1711
      %v1713 = vpop.f32.mrb[0].mxu0
      %v1714 = vpop.f32.mrb[0].mxu0
      %v1715 = vadd.f32 0.0, %v1714
      %v1716 = vpop.f32.mrb[0].mxu0
      %1717 = vmatprep.mubr.bf16.mxu0 0
      %1718 = vmatmul.mubr.bf16.gmra.mrb[0].mxu0 %v1590
      %v1719 = vpop.f32.mrb[0].mxu0
      %v1720 = vadd.f32 0.0, %v1719
      %v1721 = vpop.f32.mrb[0].mxu0
      %v1722 = vpop.f32.mrb[0].mxu0
      %v1723 = vadd.f32 0.0, %v1722
      %v1724 = vpop.f32.mrb[0].mxu0
      %1725 = vmatprep.mubr.bf16.mxu0 0
      %1726 = vmatmul.mubr.bf16.gmra.mrb[0].mxu0 %v1591
      %v1727 = vpop.f32.mrb[0].mxu0
      %v1728 = vadd.f32 0.0, %v1727
      %v1729 = vpop.f32.mrb[0].mxu0
      %v1730 = vpop.f32.mrb[0].mxu0
      %v1731 = vadd.f32 0.0, %v1730
      %v1732 = vpop.f32.mrb[0].mxu0
      %1733 = vmatprep.mubr.bf16.mxu0 0
      %1734 = vmatmul.mubr.bf16.gmra.mrb[0].mxu0 %v1592
      %v1735 = vpop.f32.mrb[0].mxu0
      %v1736 = vadd.f32 0.0, %v1735
      %v1737 = vpop.f32.mrb[0].mxu0
      %v1738 = vpop.f32.mrb[0].mxu0
      %v1739 = vadd.f32 0.0, %v1738
      %v1740 = vpop.f32.mrb[0].mxu0
      %1741 = vmatprep.mubr.bf16.mxu0 0
      %1742 = vmatmul.mubr.bf16.gmra.mrb[0].mxu0 %v1593
      %v1743 = vpop.f32.mrb[0].mxu0
      %v1744 = vadd.f32 0.0, %v1743
      %v1745 = vpop.f32.mrb[0].mxu0
      %v1746 = vpop.f32.mrb[0].mxu0
      %v1747 = vadd.f32 0.0, %v1746
      %v1748 = vpop.f32.mrb[0].mxu0
      %1749 = vmatprep.mubr.bf16.mxu0 0
      %1750 = vmatmul.mubr.bf16.gmra.mrb[0].mxu0 %v1594
      %v1751 = vpop.f32.mrb[0].mxu0
      %v1752 = vadd.f32 0.0, %v1751
      %v1753 = vpop.f32.mrb[0].mxu0
      %v1754 = vpop.f32.mrb[0].mxu0
      %v1755 = vadd.f32 0.0, %v1754
      %v1756 = vpop.f32.mrb[0].mxu0
      %1757 = vmatprep.mubr.bf16.mxu0 0
      %1758 = vmatmul.mubr.bf16.gmra.mrb[0].mxu0 %v1595
      %v1759 = vpop.f32.mrb[0].mxu0
      %v1760 = vadd.f32 0.0, %v1759
      %v1761 = vpop.f32.mrb[0].mxu0
      %v1762 = vpop.f32.mrb[0].mxu0
      %v1763 = vadd.f32 0.0, %v1762
      %v1764 = vpop.f32.mrb[0].mxu0
      %1765 = vmatprep.mubr.bf16.mxu0 0
      %1766 = vmatmul.mubr.bf16.gmra.mrb[0].mxu0 %v1596
      %v1767 = vpop.f32.mrb[0].mxu0
      %v1768 = vadd.f32 0.0, %v1767
      %v1769 = vpop.f32.mrb[0].mxu0
      %v1770 = vpop.f32.mrb[0].mxu0
      %v1771 = vadd.f32 0.0, %v1770
      %v1772 = vpop.f32.mrb[0].mxu0
      %1773 = vmatprep.mubr.bf16.mxu0 0
      %1774 = vmatmul.mubr.bf16.gmra.mrb[0].mxu0 %v1597
      %v1775 = vpop.f32.mrb[0].mxu0
      %v1776 = vadd.f32 0.0, %v1775
      %v1777 = vpop.f32.mrb[0].mxu0
      %v1778 = vpop.f32.mrb[0].mxu0
      %v1779 = vadd.f32 0.0, %v1778
      %v1780 = vpop.f32.mrb[0].mxu0
      %1781 = vmatprep.mubr.bf16.mxu0 0
      %1782 = vmatmul.mubr.bf16.gmra.mrb[0].mxu0 %v1598
      %v1783 = vpop.f32.mrb[0].mxu0
      %v1784 = vadd.f32 0.0, %v1783
      %v1785 = vpop.f32.mrb[0].mxu0
      %v1786 = vpop.f32.mrb[0].mxu0
      %v1787 = vadd.f32 0.0, %v1786
      %v1788 = vpop.f32.mrb[0].mxu0
      %1789 = vmatprep.mubr.bf16.mxu0 0
      %1790 = vmatmul.mubr.bf16.gmra.mrb[0].mxu0 %v1599
      %v1791 = vpop.f32.mrb[0].mxu0
      %v1792 = vadd.f32 0.0, %v1791
      %v1793 = vpop.f32.mrb[0].mxu0
      %v1794 = vpop.f32.mrb[0].mxu0
      %v1795 = vadd.f32 0.0, %v1794
      %v1796 = vpop.f32.mrb[0].mxu0
      %1797 = vmatprep.mubr.bf16.mxu0 0
      %1798 = vmatmul.mubr.bf16.gmra.mrb[0].mxu0 %v1600
      %v1799 = vpop.f32.mrb[0].mxu0
      %v1800 = vadd.f32 0.0, %v1799
      %v1801 = vpop.f32.mrb[0].mxu0
      %v1802 = vpop.f32.mrb[0].mxu0
      %v1803 = vadd.f32 0.0, %v1802
      %v1804 = vpop.f32.mrb[0].mxu0
      %1805 = vmatprep.mubr.bf16.mxu0 0
      %1806 = vmatmul.mubr.bf16.gmra.mrb[0].mxu0 %v1601
      %v1807 = vpop.f32.mrb[0].mxu0
      %v1808 = vadd.f32 0.0, %v1807
      %v1809 = vpop.f32.mrb[0].mxu0
      %v1810 = vpop.f32.mrb[0].mxu0
      %v1811 = vadd.f32 0.0, %v1810
      %v1812 = vpop.f32.mrb[0].mxu0
      %1813 = vmatprep.mubr.bf16.mxu0 0
      %1814 = vmatmul.mubr.bf16.gmra.mrb[0].mxu0 %v1602
      %v1815 = vpop.f32.mrb[0].mxu0
      %v1816 = vadd.f32 0.0, %v1815
      %v1817 = vpop.f32.mrb[0].mxu0
      %v1818 = vpop.f32.mrb[0].mxu0
      %v1819 = vadd.f32 0.0, %v1818
      %v1820 = vpop.f32.mrb[0].mxu0
      %1821 = vmatprep.mubr.bf16.mxu0 0
      %1822 = vmatmul.mubr.bf16.gmra.mrb[0].mxu0 %v1603
      %v1823 = vpop.f32.mrb[0].mxu0
      %v1824 = vadd.f32 0.0, %v1823
      %v1825 = vpop.f32.mrb[0].mxu0
      %v1826 = vpop.f32.mrb[0].mxu0
      %v1827 = vadd.f32 0.0, %v1826
      %v1828 = vpop.f32.mrb[0].mxu0
      %1829 = vdwg.mxu0
      %v1830 = vadd.f32 %v1349, %v1704
      %v1831 = vadd.f32 %v1352, %v1707
      %v1832 = vadd.f32 %v1357, %v1712
      %v1833 = vadd.f32 %v1360, %v1715
      %v1834 = vadd.f32 %v1365, %v1720
      %v1835 = vadd.f32 %v1368, %v1723
      %v1836 = vadd.f32 %v1373, %v1728
      %v1837 = vadd.f32 %v1376, %v1731
      %v1838 = vadd.f32 %v1381, %v1736
      %v1839 = vadd.f32 %v1384, %v1739
      %v1840 = vadd.f32 %v1389, %v1744
      %v1841 = vadd.f32 %v1392, %v1747
      %v1842 = vadd.f32 %v1397, %v1752
      %v1843 = vadd.f32 %v1400, %v1755
      %v1844 = vadd.f32 %v1405, %v1760
      %v1845 = vadd.f32 %v1408, %v1763
      %v1846 = vadd.f32 %v1413, %v1768
      %v1847 = vadd.f32 %v1416, %v1771
      %v1848 = vadd.f32 %v1421, %v1776
      %v1849 = vadd.f32 %v1424, %v1779
      %v1850 = vadd.f32 %v1429, %v1784
      %v1851 = vadd.f32 %v1432, %v1787
      %v1852 = vadd.f32 %v1437, %v1792
      %v1853 = vadd.f32 %v1440, %v1795
      %v1854 = vadd.f32 %v1445, %v1800
      %v1855 = vadd.f32 %v1448, %v1803
      %v1856 = vadd.f32 %v1453, %v1808
      %v1857 = vadd.f32 %v1456, %v1811
      %v1858 = vadd.f32 %v1461, %v1816
      %v1859 = vadd.f32 %v1464, %v1819
      %v1860 = vadd.f32 %v1469, %v1824
      %v1861 = vadd.f32 %v1472, %v1827
      %v1862 = vpack.c.bf16 %v753, %v827
      %s1863 = scalar_lea.vmem %s3, 192
      %v1864 = vld [vmem:[%s1863] sm:$0xf]
      %v1865 = vld [vmem:[%s1863 + $0x4] sm:$0xf]
      %v1866 = vld [vmem:[%s1863 + $0x8] sm:$0xf]
      %v1867 = vld [vmem:[%s1863 + $0xc] sm:$0xf]
      %v1868 = vld [vmem:[%s1863 + $0x10] sm:$0xf]
      %v1869 = vld [vmem:[%s1863 + $0x14] sm:$0xf]
      %v1870 = vld [vmem:[%s1863 + $0x18] sm:$0xf]
      %v1871 = vld [vmem:[%s1863 + $0x1c] sm:$0xf]
      %v1872 = vld [vmem:[%s1863 + $0x20] sm:$0xf]
      %v1873 = vld [vmem:[%s1863 + $0x24] sm:$0xf]
      %v1874 = vld [vmem:[%s1863 + $0x28] sm:$0xf]
      %v1875 = vld [vmem:[%s1863 + $0x2c] sm:$0xf]
      %v1876 = vld [vmem:[%s1863 + $0x30] sm:$0xf]
      %v1877 = vld [vmem:[%s1863 + $0x34] sm:$0xf]
      %v1878 = vld [vmem:[%s1863 + $0x38] sm:$0xf]
      %v1879 = vld [vmem:[%s1863 + $0x3c] sm:$0xf]
      %v1896 = vunpack.c.l.b16 %v1864
      %v1897 = vunpack.c.l.b16 %v1865
      %v1898 = vunpack.c.l.b16 %v1866
      %v1899 = vunpack.c.l.b16 %v1867
      %v1900 = vunpack.c.l.b16 %v1868
      %v1901 = vunpack.c.l.b16 %v1869
      %v1902 = vunpack.c.l.b16 %v1870
      %v1903 = vunpack.c.l.b16 %v1871
      %v1904 = vunpack.c.l.b16 %v1872
      %v1905 = vunpack.c.l.b16 %v1873
      %v1906 = vunpack.c.l.b16 %v1874
      %v1907 = vunpack.c.l.b16 %v1875
      %v1908 = vunpack.c.l.b16 %v1876
      %v1909 = vunpack.c.l.b16 %v1877
      %v1910 = vunpack.c.l.b16 %v1878
      %v1911 = vunpack.c.l.b16 %v1879
      %v1912 = vpack.c.b16 %v1897, %v1896
      %v1913 = vpack.c.b16 %v1899, %v1898
      %v1914 = vpack.c.b16 %v1901, %v1900
      %v1915 = vpack.c.b16 %v1903, %v1902
      %v1916 = vpack.c.b16 %v1905, %v1904
      %v1917 = vpack.c.b16 %v1907, %v1906
      %v1918 = vpack.c.b16 %v1909, %v1908
      %v1919 = vpack.c.b16 %v1911, %v1910
      %1928 = vmatprep.subr.bf16.mxu0 0
      %1929 = vmatpush1.bf16.msra.mxu0 %v1912
      %1930 = vmatprep.subr.bf16.mxu0 0
      %1931 = vmatpush1.bf16.msra.mxu0 %v1913
      %1932 = vmatprep.subr.bf16.mxu0 0
      %1933 = vmatpush1.bf16.msra.mxu0 %v1914
      %1934 = vmatprep.subr.bf16.mxu0 0
      %1935 = vmatpush1.bf16.msra.mxu0 %v1915
      %1936 = vmatprep.subr.bf16.mxu0 0
      %1937 = vmatpush1.bf16.msra.mxu0 %v1916
      %1938 = vmatprep.subr.bf16.mxu0 0
      %1939 = vmatpush1.bf16.msra.mxu0 %v1917
      %1940 = vmatprep.subr.bf16.mxu0 0
      %1941 = vmatpush1.bf16.msra.mxu0 %v1918
      %1942 = vmatprep.subr.bf16.mxu0 0
      %1943 = vmatpush1.bf16.msra.mxu0 %v1919
      %1944 = vmatprep.subr.bf16.mxu0 0
      %1945 = vmatpush1.bf16.msra.mxu0 0
      %1946 = vmatprep.subr.bf16.mxu0 0
      %1947 = vmatpush1.bf16.msra.mxu0 0
      %1948 = vmatprep.subr.bf16.mxu0 0
      %1949 = vmatpush1.bf16.msra.mxu0 0
      %1950 = vmatprep.subr.bf16.mxu0 0
      %1951 = vmatpush1.bf16.msra.mxu0 0
      %1952 = vmatprep.subr.bf16.mxu0 0
      %1953 = vmatpush1.bf16.msra.mxu0 0
      %1954 = vmatprep.subr.bf16.mxu0 0
      %1955 = vmatpush1.bf16.msra.mxu0 0
      %1956 = vmatprep.subr.bf16.mxu0 0
      %1957 = vmatpush1.bf16.msra.mxu0 0
      %1958 = vmatprep.subr.bf16.mxu0 0
      %1959 = vmatpush1.bf16.msra.mxu0 0
      %1960 = vmatprep.mubr.bf16.mxu0 0
      %1961 = vmatmul.mubr.bf16.gmra.mrb[0].mxu0 %v848
      %v1962 = vpop.f32.mrb[0].mxu0
      %v1963 = vadd.f32 0.0, %v1962
      %v1964 = vpop.f32.mrb[0].mxu0
      %v1965 = vpop.f32.mrb[0].mxu0
      %v1966 = vadd.f32 0.0, %v1965
      %v1967 = vpop.f32.mrb[0].mxu0
      %1968 = vmatprep.mubr.bf16.mxu0 0
      %1969 = vmatmul.mubr.bf16.gmra.mrb[0].mxu0 %v849
      %v1970 = vpop.f32.mrb[0].mxu0
      %v1971 = vadd.f32 0.0, %v1970
      %v1972 = vpop.f32.mrb[0].mxu0
      %v1973 = vpop.f32.mrb[0].mxu0
      %v1974 = vadd.f32 0.0, %v1973
      %v1975 = vpop.f32.mrb[0].mxu0
      %1976 = vmatprep.mubr.bf16.mxu0 0
      %1977 = vmatmul.mubr.bf16.gmra.mrb[0].mxu0 %v850
      %v1978 = vpop.f32.mrb[0].mxu0
      %v1979 = vadd.f32 0.0, %v1978
      %v1980 = vpop.f32.mrb[0].mxu0
      %v1981 = vpop.f32.mrb[0].mxu0
      %v1982 = vadd.f32 0.0, %v1981
      %v1983 = vpop.f32.mrb[0].mxu0
      %1984 = vmatprep.mubr.bf16.mxu0 0
      %1985 = vmatmul.mubr.bf16.gmra.mrb[0].mxu0 %v851
      %v1986 = vpop.f32.mrb[0].mxu0
      %v1987 = vadd.f32 0.0, %v1986
      %v1988 = vpop.f32.mrb[0].mxu0
      %v1989 = vpop.f32.mrb[0].mxu0
      %v1990 = vadd.f32 0.0, %v1989
      %v1991 = vpop.f32.mrb[0].mxu0
      %1992 = vmatprep.mubr.bf16.mxu0 0
      %1993 = vmatmul.mubr.bf16.gmra.mrb[0].mxu0 %v852
      %v1994 = vpop.f32.mrb[0].mxu0
      %v1995 = vadd.f32 0.0, %v1994
      %v1996 = vpop.f32.mrb[0].mxu0
      %v1997 = vpop.f32.mrb[0].mxu0
      %v1998 = vadd.f32 0.0, %v1997
      %v1999 = vpop.f32.mrb[0].mxu0
      %2000 = vmatprep.mubr.bf16.mxu0 0
      %2001 = vmatmul.mubr.bf16.gmra.mrb[0].mxu0 %v853
      %v2002 = vpop.f32.mrb[0].mxu0
      %v2003 = vadd.f32 0.0, %v2002
      %v2004 = vpop.f32.mrb[0].mxu0
      %v2005 = vpop.f32.mrb[0].mxu0
      %v2006 = vadd.f32 0.0, %v2005
      %v2007 = vpop.f32.mrb[0].mxu0
      %2008 = vmatprep.mubr.bf16.mxu0 0
      %2009 = vmatmul.mubr.bf16.gmra.mrb[0].mxu0 %v854
      %v2010 = vpop.f32.mrb[0].mxu0
      %v2011 = vadd.f32 0.0, %v2010
      %v2012 = vpop.f32.mrb[0].mxu0
      %v2013 = vpop.f32.mrb[0].mxu0
      %v2014 = vadd.f32 0.0, %v2013
      %v2015 = vpop.f32.mrb[0].mxu0
      %2016 = vmatprep.mubr.bf16.mxu0 0
      %2017 = vmatmul.mubr.bf16.gmra.mrb[0].mxu0 %v855
      %v2018 = vpop.f32.mrb[0].mxu0
      %v2019 = vadd.f32 0.0, %v2018
      %v2020 = vpop.f32.mrb[0].mxu0
      %v2021 = vpop.f32.mrb[0].mxu0
      %v2022 = vadd.f32 0.0, %v2021
      %v2023 = vpop.f32.mrb[0].mxu0
      %2024 = vmatprep.mubr.bf16.mxu0 0
      %2025 = vmatmul.mubr.bf16.gmra.mrb[0].mxu0 %v856
      %v2026 = vpop.f32.mrb[0].mxu0
      %v2027 = vadd.f32 0.0, %v2026
      %v2028 = vpop.f32.mrb[0].mxu0
      %v2029 = vpop.f32.mrb[0].mxu0
      %v2030 = vadd.f32 0.0, %v2029
      %v2031 = vpop.f32.mrb[0].mxu0
      %2032 = vmatprep.mubr.bf16.mxu0 0
      %2033 = vmatmul.mubr.bf16.gmra.mrb[0].mxu0 %v857
      %v2034 = vpop.f32.mrb[0].mxu0
      %v2035 = vadd.f32 0.0, %v2034
      %v2036 = vpop.f32.mrb[0].mxu0
      %v2037 = vpop.f32.mrb[0].mxu0
      %v2038 = vadd.f32 0.0, %v2037
      %v2039 = vpop.f32.mrb[0].mxu0
      %2040 = vmatprep.mubr.bf16.mxu0 0
      %2041 = vmatmul.mubr.bf16.gmra.mrb[0].mxu0 %v858
      %v2042 = vpop.f32.mrb[0].mxu0
      %v2043 = vadd.f32 0.0, %v2042
      %v2044 = vpop.f32.mrb[0].mxu0
      %v2045 = vpop.f32.mrb[0].mxu0
      %v2046 = vadd.f32 0.0, %v2045
      %v2047 = vpop.f32.mrb[0].mxu0
      %2048 = vmatprep.mubr.bf16.mxu0 0
      %2049 = vmatmul.mubr.bf16.gmra.mrb[0].mxu0 %v859
      %v2050 = vpop.f32.mrb[0].mxu0
      %v2051 = vadd.f32 0.0, %v2050
      %v2052 = vpop.f32.mrb[0].mxu0
      %v2053 = vpop.f32.mrb[0].mxu0
      %v2054 = vadd.f32 0.0, %v2053
      %v2055 = vpop.f32.mrb[0].mxu0
      %2056 = vmatprep.mubr.bf16.mxu0 0
      %2057 = vmatmul.mubr.bf16.gmra.mrb[0].mxu0 %v860
      %v2058 = vpop.f32.mrb[0].mxu0
      %v2059 = vadd.f32 0.0, %v2058
      %v2060 = vpop.f32.mrb[0].mxu0
      %v2061 = vpop.f32.mrb[0].mxu0
      %v2062 = vadd.f32 0.0, %v2061
      %v2063 = vpop.f32.mrb[0].mxu0
      %2064 = vmatprep.mubr.bf16.mxu0 0
      %2065 = vmatmul.mubr.bf16.gmra.mrb[0].mxu0 %v861
      %v2066 = vpop.f32.mrb[0].mxu0
      %v2067 = vadd.f32 0.0, %v2066
      %v2068 = vpop.f32.mrb[0].mxu0
      %v2069 = vpop.f32.mrb[0].mxu0
      %v2070 = vadd.f32 0.0, %v2069
      %v2071 = vpop.f32.mrb[0].mxu0
      %2072 = vmatprep.mubr.bf16.mxu0 0
      %2073 = vmatmul.mubr.bf16.gmra.mrb[0].mxu0 %v862
      %v2074 = vpop.f32.mrb[0].mxu0
      %v2075 = vadd.f32 0.0, %v2074
      %v2076 = vpop.f32.mrb[0].mxu0
      %v2077 = vpop.f32.mrb[0].mxu0
      %v2078 = vadd.f32 0.0, %v2077
      %v2079 = vpop.f32.mrb[0].mxu0
      %2080 = vmatprep.mubr.bf16.mxu0 0
      %2081 = vmatmul.mubr.bf16.gmra.mrb[0].mxu0 %v1862
      %v2082 = vpop.f32.mrb[0].mxu0
      %v2083 = vadd.f32 0.0, %v2082
      %v2084 = vpop.f32.mrb[0].mxu0
      %v2085 = vpop.f32.mrb[0].mxu0
      %v2086 = vadd.f32 0.0, %v2085
      %v2087 = vpop.f32.mrb[0].mxu0
      %2088 = vdwg.mxu0
      %v2089 = vadd.f32 %v1830, %v1963
      %v2090 = vadd.f32 %v1831, %v1966
      %v2091 = vadd.f32 %v1832, %v1971
      %v2092 = vadd.f32 %v1833, %v1974
      %v2093 = vadd.f32 %v1834, %v1979
      %v2094 = vadd.f32 %v1835, %v1982
      %v2095 = vadd.f32 %v1836, %v1987
      %v2096 = vadd.f32 %v1837, %v1990
      %v2097 = vadd.f32 %v1838, %v1995
      %v2098 = vadd.f32 %v1839, %v1998
      %v2099 = vadd.f32 %v1840, %v2003
      %v2100 = vadd.f32 %v1841, %v2006
      %v2101 = vadd.f32 %v1842, %v2011
      %v2102 = vadd.f32 %v1843, %v2014
      %v2103 = vadd.f32 %v1844, %v2019
      %v2104 = vadd.f32 %v1845, %v2022
      %v2105 = vadd.f32 %v1846, %v2027
      %v2106 = vadd.f32 %v1847, %v2030
      %v2107 = vadd.f32 %v1848, %v2035
      %v2108 = vadd.f32 %v1849, %v2038
      %v2109 = vadd.f32 %v1850, %v2043
      %v2110 = vadd.f32 %v1851, %v2046
      %v2111 = vadd.f32 %v1852, %v2051
      %v2112 = vadd.f32 %v1853, %v2054
      %v2113 = vadd.f32 %v1854, %v2059
      %v2114 = vadd.f32 %v1855, %v2062
      %v2115 = vadd.f32 %v1856, %v2067
      %v2116 = vadd.f32 %v1857, %v2070
      %v2117 = vadd.f32 %v1858, %v2075
      %v2118 = vadd.f32 %v1859, %v2078
      %v2119 = vadd.f32 %v1860, %v2083
      %v2120 = vadd.f32 %v1861, %v2086
      %v2123 = vrot.slane %v827, 1
      %v2124 = vrot.slane %v753, 1
      %v2125 = vsel %vm911, %v2123, %v2124
      %v2126 = vrot.slane %v845, 1
      %v2127 = vsel %vm911, %v2124, %v2126
      %v2130 = vpack.c.bf16 %v2127, %v2125
      %s2131 = scalar_lea.vmem %s3, 256
      %v2132 = vld [vmem:[%s2131] sm:$0xf]
      %v2133 = vld [vmem:[%s2131 + $0x4] sm:$0xf]
      %v2134 = vld [vmem:[%s2131 + $0x8] sm:$0xf]
      %v2135 = vld [vmem:[%s2131 + $0xc] sm:$0xf]
      %v2136 = vld [vmem:[%s2131 + $0x10] sm:$0xf]
      %v2137 = vld [vmem:[%s2131 + $0x14] sm:$0xf]
      %v2138 = vld [vmem:[%s2131 + $0x18] sm:$0xf]
      %v2139 = vld [vmem:[%s2131 + $0x1c] sm:$0xf]
      %v2140 = vld [vmem:[%s2131 + $0x20] sm:$0xf]
      %v2141 = vld [vmem:[%s2131 + $0x24] sm:$0xf]
      %v2142 = vld [vmem:[%s2131 + $0x28] sm:$0xf]
      %v2143 = vld [vmem:[%s2131 + $0x2c] sm:$0xf]
      %v2144 = vld [vmem:[%s2131 + $0x30] sm:$0xf]
      %v2145 = vld [vmem:[%s2131 + $0x34] sm:$0xf]
      %v2146 = vld [vmem:[%s2131 + $0x38] sm:$0xf]
      %v2147 = vld [vmem:[%s2131 + $0x3c] sm:$0xf]
      %v2164 = vunpack.c.l.b16 %v2132
      %v2165 = vunpack.c.l.b16 %v2133
      %v2166 = vunpack.c.l.b16 %v2134
      %v2167 = vunpack.c.l.b16 %v2135
      %v2168 = vunpack.c.l.b16 %v2136
      %v2169 = vunpack.c.l.b16 %v2137
      %v2170 = vunpack.c.l.b16 %v2138
      %v2171 = vunpack.c.l.b16 %v2139
      %v2172 = vunpack.c.l.b16 %v2140
      %v2173 = vunpack.c.l.b16 %v2141
      %v2174 = vunpack.c.l.b16 %v2142
      %v2175 = vunpack.c.l.b16 %v2143
      %v2176 = vunpack.c.l.b16 %v2144
      %v2177 = vunpack.c.l.b16 %v2145
      %v2178 = vunpack.c.l.b16 %v2146
      %v2179 = vunpack.c.l.b16 %v2147
      %v2180 = vpack.c.b16 %v2165, %v2164
      %v2181 = vpack.c.b16 %v2167, %v2166
      %v2182 = vpack.c.b16 %v2169, %v2168
      %v2183 = vpack.c.b16 %v2171, %v2170
      %v2184 = vpack.c.b16 %v2173, %v2172
      %v2185 = vpack.c.b16 %v2175, %v2174
      %v2186 = vpack.c.b16 %v2177, %v2176
      %v2187 = vpack.c.b16 %v2179, %v2178
      %2196 = vmatprep.subr.bf16.mxu0 0
      %2197 = vmatpush1.bf16.msra.mxu0 %v2180
      %2198 = vmatprep.subr.bf16.mxu0 0
      %2199 = vmatpush1.bf16.msra.mxu0 %v2181
      %2200 = vmatprep.subr.bf16.mxu0 0
      %2201 = vmatpush1.bf16.msra.mxu0 %v2182
      %2202 = vmatprep.subr.bf16.mxu0 0
      %2203 = vmatpush1.bf16.msra.mxu0 %v2183
      %2204 = vmatprep.subr.bf16.mxu0 0
      %2205 = vmatpush1.bf16.msra.mxu0 %v2184
      %2206 = vmatprep.subr.bf16.mxu0 0
      %2207 = vmatpush1.bf16.msra.mxu0 %v2185
      %2208 = vmatprep.subr.bf16.mxu0 0
      %2209 = vmatpush1.bf16.msra.mxu0 %v2186
      %2210 = vmatprep.subr.bf16.mxu0 0
      %2211 = vmatpush1.bf16.msra.mxu0 %v2187
      %2212 = vmatprep.subr.bf16.mxu0 0
      %2213 = vmatpush1.bf16.msra.mxu0 0
      %2214 = vmatprep.subr.bf16.mxu0 0
      %2215 = vmatpush1.bf16.msra.mxu0 0
      %2216 = vmatprep.subr.bf16.mxu0 0
      %2217 = vmatpush1.bf16.msra.mxu0 0
      %2218 = vmatprep.subr.bf16.mxu0 0
      %2219 = vmatpush1.bf16.msra.mxu0 0
      %2220 = vmatprep.subr.bf16.mxu0 0
      %2221 = vmatpush1.bf16.msra.mxu0 0
      %2222 = vmatprep.subr.bf16.mxu0 0
      %2223 = vmatpush1.bf16.msra.mxu0 0
      %2224 = vmatprep.subr.bf16.mxu0 0
      %2225 = vmatpush1.bf16.msra.mxu0 0
      %2226 = vmatprep.subr.bf16.mxu0 0
      %2227 = vmatpush1.bf16.msra.mxu0 0
      %2228 = vmatprep.mubr.bf16.mxu0 0
      %2229 = vmatmul.mubr.bf16.gmra.mrb[0].mxu0 %v1025
      %v2230 = vpop.f32.mrb[0].mxu0
      %v2231 = vadd.f32 0.0, %v2230
      %v2232 = vpop.f32.mrb[0].mxu0
      %v2233 = vpop.f32.mrb[0].mxu0
      %v2234 = vadd.f32 0.0, %v2233
      %v2235 = vpop.f32.mrb[0].mxu0
      %2236 = vmatprep.mubr.bf16.mxu0 0
      %2237 = vmatmul.mubr.bf16.gmra.mrb[0].mxu0 %v1026
      %v2238 = vpop.f32.mrb[0].mxu0
      %v2239 = vadd.f32 0.0, %v2238
      %v2240 = vpop.f32.mrb[0].mxu0
      %v2241 = vpop.f32.mrb[0].mxu0
      %v2242 = vadd.f32 0.0, %v2241
      %v2243 = vpop.f32.mrb[0].mxu0
      %2244 = vmatprep.mubr.bf16.mxu0 0
      %2245 = vmatmul.mubr.bf16.gmra.mrb[0].mxu0 %v1027
      %v2246 = vpop.f32.mrb[0].mxu0
      %v2247 = vadd.f32 0.0, %v2246
      %v2248 = vpop.f32.mrb[0].mxu0
      %v2249 = vpop.f32.mrb[0].mxu0
      %v2250 = vadd.f32 0.0, %v2249
      %v2251 = vpop.f32.mrb[0].mxu0
      %2252 = vmatprep.mubr.bf16.mxu0 0
      %2253 = vmatmul.mubr.bf16.gmra.mrb[0].mxu0 %v1028
      %v2254 = vpop.f32.mrb[0].mxu0
      %v2255 = vadd.f32 0.0, %v2254
      %v2256 = vpop.f32.mrb[0].mxu0
      %v2257 = vpop.f32.mrb[0].mxu0
      %v2258 = vadd.f32 0.0, %v2257
      %v2259 = vpop.f32.mrb[0].mxu0
      %2260 = vmatprep.mubr.bf16.mxu0 0
      %2261 = vmatmul.mubr.bf16.gmra.mrb[0].mxu0 %v1029
      %v2262 = vpop.f32.mrb[0].mxu0
      %v2263 = vadd.f32 0.0, %v2262
      %v2264 = vpop.f32.mrb[0].mxu0
      %v2265 = vpop.f32.mrb[0].mxu0
      %v2266 = vadd.f32 0.0, %v2265
      %v2267 = vpop.f32.mrb[0].mxu0
      %2268 = vmatprep.mubr.bf16.mxu0 0
      %2269 = vmatmul.mubr.bf16.gmra.mrb[0].mxu0 %v1030
      %v2270 = vpop.f32.mrb[0].mxu0
      %v2271 = vadd.f32 0.0, %v2270
      %v2272 = vpop.f32.mrb[0].mxu0
      %v2273 = vpop.f32.mrb[0].mxu0
      %v2274 = vadd.f32 0.0, %v2273
      %v2275 = vpop.f32.mrb[0].mxu0
      %2276 = vmatprep.mubr.bf16.mxu0 0
      %2277 = vmatmul.mubr.bf16.gmra.mrb[0].mxu0 %v1031
      %v2278 = vpop.f32.mrb[0].mxu0
      %v2279 = vadd.f32 0.0, %v2278
      %v2280 = vpop.f32.mrb[0].mxu0
      %v2281 = vpop.f32.mrb[0].mxu0
      %v2282 = vadd.f32 0.0, %v2281
      %v2283 = vpop.f32.mrb[0].mxu0
      %2284 = vmatprep.mubr.bf16.mxu0 0
      %2285 = vmatmul.mubr.bf16.gmra.mrb[0].mxu0 %v1032
      %v2286 = vpop.f32.mrb[0].mxu0
      %v2287 = vadd.f32 0.0, %v2286
      %v2288 = vpop.f32.mrb[0].mxu0
      %v2289 = vpop.f32.mrb[0].mxu0
      %v2290 = vadd.f32 0.0, %v2289
      %v2291 = vpop.f32.mrb[0].mxu0
      %2292 = vmatprep.mubr.bf16.mxu0 0
      %2293 = vmatmul.mubr.bf16.gmra.mrb[0].mxu0 %v1033
      %v2294 = vpop.f32.mrb[0].mxu0
      %v2295 = vadd.f32 0.0, %v2294
      %v2296 = vpop.f32.mrb[0].mxu0
      %v2297 = vpop.f32.mrb[0].mxu0
      %v2298 = vadd.f32 0.0, %v2297
      %v2299 = vpop.f32.mrb[0].mxu0
      %2300 = vmatprep.mubr.bf16.mxu0 0
      %2301 = vmatmul.mubr.bf16.gmra.mrb[0].mxu0 %v1034
      %v2302 = vpop.f32.mrb[0].mxu0
      %v2303 = vadd.f32 0.0, %v2302
      %v2304 = vpop.f32.mrb[0].mxu0
      %v2305 = vpop.f32.mrb[0].mxu0
      %v2306 = vadd.f32 0.0, %v2305
      %v2307 = vpop.f32.mrb[0].mxu0
      %2308 = vmatprep.mubr.bf16.mxu0 0
      %2309 = vmatmul.mubr.bf16.gmra.mrb[0].mxu0 %v1035
      %v2310 = vpop.f32.mrb[0].mxu0
      %v2311 = vadd.f32 0.0, %v2310
      %v2312 = vpop.f32.mrb[0].mxu0
      %v2313 = vpop.f32.mrb[0].mxu0
      %v2314 = vadd.f32 0.0, %v2313
      %v2315 = vpop.f32.mrb[0].mxu0
      %2316 = vmatprep.mubr.bf16.mxu0 0
      %2317 = vmatmul.mubr.bf16.gmra.mrb[0].mxu0 %v1036
      %v2318 = vpop.f32.mrb[0].mxu0
      %v2319 = vadd.f32 0.0, %v2318
      %v2320 = vpop.f32.mrb[0].mxu0
      %v2321 = vpop.f32.mrb[0].mxu0
      %v2322 = vadd.f32 0.0, %v2321
      %v2323 = vpop.f32.mrb[0].mxu0
      %2324 = vmatprep.mubr.bf16.mxu0 0
      %2325 = vmatmul.mubr.bf16.gmra.mrb[0].mxu0 %v1037
      %v2326 = vpop.f32.mrb[0].mxu0
      %v2327 = vadd.f32 0.0, %v2326
      %v2328 = vpop.f32.mrb[0].mxu0
      %v2329 = vpop.f32.mrb[0].mxu0
      %v2330 = vadd.f32 0.0, %v2329
      %v2331 = vpop.f32.mrb[0].mxu0
      %2332 = vmatprep.mubr.bf16.mxu0 0
      %2333 = vmatmul.mubr.bf16.gmra.mrb[0].mxu0 %v1038
      %v2334 = vpop.f32.mrb[0].mxu0
      %v2335 = vadd.f32 0.0, %v2334
      %v2336 = vpop.f32.mrb[0].mxu0
      %v2337 = vpop.f32.mrb[0].mxu0
      %v2338 = vadd.f32 0.0, %v2337
      %v2339 = vpop.f32.mrb[0].mxu0
      %2340 = vmatprep.mubr.bf16.mxu0 0
      %2341 = vmatmul.mubr.bf16.gmra.mrb[0].mxu0 %v1039
      %v2342 = vpop.f32.mrb[0].mxu0
      %v2343 = vadd.f32 0.0, %v2342
      %v2344 = vpop.f32.mrb[0].mxu0
      %v2345 = vpop.f32.mrb[0].mxu0
      %v2346 = vadd.f32 0.0, %v2345
      %v2347 = vpop.f32.mrb[0].mxu0
      %2348 = vmatprep.mubr.bf16.mxu0 0
      %2349 = vmatmul.mubr.bf16.gmra.mrb[0].mxu0 %v2130
      %v2350 = vpop.f32.mrb[0].mxu0
      %v2351 = vadd.f32 0.0, %v2350
      %v2352 = vpop.f32.mrb[0].mxu0
      %v2353 = vpop.f32.mrb[0].mxu0
      %v2354 = vadd.f32 0.0, %v2353
      %v2355 = vpop.f32.mrb[0].mxu0
      %2356 = vdwg.mxu0
      %v2357 = vadd.f32 %v2089, %v2231
      %v2358 = vadd.f32 %v2090, %v2234
      %v2359 = vadd.f32 %v2091, %v2239
      %v2360 = vadd.f32 %v2092, %v2242
      %v2361 = vadd.f32 %v2093, %v2247
      %v2362 = vadd.f32 %v2094, %v2250
      %v2363 = vadd.f32 %v2095, %v2255
      %v2364 = vadd.f32 %v2096, %v2258
      %v2365 = vadd.f32 %v2097, %v2263
      %v2366 = vadd.f32 %v2098, %v2266
      %v2367 = vadd.f32 %v2099, %v2271
      %v2368 = vadd.f32 %v2100, %v2274
      %v2369 = vadd.f32 %v2101, %v2279
      %v2370 = vadd.f32 %v2102, %v2282
      %v2371 = vadd.f32 %v2103, %v2287
      %v2372 = vadd.f32 %v2104, %v2290
      %v2373 = vadd.f32 %v2105, %v2295
      %v2374 = vadd.f32 %v2106, %v2298
      %v2375 = vadd.f32 %v2107, %v2303
      %v2376 = vadd.f32 %v2108, %v2306
      %v2377 = vadd.f32 %v2109, %v2311
      %v2378 = vadd.f32 %v2110, %v2314
      %v2379 = vadd.f32 %v2111, %v2319
      %v2380 = vadd.f32 %v2112, %v2322
      %v2381 = vadd.f32 %v2113, %v2327
      %v2382 = vadd.f32 %v2114, %v2330
      %v2383 = vadd.f32 %v2115, %v2335
      %v2384 = vadd.f32 %v2116, %v2338
      %v2385 = vadd.f32 %v2117, %v2343
      %v2386 = vadd.f32 %v2118, %v2346
      %v2387 = vadd.f32 %v2119, %v2351
      %v2388 = vadd.f32 %v2120, %v2354
      %v2389 = vrot.slane %v827, 2
      %v2390 = vrot.slane %v753, 2
      %v2391 = vsel %vm1475, %v2389, %v2390
      %v2392 = vrot.slane %v845, 2
      %v2393 = vsel %vm1475, %v2390, %v2392
      %v2396 = vpack.c.bf16 %v2393, %v2391
      %s2397 = scalar_lea.vmem %s3, 320
      %v2398 = vld [vmem:[%s2397] sm:$0xf]
      %v2399 = vld [vmem:[%s2397 + $0x4] sm:$0xf]
      %v2400 = vld [vmem:[%s2397 + $0x8] sm:$0xf]
      %v2401 = vld [vmem:[%s2397 + $0xc] sm:$0xf]
      %v2402 = vld [vmem:[%s2397 + $0x10] sm:$0xf]
      %v2403 = vld [vmem:[%s2397 + $0x14] sm:$0xf]
      %v2404 = vld [vmem:[%s2397 + $0x18] sm:$0xf]
      %v2405 = vld [vmem:[%s2397 + $0x1c] sm:$0xf]
      %v2406 = vld [vmem:[%s2397 + $0x20] sm:$0xf]
      %v2407 = vld [vmem:[%s2397 + $0x24] sm:$0xf]
      %v2408 = vld [vmem:[%s2397 + $0x28] sm:$0xf]
      %v2409 = vld [vmem:[%s2397 + $0x2c] sm:$0xf]
      %v2410 = vld [vmem:[%s2397 + $0x30] sm:$0xf]
      %v2411 = vld [vmem:[%s2397 + $0x34] sm:$0xf]
      %v2412 = vld [vmem:[%s2397 + $0x38] sm:$0xf]
      %v2413 = vld [vmem:[%s2397 + $0x3c] sm:$0xf]
      %v2430 = vunpack.c.l.b16 %v2398
      %v2431 = vunpack.c.l.b16 %v2399
      %v2432 = vunpack.c.l.b16 %v2400
      %v2433 = vunpack.c.l.b16 %v2401
      %v2434 = vunpack.c.l.b16 %v2402
      %v2435 = vunpack.c.l.b16 %v2403
      %v2436 = vunpack.c.l.b16 %v2404
      %v2437 = vunpack.c.l.b16 %v2405
      %v2438 = vunpack.c.l.b16 %v2406
      %v2439 = vunpack.c.l.b16 %v2407
      %v2440 = vunpack.c.l.b16 %v2408
      %v2441 = vunpack.c.l.b16 %v2409
      %v2442 = vunpack.c.l.b16 %v2410
      %v2443 = vunpack.c.l.b16 %v2411
      %v2444 = vunpack.c.l.b16 %v2412
      %v2445 = vunpack.c.l.b16 %v2413
      %v2446 = vpack.c.b16 %v2431, %v2430
      %v2447 = vpack.c.b16 %v2433, %v2432
      %v2448 = vpack.c.b16 %v2435, %v2434
      %v2449 = vpack.c.b16 %v2437, %v2436
      %v2450 = vpack.c.b16 %v2439, %v2438
      %v2451 = vpack.c.b16 %v2441, %v2440
      %v2452 = vpack.c.b16 %v2443, %v2442
      %v2453 = vpack.c.b16 %v2445, %v2444
      %2462 = vmatprep.subr.bf16.mxu0 0
      %2463 = vmatpush1.bf16.msra.mxu0 %v2446
      %2464 = vmatprep.subr.bf16.mxu0 0
      %2465 = vmatpush1.bf16.msra.mxu0 %v2447
      %2466 = vmatprep.subr.bf16.mxu0 0
      %2467 = vmatpush1.bf16.msra.mxu0 %v2448
      %2468 = vmatprep.subr.bf16.mxu0 0
      %2469 = vmatpush1.bf16.msra.mxu0 %v2449
      %2470 = vmatprep.subr.bf16.mxu0 0
      %2471 = vmatpush1.bf16.msra.mxu0 %v2450
      %2472 = vmatprep.subr.bf16.mxu0 0
      %2473 = vmatpush1.bf16.msra.mxu0 %v2451
      %2474 = vmatprep.subr.bf16.mxu0 0
      %2475 = vmatpush1.bf16.msra.mxu0 %v2452
      %2476 = vmatprep.subr.bf16.mxu0 0
      %2477 = vmatpush1.bf16.msra.mxu0 %v2453
      %2478 = vmatprep.subr.bf16.mxu0 0
      %2479 = vmatpush1.bf16.msra.mxu0 0
      %2480 = vmatprep.subr.bf16.mxu0 0
      %2481 = vmatpush1.bf16.msra.mxu0 0
      %2482 = vmatprep.subr.bf16.mxu0 0
      %2483 = vmatpush1.bf16.msra.mxu0 0
      %2484 = vmatprep.subr.bf16.mxu0 0
      %2485 = vmatpush1.bf16.msra.mxu0 0
      %2486 = vmatprep.subr.bf16.mxu0 0
      %2487 = vmatpush1.bf16.msra.mxu0 0
      %2488 = vmatprep.subr.bf16.mxu0 0
      %2489 = vmatpush1.bf16.msra.mxu0 0
      %2490 = vmatprep.subr.bf16.mxu0 0
      %2491 = vmatpush1.bf16.msra.mxu0 0
      %2492 = vmatprep.subr.bf16.mxu0 0
      %2493 = vmatpush1.bf16.msra.mxu0 0
      %2494 = vmatprep.mubr.bf16.mxu0 0
      %2495 = vmatmul.mubr.bf16.gmra.mrb[0].mxu0 %v1589
      %v2496 = vpop.f32.mrb[0].mxu0
      %v2497 = vadd.f32 0.0, %v2496
      %v2498 = vpop.f32.mrb[0].mxu0
      %v2499 = vpop.f32.mrb[0].mxu0
      %v2500 = vadd.f32 0.0, %v2499
      %v2501 = vpop.f32.mrb[0].mxu0
      %2502 = vmatprep.mubr.bf16.mxu0 0
      %2503 = vmatmul.mubr.bf16.gmra.mrb[0].mxu0 %v1590
      %v2504 = vpop.f32.mrb[0].mxu0
      %v2505 = vadd.f32 0.0, %v2504
      %v2506 = vpop.f32.mrb[0].mxu0
      %v2507 = vpop.f32.mrb[0].mxu0
      %v2508 = vadd.f32 0.0, %v2507
      %v2509 = vpop.f32.mrb[0].mxu0
      %2510 = vmatprep.mubr.bf16.mxu0 0
      %2511 = vmatmul.mubr.bf16.gmra.mrb[0].mxu0 %v1591
      %v2512 = vpop.f32.mrb[0].mxu0
      %v2513 = vadd.f32 0.0, %v2512
      %v2514 = vpop.f32.mrb[0].mxu0
      %v2515 = vpop.f32.mrb[0].mxu0
      %v2516 = vadd.f32 0.0, %v2515
      %v2517 = vpop.f32.mrb[0].mxu0
      %2518 = vmatprep.mubr.bf16.mxu0 0
      %2519 = vmatmul.mubr.bf16.gmra.mrb[0].mxu0 %v1592
      %v2520 = vpop.f32.mrb[0].mxu0
      %v2521 = vadd.f32 0.0, %v2520
      %v2522 = vpop.f32.mrb[0].mxu0
      %v2523 = vpop.f32.mrb[0].mxu0
      %v2524 = vadd.f32 0.0, %v2523
      %v2525 = vpop.f32.mrb[0].mxu0
      %2526 = vmatprep.mubr.bf16.mxu0 0
      %2527 = vmatmul.mubr.bf16.gmra.mrb[0].mxu0 %v1593
      %v2528 = vpop.f32.mrb[0].mxu0
      %v2529 = vadd.f32 0.0, %v2528
      %v2530 = vpop.f32.mrb[0].mxu0
      %v2531 = vpop.f32.mrb[0].mxu0
      %v2532 = vadd.f32 0.0, %v2531
      %v2533 = vpop.f32.mrb[0].mxu0
      %2534 = vmatprep.mubr.bf16.mxu0 0
      %2535 = vmatmul.mubr.bf16.gmra.mrb[0].mxu0 %v1594
      %v2536 = vpop.f32.mrb[0].mxu0
      %v2537 = vadd.f32 0.0, %v2536
      %v2538 = vpop.f32.mrb[0].mxu0
      %v2539 = vpop.f32.mrb[0].mxu0
      %v2540 = vadd.f32 0.0, %v2539
      %v2541 = vpop.f32.mrb[0].mxu0
      %2542 = vmatprep.mubr.bf16.mxu0 0
      %2543 = vmatmul.mubr.bf16.gmra.mrb[0].mxu0 %v1595
      %v2544 = vpop.f32.mrb[0].mxu0
      %v2545 = vadd.f32 0.0, %v2544
      %v2546 = vpop.f32.mrb[0].mxu0
      %v2547 = vpop.f32.mrb[0].mxu0
      %v2548 = vadd.f32 0.0, %v2547
      %v2549 = vpop.f32.mrb[0].mxu0
      %2550 = vmatprep.mubr.bf16.mxu0 0
      %2551 = vmatmul.mubr.bf16.gmra.mrb[0].mxu0 %v1596
      %v2552 = vpop.f32.mrb[0].mxu0
      %v2553 = vadd.f32 0.0, %v2552
      %v2554 = vpop.f32.mrb[0].mxu0
      %v2555 = vpop.f32.mrb[0].mxu0
      %v2556 = vadd.f32 0.0, %v2555
      %v2557 = vpop.f32.mrb[0].mxu0
      %2558 = vmatprep.mubr.bf16.mxu0 0
      %2559 = vmatmul.mubr.bf16.gmra.mrb[0].mxu0 %v1597
      %v2560 = vpop.f32.mrb[0].mxu0
      %v2561 = vadd.f32 0.0, %v2560
      %v2562 = vpop.f32.mrb[0].mxu0
      %v2563 = vpop.f32.mrb[0].mxu0
      %v2564 = vadd.f32 0.0, %v2563
      %v2565 = vpop.f32.mrb[0].mxu0
      %2566 = vmatprep.mubr.bf16.mxu0 0
      %2567 = vmatmul.mubr.bf16.gmra.mrb[0].mxu0 %v1598
      %v2568 = vpop.f32.mrb[0].mxu0
      %v2569 = vadd.f32 0.0, %v2568
      %v2570 = vpop.f32.mrb[0].mxu0
      %v2571 = vpop.f32.mrb[0].mxu0
      %v2572 = vadd.f32 0.0, %v2571
      %v2573 = vpop.f32.mrb[0].mxu0
      %2574 = vmatprep.mubr.bf16.mxu0 0
      %2575 = vmatmul.mubr.bf16.gmra.mrb[0].mxu0 %v1599
      %v2576 = vpop.f32.mrb[0].mxu0
      %v2577 = vadd.f32 0.0, %v2576
      %v2578 = vpop.f32.mrb[0].mxu0
      %v2579 = vpop.f32.mrb[0].mxu0
      %v2580 = vadd.f32 0.0, %v2579
      %v2581 = vpop.f32.mrb[0].mxu0
      %2582 = vmatprep.mubr.bf16.mxu0 0
      %2583 = vmatmul.mubr.bf16.gmra.mrb[0].mxu0 %v1600
      %v2584 = vpop.f32.mrb[0].mxu0
      %v2585 = vadd.f32 0.0, %v2584
      %v2586 = vpop.f32.mrb[0].mxu0
      %v2587 = vpop.f32.mrb[0].mxu0
      %v2588 = vadd.f32 0.0, %v2587
      %v2589 = vpop.f32.mrb[0].mxu0
      %2590 = vmatprep.mubr.bf16.mxu0 0
      %2591 = vmatmul.mubr.bf16.gmra.mrb[0].mxu0 %v1601
      %v2592 = vpop.f32.mrb[0].mxu0
      %v2593 = vadd.f32 0.0, %v2592
      %v2594 = vpop.f32.mrb[0].mxu0
      %v2595 = vpop.f32.mrb[0].mxu0
      %v2596 = vadd.f32 0.0, %v2595
      %v2597 = vpop.f32.mrb[0].mxu0
      %2598 = vmatprep.mubr.bf16.mxu0 0
      %2599 = vmatmul.mubr.bf16.gmra.mrb[0].mxu0 %v1602
      %v2600 = vpop.f32.mrb[0].mxu0
      %v2601 = vadd.f32 0.0, %v2600
      %v2602 = vpop.f32.mrb[0].mxu0
      %v2603 = vpop.f32.mrb[0].mxu0
      %v2604 = vadd.f32 0.0, %v2603
      %v2605 = vpop.f32.mrb[0].mxu0
      %2606 = vmatprep.mubr.bf16.mxu0 0
      %2607 = vmatmul.mubr.bf16.gmra.mrb[0].mxu0 %v1603
      %v2608 = vpop.f32.mrb[0].mxu0
      %v2609 = vadd.f32 0.0, %v2608
      %v2610 = vpop.f32.mrb[0].mxu0
      %v2611 = vpop.f32.mrb[0].mxu0
      %v2612 = vadd.f32 0.0, %v2611
      %v2613 = vpop.f32.mrb[0].mxu0
      %2614 = vmatprep.mubr.bf16.mxu0 0
      %2615 = vmatmul.mubr.bf16.gmra.mrb[0].mxu0 %v2396
      %v2616 = vpop.f32.mrb[0].mxu0
      %v2617 = vadd.f32 0.0, %v2616
      %v2618 = vpop.f32.mrb[0].mxu0
      %v2619 = vpop.f32.mrb[0].mxu0
      %v2620 = vadd.f32 0.0, %v2619
      %v2621 = vpop.f32.mrb[0].mxu0
      %2622 = vdwg.mxu0
      %v2623 = vadd.f32 %v2357, %v2497
      %v2624 = vadd.f32 %v2358, %v2500
      %v2625 = vadd.f32 %v2359, %v2505
      %v2626 = vadd.f32 %v2360, %v2508
      %v2627 = vadd.f32 %v2361, %v2513
      %v2628 = vadd.f32 %v2362, %v2516
      %v2629 = vadd.f32 %v2363, %v2521
      %v2630 = vadd.f32 %v2364, %v2524
      %v2631 = vadd.f32 %v2365, %v2529
      %v2632 = vadd.f32 %v2366, %v2532
      %v2633 = vadd.f32 %v2367, %v2537
      %v2634 = vadd.f32 %v2368, %v2540
      %v2635 = vadd.f32 %v2369, %v2545
      %v2636 = vadd.f32 %v2370, %v2548
      %v2637 = vadd.f32 %v2371, %v2553
      %v2638 = vadd.f32 %v2372, %v2556
      %v2639 = vadd.f32 %v2373, %v2561
      %v2640 = vadd.f32 %v2374, %v2564
      %v2641 = vadd.f32 %v2375, %v2569
      %v2642 = vadd.f32 %v2376, %v2572
      %v2643 = vadd.f32 %v2377, %v2577
      %v2644 = vadd.f32 %v2378, %v2580
      %v2645 = vadd.f32 %v2379, %v2585
      %v2646 = vadd.f32 %v2380, %v2588
      %v2647 = vadd.f32 %v2381, %v2593
      %v2648 = vadd.f32 %v2382, %v2596
      %v2649 = vadd.f32 %v2383, %v2601
      %v2650 = vadd.f32 %v2384, %v2604
      %v2651 = vadd.f32 %v2385, %v2609
      %v2652 = vadd.f32 %v2386, %v2612
      %v2653 = vadd.f32 %v2387, %v2617
      %v2654 = vadd.f32 %v2388, %v2620
      %v2655 = vpack.c.bf16 %v756, %v828
      %s2656 = scalar_lea.vmem %s3, 384
      %v2657 = vld [vmem:[%s2656] sm:$0xf]
      %v2658 = vld [vmem:[%s2656 + $0x4] sm:$0xf]
      %v2659 = vld [vmem:[%s2656 + $0x8] sm:$0xf]
      %v2660 = vld [vmem:[%s2656 + $0xc] sm:$0xf]
      %v2661 = vld [vmem:[%s2656 + $0x10] sm:$0xf]
      %v2662 = vld [vmem:[%s2656 + $0x14] sm:$0xf]
      %v2663 = vld [vmem:[%s2656 + $0x18] sm:$0xf]
      %v2664 = vld [vmem:[%s2656 + $0x1c] sm:$0xf]
      %v2665 = vld [vmem:[%s2656 + $0x20] sm:$0xf]
      %v2666 = vld [vmem:[%s2656 + $0x24] sm:$0xf]
      %v2667 = vld [vmem:[%s2656 + $0x28] sm:$0xf]
      %v2668 = vld [vmem:[%s2656 + $0x2c] sm:$0xf]
      %v2669 = vld [vmem:[%s2656 + $0x30] sm:$0xf]
      %v2670 = vld [vmem:[%s2656 + $0x34] sm:$0xf]
      %v2671 = vld [vmem:[%s2656 + $0x38] sm:$0xf]
      %v2672 = vld [vmem:[%s2656 + $0x3c] sm:$0xf]
      %v2689 = vunpack.c.l.b16 %v2657
      %v2690 = vunpack.c.l.b16 %v2658
      %v2691 = vunpack.c.l.b16 %v2659
      %v2692 = vunpack.c.l.b16 %v2660
      %v2693 = vunpack.c.l.b16 %v2661
      %v2694 = vunpack.c.l.b16 %v2662
      %v2695 = vunpack.c.l.b16 %v2663
      %v2696 = vunpack.c.l.b16 %v2664
      %v2697 = vunpack.c.l.b16 %v2665
      %v2698 = vunpack.c.l.b16 %v2666
      %v2699 = vunpack.c.l.b16 %v2667
      %v2700 = vunpack.c.l.b16 %v2668
      %v2701 = vunpack.c.l.b16 %v2669
      %v2702 = vunpack.c.l.b16 %v2670
      %v2703 = vunpack.c.l.b16 %v2671
      %v2704 = vunpack.c.l.b16 %v2672
      %v2705 = vpack.c.b16 %v2690, %v2689
      %v2706 = vpack.c.b16 %v2692, %v2691
      %v2707 = vpack.c.b16 %v2694, %v2693
      %v2708 = vpack.c.b16 %v2696, %v2695
      %v2709 = vpack.c.b16 %v2698, %v2697
      %v2710 = vpack.c.b16 %v2700, %v2699
      %v2711 = vpack.c.b16 %v2702, %v2701
      %v2712 = vpack.c.b16 %v2704, %v2703
      %2721 = vmatprep.subr.bf16.mxu0 0
      %2722 = vmatpush1.bf16.msra.mxu0 %v2705
      %2723 = vmatprep.subr.bf16.mxu0 0
      %2724 = vmatpush1.bf16.msra.mxu0 %v2706
      %2725 = vmatprep.subr.bf16.mxu0 0
      %2726 = vmatpush1.bf16.msra.mxu0 %v2707
      %2727 = vmatprep.subr.bf16.mxu0 0
      %2728 = vmatpush1.bf16.msra.mxu0 %v2708
      %2729 = vmatprep.subr.bf16.mxu0 0
      %2730 = vmatpush1.bf16.msra.mxu0 %v2709
      %2731 = vmatprep.subr.bf16.mxu0 0
      %2732 = vmatpush1.bf16.msra.mxu0 %v2710
      %2733 = vmatprep.subr.bf16.mxu0 0
      %2734 = vmatpush1.bf16.msra.mxu0 %v2711
      %2735 = vmatprep.subr.bf16.mxu0 0
      %2736 = vmatpush1.bf16.msra.mxu0 %v2712
      %2737 = vmatprep.subr.bf16.mxu0 0
      %2738 = vmatpush1.bf16.msra.mxu0 0
      %2739 = vmatprep.subr.bf16.mxu0 0
      %2740 = vmatpush1.bf16.msra.mxu0 0
      %2741 = vmatprep.subr.bf16.mxu0 0
      %2742 = vmatpush1.bf16.msra.mxu0 0
      %2743 = vmatprep.subr.bf16.mxu0 0
      %2744 = vmatpush1.bf16.msra.mxu0 0
      %2745 = vmatprep.subr.bf16.mxu0 0
      %2746 = vmatpush1.bf16.msra.mxu0 0
      %2747 = vmatprep.subr.bf16.mxu0 0
      %2748 = vmatpush1.bf16.msra.mxu0 0
      %2749 = vmatprep.subr.bf16.mxu0 0
      %2750 = vmatpush1.bf16.msra.mxu0 0
      %2751 = vmatprep.subr.bf16.mxu0 0
      %2752 = vmatpush1.bf16.msra.mxu0 0
      %2753 = vmatprep.mubr.bf16.mxu0 0
      %2754 = vmatmul.mubr.bf16.gmra.mrb[0].mxu0 %v849
      %v2755 = vpop.f32.mrb[0].mxu0
      %v2756 = vadd.f32 0.0, %v2755
      %v2757 = vpop.f32.mrb[0].mxu0
      %v2758 = vpop.f32.mrb[0].mxu0
      %v2759 = vadd.f32 0.0, %v2758
      %v2760 = vpop.f32.mrb[0].mxu0
      %2761 = vmatprep.mubr.bf16.mxu0 0
      %2762 = vmatmul.mubr.bf16.gmra.mrb[0].mxu0 %v850
      %v2763 = vpop.f32.mrb[0].mxu0
      %v2764 = vadd.f32 0.0, %v2763
      %v2765 = vpop.f32.mrb[0].mxu0
      %v2766 = vpop.f32.mrb[0].mxu0
      %v2767 = vadd.f32 0.0, %v2766
      %v2768 = vpop.f32.mrb[0].mxu0
      %2769 = vmatprep.mubr.bf16.mxu0 0
      %2770 = vmatmul.mubr.bf16.gmra.mrb[0].mxu0 %v851
      %v2771 = vpop.f32.mrb[0].mxu0
      %v2772 = vadd.f32 0.0, %v2771
      %v2773 = vpop.f32.mrb[0].mxu0
      %v2774 = vpop.f32.mrb[0].mxu0
      %v2775 = vadd.f32 0.0, %v2774
      %v2776 = vpop.f32.mrb[0].mxu0
      %2777 = vmatprep.mubr.bf16.mxu0 0
      %2778 = vmatmul.mubr.bf16.gmra.mrb[0].mxu0 %v852
      %v2779 = vpop.f32.mrb[0].mxu0
      %v2780 = vadd.f32 0.0, %v2779
      %v2781 = vpop.f32.mrb[0].mxu0
      %v2782 = vpop.f32.mrb[0].mxu0
      %v2783 = vadd.f32 0.0, %v2782
      %v2784 = vpop.f32.mrb[0].mxu0
      %2785 = vmatprep.mubr.bf16.mxu0 0
      %2786 = vmatmul.mubr.bf16.gmra.mrb[0].mxu0 %v853
      %v2787 = vpop.f32.mrb[0].mxu0
      %v2788 = vadd.f32 0.0, %v2787
      %v2789 = vpop.f32.mrb[0].mxu0
      %v2790 = vpop.f32.mrb[0].mxu0
      %v2791 = vadd.f32 0.0, %v2790
      %v2792 = vpop.f32.mrb[0].mxu0
      %2793 = vmatprep.mubr.bf16.mxu0 0
      %2794 = vmatmul.mubr.bf16.gmra.mrb[0].mxu0 %v854
      %v2795 = vpop.f32.mrb[0].mxu0
      %v2796 = vadd.f32 0.0, %v2795
      %v2797 = vpop.f32.mrb[0].mxu0
      %v2798 = vpop.f32.mrb[0].mxu0
      %v2799 = vadd.f32 0.0, %v2798
      %v2800 = vpop.f32.mrb[0].mxu0
      %2801 = vmatprep.mubr.bf16.mxu0 0
      %2802 = vmatmul.mubr.bf16.gmra.mrb[0].mxu0 %v855
      %v2803 = vpop.f32.mrb[0].mxu0
      %v2804 = vadd.f32 0.0, %v2803
      %v2805 = vpop.f32.mrb[0].mxu0
      %v2806 = vpop.f32.mrb[0].mxu0
      %v2807 = vadd.f32 0.0, %v2806
      %v2808 = vpop.f32.mrb[0].mxu0
      %2809 = vmatprep.mubr.bf16.mxu0 0
      %2810 = vmatmul.mubr.bf16.gmra.mrb[0].mxu0 %v856
      %v2811 = vpop.f32.mrb[0].mxu0
      %v2812 = vadd.f32 0.0, %v2811
      %v2813 = vpop.f32.mrb[0].mxu0
      %v2814 = vpop.f32.mrb[0].mxu0
      %v2815 = vadd.f32 0.0, %v2814
      %v2816 = vpop.f32.mrb[0].mxu0
      %2817 = vmatprep.mubr.bf16.mxu0 0
      %2818 = vmatmul.mubr.bf16.gmra.mrb[0].mxu0 %v857
      %v2819 = vpop.f32.mrb[0].mxu0
      %v2820 = vadd.f32 0.0, %v2819
      %v2821 = vpop.f32.mrb[0].mxu0
      %v2822 = vpop.f32.mrb[0].mxu0
      %v2823 = vadd.f32 0.0, %v2822
      %v2824 = vpop.f32.mrb[0].mxu0
      %2825 = vmatprep.mubr.bf16.mxu0 0
      %2826 = vmatmul.mubr.bf16.gmra.mrb[0].mxu0 %v858
      %v2827 = vpop.f32.mrb[0].mxu0
      %v2828 = vadd.f32 0.0, %v2827
      %v2829 = vpop.f32.mrb[0].mxu0
      %v2830 = vpop.f32.mrb[0].mxu0
      %v2831 = vadd.f32 0.0, %v2830
      %v2832 = vpop.f32.mrb[0].mxu0
      %2833 = vmatprep.mubr.bf16.mxu0 0
      %2834 = vmatmul.mubr.bf16.gmra.mrb[0].mxu0 %v859
      %v2835 = vpop.f32.mrb[0].mxu0
      %v2836 = vadd.f32 0.0, %v2835
      %v2837 = vpop.f32.mrb[0].mxu0
      %v2838 = vpop.f32.mrb[0].mxu0
      %v2839 = vadd.f32 0.0, %v2838
      %v2840 = vpop.f32.mrb[0].mxu0
      %2841 = vmatprep.mubr.bf16.mxu0 0
      %2842 = vmatmul.mubr.bf16.gmra.mrb[0].mxu0 %v860
      %v2843 = vpop.f32.mrb[0].mxu0
      %v2844 = vadd.f32 0.0, %v2843
      %v2845 = vpop.f32.mrb[0].mxu0
      %v2846 = vpop.f32.mrb[0].mxu0
      %v2847 = vadd.f32 0.0, %v2846
      %v2848 = vpop.f32.mrb[0].mxu0
      %2849 = vmatprep.mubr.bf16.mxu0 0
      %2850 = vmatmul.mubr.bf16.gmra.mrb[0].mxu0 %v861
      %v2851 = vpop.f32.mrb[0].mxu0
      %v2852 = vadd.f32 0.0, %v2851
      %v2853 = vpop.f32.mrb[0].mxu0
      %v2854 = vpop.f32.mrb[0].mxu0
      %v2855 = vadd.f32 0.0, %v2854
      %v2856 = vpop.f32.mrb[0].mxu0
      %2857 = vmatprep.mubr.bf16.mxu0 0
      %2858 = vmatmul.mubr.bf16.gmra.mrb[0].mxu0 %v862
      %v2859 = vpop.f32.mrb[0].mxu0
      %v2860 = vadd.f32 0.0, %v2859
      %v2861 = vpop.f32.mrb[0].mxu0
      %v2862 = vpop.f32.mrb[0].mxu0
      %v2863 = vadd.f32 0.0, %v2862
      %v2864 = vpop.f32.mrb[0].mxu0
      %2865 = vmatprep.mubr.bf16.mxu0 0
      %2866 = vmatmul.mubr.bf16.gmra.mrb[0].mxu0 %v1862
      %v2867 = vpop.f32.mrb[0].mxu0
      %v2868 = vadd.f32 0.0, %v2867
      %v2869 = vpop.f32.mrb[0].mxu0
      %v2870 = vpop.f32.mrb[0].mxu0
      %v2871 = vadd.f32 0.0, %v2870
      %v2872 = vpop.f32.mrb[0].mxu0
      %2873 = vmatprep.mubr.bf16.mxu0 0
      %2874 = vmatmul.mubr.bf16.gmra.mrb[0].mxu0 %v2655
      %v2875 = vpop.f32.mrb[0].mxu0
      %v2876 = vadd.f32 0.0, %v2875
      %v2877 = vpop.f32.mrb[0].mxu0
      %v2878 = vpop.f32.mrb[0].mxu0
      %v2879 = vadd.f32 0.0, %v2878
      %v2880 = vpop.f32.mrb[0].mxu0
      %2881 = vdwg.mxu0
      %v2882 = vadd.f32 %v2623, %v2756
      %v2883 = vadd.f32 %v2624, %v2759
      %v2884 = vadd.f32 %v2625, %v2764
      %v2885 = vadd.f32 %v2626, %v2767
      %v2886 = vadd.f32 %v2627, %v2772
      %v2887 = vadd.f32 %v2628, %v2775
      %v2888 = vadd.f32 %v2629, %v2780
      %v2889 = vadd.f32 %v2630, %v2783
      %v2890 = vadd.f32 %v2631, %v2788
      %v2891 = vadd.f32 %v2632, %v2791
      %v2892 = vadd.f32 %v2633, %v2796
      %v2893 = vadd.f32 %v2634, %v2799
      %v2894 = vadd.f32 %v2635, %v2804
      %v2895 = vadd.f32 %v2636, %v2807
      %v2896 = vadd.f32 %v2637, %v2812
      %v2897 = vadd.f32 %v2638, %v2815
      %v2898 = vadd.f32 %v2639, %v2820
      %v2899 = vadd.f32 %v2640, %v2823
      %v2900 = vadd.f32 %v2641, %v2828
      %v2901 = vadd.f32 %v2642, %v2831
      %v2902 = vadd.f32 %v2643, %v2836
      %v2903 = vadd.f32 %v2644, %v2839
      %v2904 = vadd.f32 %v2645, %v2844
      %v2905 = vadd.f32 %v2646, %v2847
      %v2906 = vadd.f32 %v2647, %v2852
      %v2907 = vadd.f32 %v2648, %v2855
      %v2908 = vadd.f32 %v2649, %v2860
      %v2909 = vadd.f32 %v2650, %v2863
      %v2910 = vadd.f32 %v2651, %v2868
      %v2911 = vadd.f32 %v2652, %v2871
      %v2912 = vadd.f32 %v2653, %v2876
      %v2913 = vadd.f32 %v2654, %v2879
      %v2916 = vrot.slane %v828, 1
      %v2917 = vrot.slane %v756, 1
      %v2918 = vsel %vm911, %v2916, %v2917
      %v2919 = vrot.slane %v846, 1
      %v2920 = vsel %vm911, %v2917, %v2919
      %v2923 = vpack.c.bf16 %v2920, %v2918
      %s2924 = scalar_lea.vmem %s3, 448
      %v2925 = vld [vmem:[%s2924] sm:$0xf]
      %v2926 = vld [vmem:[%s2924 + $0x4] sm:$0xf]
      %v2927 = vld [vmem:[%s2924 + $0x8] sm:$0xf]
      %v2928 = vld [vmem:[%s2924 + $0xc] sm:$0xf]
      %v2929 = vld [vmem:[%s2924 + $0x10] sm:$0xf]
      %v2930 = vld [vmem:[%s2924 + $0x14] sm:$0xf]
      %v2931 = vld [vmem:[%s2924 + $0x18] sm:$0xf]
      %v2932 = vld [vmem:[%s2924 + $0x1c] sm:$0xf]
      %v2933 = vld [vmem:[%s2924 + $0x20] sm:$0xf]
      %v2934 = vld [vmem:[%s2924 + $0x24] sm:$0xf]
      %v2935 = vld [vmem:[%s2924 + $0x28] sm:$0xf]
      %v2936 = vld [vmem:[%s2924 + $0x2c] sm:$0xf]
      %v2937 = vld [vmem:[%s2924 + $0x30] sm:$0xf]
      %v2938 = vld [vmem:[%s2924 + $0x34] sm:$0xf]
      %v2939 = vld [vmem:[%s2924 + $0x38] sm:$0xf]
      %v2940 = vld [vmem:[%s2924 + $0x3c] sm:$0xf]
      %v2957 = vunpack.c.l.b16 %v2925
      %v2958 = vunpack.c.l.b16 %v2926
      %v2959 = vunpack.c.l.b16 %v2927
      %v2960 = vunpack.c.l.b16 %v2928
      %v2961 = vunpack.c.l.b16 %v2929
      %v2962 = vunpack.c.l.b16 %v2930
      %v2963 = vunpack.c.l.b16 %v2931
      %v2964 = vunpack.c.l.b16 %v2932
      %v2965 = vunpack.c.l.b16 %v2933
      %v2966 = vunpack.c.l.b16 %v2934
      %v2967 = vunpack.c.l.b16 %v2935
      %v2968 = vunpack.c.l.b16 %v2936
      %v2969 = vunpack.c.l.b16 %v2937
      %v2970 = vunpack.c.l.b16 %v2938
      %v2971 = vunpack.c.l.b16 %v2939
      %v2972 = vunpack.c.l.b16 %v2940
      %v2973 = vpack.c.b16 %v2958, %v2957
      %v2974 = vpack.c.b16 %v2960, %v2959
      %v2975 = vpack.c.b16 %v2962, %v2961
      %v2976 = vpack.c.b16 %v2964, %v2963
      %v2977 = vpack.c.b16 %v2966, %v2965
      %v2978 = vpack.c.b16 %v2968, %v2967
      %v2979 = vpack.c.b16 %v2970, %v2969
      %v2980 = vpack.c.b16 %v2972, %v2971
      %2989 = vmatprep.subr.bf16.mxu0 0
      %2990 = vmatpush1.bf16.msra.mxu0 %v2973
      %2991 = vmatprep.subr.bf16.mxu0 0
      %2992 = vmatpush1.bf16.msra.mxu0 %v2974
      %2993 = vmatprep.subr.bf16.mxu0 0
      %2994 = vmatpush1.bf16.msra.mxu0 %v2975
      %2995 = vmatprep.subr.bf16.mxu0 0
      %2996 = vmatpush1.bf16.msra.mxu0 %v2976
      %2997 = vmatprep.subr.bf16.mxu0 0
      %2998 = vmatpush1.bf16.msra.mxu0 %v2977
      %2999 = vmatprep.subr.bf16.mxu0 0
      %3000 = vmatpush1.bf16.msra.mxu0 %v2978
      %3001 = vmatprep.subr.bf16.mxu0 0
      %3002 = vmatpush1.bf16.msra.mxu0 %v2979
      %3003 = vmatprep.subr.bf16.mxu0 0
      %3004 = vmatpush1.bf16.msra.mxu0 %v2980
      %3005 = vmatprep.subr.bf16.mxu0 0
      %3006 = vmatpush1.bf16.msra.mxu0 0
      %3007 = vmatprep.subr.bf16.mxu0 0
      %3008 = vmatpush1.bf16.msra.mxu0 0
      %3009 = vmatprep.subr.bf16.mxu0 0
      %3010 = vmatpush1.bf16.msra.mxu0 0
      %3011 = vmatprep.subr.bf16.mxu0 0
      %3012 = vmatpush1.bf16.msra.mxu0 0
      %3013 = vmatprep.subr.bf16.mxu0 0
      %3014 = vmatpush1.bf16.msra.mxu0 0
      %3015 = vmatprep.subr.bf16.mxu0 0
      %3016 = vmatpush1.bf16.msra.mxu0 0
      %3017 = vmatprep.subr.bf16.mxu0 0
      %3018 = vmatpush1.bf16.msra.mxu0 0
      %3019 = vmatprep.subr.bf16.mxu0 0
      %3020 = vmatpush1.bf16.msra.mxu0 0
      %3021 = vmatprep.mubr.bf16.mxu0 0
      %3022 = vmatmul.mubr.bf16.gmra.mrb[0].mxu0 %v1026
      %v3023 = vpop.f32.mrb[0].mxu0
      %v3024 = vadd.f32 0.0, %v3023
      %v3025 = vpop.f32.mrb[0].mxu0
      %v3026 = vpop.f32.mrb[0].mxu0
      %v3027 = vadd.f32 0.0, %v3026
      %v3028 = vpop.f32.mrb[0].mxu0
      %3029 = vmatprep.mubr.bf16.mxu0 0
      %3030 = vmatmul.mubr.bf16.gmra.mrb[0].mxu0 %v1027
      %v3031 = vpop.f32.mrb[0].mxu0
      %v3032 = vadd.f32 0.0, %v3031
      %v3033 = vpop.f32.mrb[0].mxu0
      %v3034 = vpop.f32.mrb[0].mxu0
      %v3035 = vadd.f32 0.0, %v3034
      %v3036 = vpop.f32.mrb[0].mxu0
      %3037 = vmatprep.mubr.bf16.mxu0 0
      %3038 = vmatmul.mubr.bf16.gmra.mrb[0].mxu0 %v1028
      %v3039 = vpop.f32.mrb[0].mxu0
      %v3040 = vadd.f32 0.0, %v3039
      %v3041 = vpop.f32.mrb[0].mxu0
      %v3042 = vpop.f32.mrb[0].mxu0
      %v3043 = vadd.f32 0.0, %v3042
      %v3044 = vpop.f32.mrb[0].mxu0
      %3045 = vmatprep.mubr.bf16.mxu0 0
      %3046 = vmatmul.mubr.bf16.gmra.mrb[0].mxu0 %v1029
      %v3047 = vpop.f32.mrb[0].mxu0
      %v3048 = vadd.f32 0.0, %v3047
      %v3049 = vpop.f32.mrb[0].mxu0
      %v3050 = vpop.f32.mrb[0].mxu0
      %v3051 = vadd.f32 0.0, %v3050
      %v3052 = vpop.f32.mrb[0].mxu0
      %3053 = vmatprep.mubr.bf16.mxu0 0
      %3054 = vmatmul.mubr.bf16.gmra.mrb[0].mxu0 %v1030
      %v3055 = vpop.f32.mrb[0].mxu0
      %v3056 = vadd.f32 0.0, %v3055
      %v3057 = vpop.f32.mrb[0].mxu0
      %v3058 = vpop.f32.mrb[0].mxu0
      %v3059 = vadd.f32 0.0, %v3058
      %v3060 = vpop.f32.mrb[0].mxu0
      %3061 = vmatprep.mubr.bf16.mxu0 0
      %3062 = vmatmul.mubr.bf16.gmra.mrb[0].mxu0 %v1031
      %v3063 = vpop.f32.mrb[0].mxu0
      %v3064 = vadd.f32 0.0, %v3063
      %v3065 = vpop.f32.mrb[0].mxu0
      %v3066 = vpop.f32.mrb[0].mxu0
      %v3067 = vadd.f32 0.0, %v3066
      %v3068 = vpop.f32.mrb[0].mxu0
      %3069 = vmatprep.mubr.bf16.mxu0 0
      %3070 = vmatmul.mubr.bf16.gmra.mrb[0].mxu0 %v1032
      %v3071 = vpop.f32.mrb[0].mxu0
      %v3072 = vadd.f32 0.0, %v3071
      %v3073 = vpop.f32.mrb[0].mxu0
      %v3074 = vpop.f32.mrb[0].mxu0
      %v3075 = vadd.f32 0.0, %v3074
      %v3076 = vpop.f32.mrb[0].mxu0
      %3077 = vmatprep.mubr.bf16.mxu0 0
      %3078 = vmatmul.mubr.bf16.gmra.mrb[0].mxu0 %v1033
      %v3079 = vpop.f32.mrb[0].mxu0
      %v3080 = vadd.f32 0.0, %v3079
      %v3081 = vpop.f32.mrb[0].mxu0
      %v3082 = vpop.f32.mrb[0].mxu0
      %v3083 = vadd.f32 0.0, %v3082
      %v3084 = vpop.f32.mrb[0].mxu0
      %3085 = vmatprep.mubr.bf16.mxu0 0
      %3086 = vmatmul.mubr.bf16.gmra.mrb[0].mxu0 %v1034
      %v3087 = vpop.f32.mrb[0].mxu0
      %v3088 = vadd.f32 0.0, %v3087
      %v3089 = vpop.f32.mrb[0].mxu0
      %v3090 = vpop.f32.mrb[0].mxu0
      %v3091 = vadd.f32 0.0, %v3090
      %v3092 = vpop.f32.mrb[0].mxu0
      %3093 = vmatprep.mubr.bf16.mxu0 0
      %3094 = vmatmul.mubr.bf16.gmra.mrb[0].mxu0 %v1035
      %v3095 = vpop.f32.mrb[0].mxu0
      %v3096 = vadd.f32 0.0, %v3095
      %v3097 = vpop.f32.mrb[0].mxu0
      %v3098 = vpop.f32.mrb[0].mxu0
      %v3099 = vadd.f32 0.0, %v3098
      %v3100 = vpop.f32.mrb[0].mxu0
      %3101 = vmatprep.mubr.bf16.mxu0 0
      %3102 = vmatmul.mubr.bf16.gmra.mrb[0].mxu0 %v1036
      %v3103 = vpop.f32.mrb[0].mxu0
      %v3104 = vadd.f32 0.0, %v3103
      %v3105 = vpop.f32.mrb[0].mxu0
      %v3106 = vpop.f32.mrb[0].mxu0
      %v3107 = vadd.f32 0.0, %v3106
      %v3108 = vpop.f32.mrb[0].mxu0
      %3109 = vmatprep.mubr.bf16.mxu0 0
      %3110 = vmatmul.mubr.bf16.gmra.mrb[0].mxu0 %v1037
      %v3111 = vpop.f32.mrb[0].mxu0
      %v3112 = vadd.f32 0.0, %v3111
      %v3113 = vpop.f32.mrb[0].mxu0
      %v3114 = vpop.f32.mrb[0].mxu0
      %v3115 = vadd.f32 0.0, %v3114
      %v3116 = vpop.f32.mrb[0].mxu0
      %3117 = vmatprep.mubr.bf16.mxu0 0
      %3118 = vmatmul.mubr.bf16.gmra.mrb[0].mxu0 %v1038
      %v3119 = vpop.f32.mrb[0].mxu0
      %v3120 = vadd.f32 0.0, %v3119
      %v3121 = vpop.f32.mrb[0].mxu0
      %v3122 = vpop.f32.mrb[0].mxu0
      %v3123 = vadd.f32 0.0, %v3122
      %v3124 = vpop.f32.mrb[0].mxu0
      %3125 = vmatprep.mubr.bf16.mxu0 0
      %3126 = vmatmul.mubr.bf16.gmra.mrb[0].mxu0 %v1039
      %v3127 = vpop.f32.mrb[0].mxu0
      %v3128 = vadd.f32 0.0, %v3127
      %v3129 = vpop.f32.mrb[0].mxu0
      %v3130 = vpop.f32.mrb[0].mxu0
      %v3131 = vadd.f32 0.0, %v3130
      %v3132 = vpop.f32.mrb[0].mxu0
      %3133 = vmatprep.mubr.bf16.mxu0 0
      %3134 = vmatmul.mubr.bf16.gmra.mrb[0].mxu0 %v2130
      %v3135 = vpop.f32.mrb[0].mxu0
      %v3136 = vadd.f32 0.0, %v3135
      %v3137 = vpop.f32.mrb[0].mxu0
      %v3138 = vpop.f32.mrb[0].mxu0
      %v3139 = vadd.f32 0.0, %v3138
      %v3140 = vpop.f32.mrb[0].mxu0
      %3141 = vmatprep.mubr.bf16.mxu0 0
      %3142 = vmatmul.mubr.bf16.gmra.mrb[0].mxu0 %v2923
      %v3143 = vpop.f32.mrb[0].mxu0
      %v3144 = vadd.f32 0.0, %v3143
      %v3145 = vpop.f32.mrb[0].mxu0
      %v3146 = vpop.f32.mrb[0].mxu0
      %v3147 = vadd.f32 0.0, %v3146
      %v3148 = vpop.f32.mrb[0].mxu0
      %3149 = vdwg.mxu0
      %v3150 = vadd.f32 %v2882, %v3024
      %v3151 = vadd.f32 %v2883, %v3027
      %v3152 = vadd.f32 %v2884, %v3032
      %v3153 = vadd.f32 %v2885, %v3035
      %v3154 = vadd.f32 %v2886, %v3040
      %v3155 = vadd.f32 %v2887, %v3043
      %v3156 = vadd.f32 %v2888, %v3048
      %v3157 = vadd.f32 %v2889, %v3051
      %v3158 = vadd.f32 %v2890, %v3056
      %v3159 = vadd.f32 %v2891, %v3059
      %v3160 = vadd.f32 %v2892, %v3064
      %v3161 = vadd.f32 %v2893, %v3067
      %v3162 = vadd.f32 %v2894, %v3072
      %v3163 = vadd.f32 %v2895, %v3075
      %v3164 = vadd.f32 %v2896, %v3080
      %v3165 = vadd.f32 %v2897, %v3083
      %v3166 = vadd.f32 %v2898, %v3088
      %v3167 = vadd.f32 %v2899, %v3091
      %v3168 = vadd.f32 %v2900, %v3096
      %v3169 = vadd.f32 %v2901, %v3099
      %v3170 = vadd.f32 %v2902, %v3104
      %v3171 = vadd.f32 %v2903, %v3107
      %v3172 = vadd.f32 %v2904, %v3112
      %v3173 = vadd.f32 %v2905, %v3115
      %v3174 = vadd.f32 %v2906, %v3120
      %v3175 = vadd.f32 %v2907, %v3123
      %v3176 = vadd.f32 %v2908, %v3128
      %v3177 = vadd.f32 %v2909, %v3131
      %v3178 = vadd.f32 %v2910, %v3136
      %v3179 = vadd.f32 %v2911, %v3139
      %v3180 = vadd.f32 %v2912, %v3144
      %v3181 = vadd.f32 %v2913, %v3147
      %v3182 = vrot.slane %v828, 2
      %v3183 = vrot.slane %v756, 2
      %v3184 = vsel %vm1475, %v3182, %v3183
      %v3185 = vrot.slane %v846, 2
      %v3186 = vsel %vm1475, %v3183, %v3185
      %v3189 = vpack.c.bf16 %v3186, %v3184
      %s3190 = scalar_lea.vmem %s3, 512
      %v3191 = vld [vmem:[%s3190] sm:$0xf]
      %v3192 = vld [vmem:[%s3190 + $0x4] sm:$0xf]
      %v3193 = vld [vmem:[%s3190 + $0x8] sm:$0xf]
      %v3194 = vld [vmem:[%s3190 + $0xc] sm:$0xf]
      %v3195 = vld [vmem:[%s3190 + $0x10] sm:$0xf]
      %v3196 = vld [vmem:[%s3190 + $0x14] sm:$0xf]
      %v3197 = vld [vmem:[%s3190 + $0x18] sm:$0xf]
      %v3198 = vld [vmem:[%s3190 + $0x1c] sm:$0xf]
      %v3199 = vld [vmem:[%s3190 + $0x20] sm:$0xf]
      %v3200 = vld [vmem:[%s3190 + $0x24] sm:$0xf]
      %v3201 = vld [vmem:[%s3190 + $0x28] sm:$0xf]
      %v3202 = vld [vmem:[%s3190 + $0x2c] sm:$0xf]
      %v3203 = vld [vmem:[%s3190 + $0x30] sm:$0xf]
      %v3204 = vld [vmem:[%s3190 + $0x34] sm:$0xf]
      %v3205 = vld [vmem:[%s3190 + $0x38] sm:$0xf]
      %v3206 = vld [vmem:[%s3190 + $0x3c] sm:$0xf]
      %v3223 = vunpack.c.l.b16 %v3191
      %v3224 = vunpack.c.l.b16 %v3192
      %v3225 = vunpack.c.l.b16 %v3193
      %v3226 = vunpack.c.l.b16 %v3194
      %v3227 = vunpack.c.l.b16 %v3195
      %v3228 = vunpack.c.l.b16 %v3196
      %v3229 = vunpack.c.l.b16 %v3197
      %v3230 = vunpack.c.l.b16 %v3198
      %v3231 = vunpack.c.l.b16 %v3199
      %v3232 = vunpack.c.l.b16 %v3200
      %v3233 = vunpack.c.l.b16 %v3201
      %v3234 = vunpack.c.l.b16 %v3202
      %v3235 = vunpack.c.l.b16 %v3203
      %v3236 = vunpack.c.l.b16 %v3204
      %v3237 = vunpack.c.l.b16 %v3205
      %v3238 = vunpack.c.l.b16 %v3206
      %v3239 = vpack.c.b16 %v3224, %v3223
      %v3240 = vpack.c.b16 %v3226, %v3225
      %v3241 = vpack.c.b16 %v3228, %v3227
      %v3242 = vpack.c.b16 %v3230, %v3229
      %v3243 = vpack.c.b16 %v3232, %v3231
      %v3244 = vpack.c.b16 %v3234, %v3233
      %v3245 = vpack.c.b16 %v3236, %v3235
      %v3246 = vpack.c.b16 %v3238, %v3237
      %3255 = vmatprep.subr.bf16.mxu0 0
      %3256 = vmatpush1.bf16.msra.mxu0 %v3239
      %3257 = vmatprep.subr.bf16.mxu0 0
      %3258 = vmatpush1.bf16.msra.mxu0 %v3240
      %3259 = vmatprep.subr.bf16.mxu0 0
      %3260 = vmatpush1.bf16.msra.mxu0 %v3241
      %3261 = vmatprep.subr.bf16.mxu0 0
      %3262 = vmatpush1.bf16.msra.mxu0 %v3242
      %3263 = vmatprep.subr.bf16.mxu0 0
      %3264 = vmatpush1.bf16.msra.mxu0 %v3243
      %3265 = vmatprep.subr.bf16.mxu0 0
      %3266 = vmatpush1.bf16.msra.mxu0 %v3244
      %3267 = vmatprep.subr.bf16.mxu0 0
      %3268 = vmatpush1.bf16.msra.mxu0 %v3245
      %3269 = vmatprep.subr.bf16.mxu0 0
      %3270 = vmatpush1.bf16.msra.mxu0 %v3246
      %3271 = vmatprep.subr.bf16.mxu0 0
      %3272 = vmatpush1.bf16.msra.mxu0 0
      %3273 = vmatprep.subr.bf16.mxu0 0
      %3274 = vmatpush1.bf16.msra.mxu0 0
      %3275 = vmatprep.subr.bf16.mxu0 0
      %3276 = vmatpush1.bf16.msra.mxu0 0
      %3277 = vmatprep.subr.bf16.mxu0 0
      %3278 = vmatpush1.bf16.msra.mxu0 0
      %3279 = vmatprep.subr.bf16.mxu0 0
      %3280 = vmatpush1.bf16.msra.mxu0 0
      %3281 = vmatprep.subr.bf16.mxu0 0
      %3282 = vmatpush1.bf16.msra.mxu0 0
      %3283 = vmatprep.subr.bf16.mxu0 0
      %3284 = vmatpush1.bf16.msra.mxu0 0
      %3285 = vmatprep.subr.bf16.mxu0 0
      %3286 = vmatpush1.bf16.msra.mxu0 0
      %3287 = vmatprep.mubr.bf16.mxu0 0
      %3288 = vmatmul.mubr.bf16.gmra.mrb[0].mxu0 %v1590
      %v3289 = vpop.f32.mrb[0].mxu0
      %v3290 = vadd.f32 0.0, %v3289
      %v3291 = vpop.f32.mrb[0].mxu0
      %v3292 = vpop.f32.mrb[0].mxu0
      %v3293 = vadd.f32 0.0, %v3292
      %v3294 = vpop.f32.mrb[0].mxu0
      %3295 = vmatprep.mubr.bf16.mxu0 0
      %3296 = vmatmul.mubr.bf16.gmra.mrb[0].mxu0 %v1591
      %v3297 = vpop.f32.mrb[0].mxu0
      %v3298 = vadd.f32 0.0, %v3297
      %v3299 = vpop.f32.mrb[0].mxu0
      %v3300 = vpop.f32.mrb[0].mxu0
      %v3301 = vadd.f32 0.0, %v3300
      %v3302 = vpop.f32.mrb[0].mxu0
      %3303 = vmatprep.mubr.bf16.mxu0 0
      %3304 = vmatmul.mubr.bf16.gmra.mrb[0].mxu0 %v1592
      %v3305 = vpop.f32.mrb[0].mxu0
      %v3306 = vadd.f32 0.0, %v3305
      %v3307 = vpop.f32.mrb[0].mxu0
      %v3308 = vpop.f32.mrb[0].mxu0
      %v3309 = vadd.f32 0.0, %v3308
      %v3310 = vpop.f32.mrb[0].mxu0
      %3311 = vmatprep.mubr.bf16.mxu0 0
      %3312 = vmatmul.mubr.bf16.gmra.mrb[0].mxu0 %v1593
      %v3313 = vpop.f32.mrb[0].mxu0
      %v3314 = vadd.f32 0.0, %v3313
      %v3315 = vpop.f32.mrb[0].mxu0
      %v3316 = vpop.f32.mrb[0].mxu0
      %v3317 = vadd.f32 0.0, %v3316
      %v3318 = vpop.f32.mrb[0].mxu0
      %3319 = vmatprep.mubr.bf16.mxu0 0
      %3320 = vmatmul.mubr.bf16.gmra.mrb[0].mxu0 %v1594
      %v3321 = vpop.f32.mrb[0].mxu0
      %v3322 = vadd.f32 0.0, %v3321
      %v3323 = vpop.f32.mrb[0].mxu0
      %v3324 = vpop.f32.mrb[0].mxu0
      %v3325 = vadd.f32 0.0, %v3324
      %v3326 = vpop.f32.mrb[0].mxu0
      %3327 = vmatprep.mubr.bf16.mxu0 0
      %3328 = vmatmul.mubr.bf16.gmra.mrb[0].mxu0 %v1595
      %v3329 = vpop.f32.mrb[0].mxu0
      %v3330 = vadd.f32 0.0, %v3329
      %v3331 = vpop.f32.mrb[0].mxu0
      %v3332 = vpop.f32.mrb[0].mxu0
      %v3333 = vadd.f32 0.0, %v3332
      %v3334 = vpop.f32.mrb[0].mxu0
      %3335 = vmatprep.mubr.bf16.mxu0 0
      %3336 = vmatmul.mubr.bf16.gmra.mrb[0].mxu0 %v1596
      %v3337 = vpop.f32.mrb[0].mxu0
      %v3338 = vadd.f32 0.0, %v3337
      %v3339 = vpop.f32.mrb[0].mxu0
      %v3340 = vpop.f32.mrb[0].mxu0
      %v3341 = vadd.f32 0.0, %v3340
      %v3342 = vpop.f32.mrb[0].mxu0
      %3343 = vmatprep.mubr.bf16.mxu0 0
      %3344 = vmatmul.mubr.bf16.gmra.mrb[0].mxu0 %v1597
      %v3345 = vpop.f32.mrb[0].mxu0
      %v3346 = vadd.f32 0.0, %v3345
      %v3347 = vpop.f32.mrb[0].mxu0
      %v3348 = vpop.f32.mrb[0].mxu0
      %v3349 = vadd.f32 0.0, %v3348
      %v3350 = vpop.f32.mrb[0].mxu0
      %3351 = vmatprep.mubr.bf16.mxu0 0
      %3352 = vmatmul.mubr.bf16.gmra.mrb[0].mxu0 %v1598
      %v3353 = vpop.f32.mrb[0].mxu0
      %v3354 = vadd.f32 0.0, %v3353
      %v3355 = vpop.f32.mrb[0].mxu0
      %v3356 = vpop.f32.mrb[0].mxu0
      %v3357 = vadd.f32 0.0, %v3356
      %v3358 = vpop.f32.mrb[0].mxu0
      %3359 = vmatprep.mubr.bf16.mxu0 0
      %3360 = vmatmul.mubr.bf16.gmra.mrb[0].mxu0 %v1599
      %v3361 = vpop.f32.mrb[0].mxu0
      %v3362 = vadd.f32 0.0, %v3361
      %v3363 = vpop.f32.mrb[0].mxu0
      %v3364 = vpop.f32.mrb[0].mxu0
      %v3365 = vadd.f32 0.0, %v3364
      %v3366 = vpop.f32.mrb[0].mxu0
      %3367 = vmatprep.mubr.bf16.mxu0 0
      %3368 = vmatmul.mubr.bf16.gmra.mrb[0].mxu0 %v1600
      %v3369 = vpop.f32.mrb[0].mxu0
      %v3370 = vadd.f32 0.0, %v3369
      %v3371 = vpop.f32.mrb[0].mxu0
      %v3372 = vpop.f32.mrb[0].mxu0
      %v3373 = vadd.f32 0.0, %v3372
      %v3374 = vpop.f32.mrb[0].mxu0
      %3375 = vmatprep.mubr.bf16.mxu0 0
      %3376 = vmatmul.mubr.bf16.gmra.mrb[0].mxu0 %v1601
      %v3377 = vpop.f32.mrb[0].mxu0
      %v3378 = vadd.f32 0.0, %v3377
      %v3379 = vpop.f32.mrb[0].mxu0
      %v3380 = vpop.f32.mrb[0].mxu0
      %v3381 = vadd.f32 0.0, %v3380
      %v3382 = vpop.f32.mrb[0].mxu0
      %3383 = vmatprep.mubr.bf16.mxu0 0
      %3384 = vmatmul.mubr.bf16.gmra.mrb[0].mxu0 %v1602
      %v3385 = vpop.f32.mrb[0].mxu0
      %v3386 = vadd.f32 0.0, %v3385
      %v3387 = vpop.f32.mrb[0].mxu0
      %v3388 = vpop.f32.mrb[0].mxu0
      %v3389 = vadd.f32 0.0, %v3388
      %v3390 = vpop.f32.mrb[0].mxu0
      %3391 = vmatprep.mubr.bf16.mxu0 0
      %3392 = vmatmul.mubr.bf16.gmra.mrb[0].mxu0 %v1603
      %v3393 = vpop.f32.mrb[0].mxu0
      %v3394 = vadd.f32 0.0, %v3393
      %v3395 = vpop.f32.mrb[0].mxu0
      %v3396 = vpop.f32.mrb[0].mxu0
      %v3397 = vadd.f32 0.0, %v3396
      %v3398 = vpop.f32.mrb[0].mxu0
      %3399 = vmatprep.mubr.bf16.mxu0 0
      %3400 = vmatmul.mubr.bf16.gmra.mrb[0].mxu0 %v2396
      %v3401 = vpop.f32.mrb[0].mxu0
      %v3402 = vadd.f32 0.0, %v3401
      %v3403 = vpop.f32.mrb[0].mxu0
      %v3404 = vpop.f32.mrb[0].mxu0
      %v3405 = vadd.f32 0.0, %v3404
      %v3406 = vpop.f32.mrb[0].mxu0
      %3407 = vmatprep.mubr.bf16.mxu0 0
      %3408 = vmatmul.mubr.bf16.gmra.mrb[0].mxu0 %v3189
      %v3409 = vpop.f32.mrb[0].mxu0
      %v3410 = vadd.f32 0.0, %v3409
      %v3411 = vpop.f32.mrb[0].mxu0
      %v3412 = vpop.f32.mrb[0].mxu0
      %v3413 = vadd.f32 0.0, %v3412
      %v3414 = vpop.f32.mrb[0].mxu0
      %3415 = vdwg.mxu0
      %v3416 = vadd.f32 %v3150, %v3290
      %v3417 = vadd.f32 %v3151, %v3293
      %v3418 = vadd.f32 %v3152, %v3298
      %v3419 = vadd.f32 %v3153, %v3301
      %v3420 = vadd.f32 %v3154, %v3306
      %v3421 = vadd.f32 %v3155, %v3309
      %v3422 = vadd.f32 %v3156, %v3314
      %v3423 = vadd.f32 %v3157, %v3317
      %v3424 = vadd.f32 %v3158, %v3322
      %v3425 = vadd.f32 %v3159, %v3325
      %v3426 = vadd.f32 %v3160, %v3330
      %v3427 = vadd.f32 %v3161, %v3333
      %v3428 = vadd.f32 %v3162, %v3338
      %v3429 = vadd.f32 %v3163, %v3341
      %v3430 = vadd.f32 %v3164, %v3346
      %v3431 = vadd.f32 %v3165, %v3349
      %v3432 = vadd.f32 %v3166, %v3354
      %v3433 = vadd.f32 %v3167, %v3357
      %v3434 = vadd.f32 %v3168, %v3362
      %v3435 = vadd.f32 %v3169, %v3365
      %v3436 = vadd.f32 %v3170, %v3370
      %v3437 = vadd.f32 %v3171, %v3373
      %v3438 = vadd.f32 %v3172, %v3378
      %v3439 = vadd.f32 %v3173, %v3381
      %v3440 = vadd.f32 %v3174, %v3386
      %v3441 = vadd.f32 %v3175, %v3389
      %v3442 = vadd.f32 %v3176, %v3394
      %v3443 = vadd.f32 %v3177, %v3397
      %v3444 = vadd.f32 %v3178, %v3402
      %v3445 = vadd.f32 %v3179, %v3405
      %v3446 = vadd.f32 %v3180, %v3410
      %v3447 = vadd.f32 %v3181, %v3413
      %v3448 = vpack.c.bf16 %v3417, %v3416
      %v3449 = vpack.c.bf16 %v3419, %v3418
      %v3450 = vpack.c.bf16 %v3421, %v3420
      %v3451 = vpack.c.bf16 %v3423, %v3422
      %v3452 = vpack.c.bf16 %v3425, %v3424
      %v3453 = vpack.c.bf16 %v3427, %v3426
      %v3454 = vpack.c.bf16 %v3429, %v3428
      %v3455 = vpack.c.bf16 %v3431, %v3430
      %v3456 = vpack.c.bf16 %v3433, %v3432
      %v3457 = vpack.c.bf16 %v3435, %v3434
      %v3458 = vpack.c.bf16 %v3437, %v3436
      %v3459 = vpack.c.bf16 %v3439, %v3438
      %v3460 = vpack.c.bf16 %v3441, %v3440
      %v3461 = vpack.c.bf16 %v3443, %v3442
      %v3462 = vpack.c.bf16 %v3445, %v3444
      %v3463 = vpack.c.bf16 %v3447, %v3446
      %v3480 = vunpack.c.l.b16 %v3448
      %v3481 = vunpack.c.h.b16 %v3448
      %v3482 = vunpack.c.l.b16 %v3449
      %v3483 = vunpack.c.h.b16 %v3449
      %v3484 = vunpack.c.l.b16 %v3450
      %v3485 = vunpack.c.h.b16 %v3450
      %v3486 = vunpack.c.l.b16 %v3451
      %v3487 = vunpack.c.h.b16 %v3451
      %v3488 = vunpack.c.l.b16 %v3452
      %v3489 = vunpack.c.h.b16 %v3452
      %v3490 = vunpack.c.l.b16 %v3453
      %v3491 = vunpack.c.h.b16 %v3453
      %v3492 = vunpack.c.l.b16 %v3454
      %v3493 = vunpack.c.h.b16 %v3454
      %v3494 = vunpack.c.l.b16 %v3455
      %v3495 = vunpack.c.h.b16 %v3455
      %v3496 = vunpack.c.l.b16 %v3456
      %v3497 = vunpack.c.h.b16 %v3456
      %v3498 = vunpack.c.l.b16 %v3457
      %v3499 = vunpack.c.h.b16 %v3457
      %v3500 = vunpack.c.l.b16 %v3458
      %v3501 = vunpack.c.h.b16 %v3458
      %v3502 = vunpack.c.l.b16 %v3459
      %v3503 = vunpack.c.h.b16 %v3459
      %v3504 = vunpack.c.l.b16 %v3460
      %v3505 = vunpack.c.h.b16 %v3460
      %v3506 = vunpack.c.l.b16 %v3461
      %v3507 = vunpack.c.h.b16 %v3461
      %v3508 = vunpack.c.l.b16 %v3462
      %v3509 = vunpack.c.h.b16 %v3462
      %v3510 = vunpack.c.l.b16 %v3463
      %v3511 = vunpack.c.h.b16 %v3463
      %v3512 = vpack.c.b16 %v3480, %v3480
      %v3513 = vpack.c.b16 %v3481, %v3481
      %v3514 = vpack.c.b16 %v3482, %v3482
      %v3515 = vpack.c.b16 %v3483, %v3483
      %v3516 = vpack.c.b16 %v3484, %v3484
      %v3517 = vpack.c.b16 %v3485, %v3485
      %v3518 = vpack.c.b16 %v3486, %v3486
      %v3519 = vpack.c.b16 %v3487, %v3487
      %v3520 = vpack.c.b16 %v3488, %v3488
      %v3521 = vpack.c.b16 %v3489, %v3489
      %v3522 = vpack.c.b16 %v3490, %v3490
      %v3523 = vpack.c.b16 %v3491, %v3491
      %v3524 = vpack.c.b16 %v3492, %v3492
      %v3525 = vpack.c.b16 %v3493, %v3493
      %v3526 = vpack.c.b16 %v3494, %v3494
      %v3527 = vpack.c.b16 %v3495, %v3495
      %v3528 = vpack.c.b16 %v3496, %v3496
      %v3529 = vpack.c.b16 %v3497, %v3497
      %v3530 = vpack.c.b16 %v3498, %v3498
      %v3531 = vpack.c.b16 %v3499, %v3499
      %v3532 = vpack.c.b16 %v3500, %v3500
      %v3533 = vpack.c.b16 %v3501, %v3501
      %v3534 = vpack.c.b16 %v3502, %v3502
      %v3535 = vpack.c.b16 %v3503, %v3503
      %v3536 = vpack.c.b16 %v3504, %v3504
      %v3537 = vpack.c.b16 %v3505, %v3505
      %v3538 = vpack.c.b16 %v3506, %v3506
      %v3539 = vpack.c.b16 %v3507, %v3507
      %v3540 = vpack.c.b16 %v3508, %v3508
      %v3541 = vpack.c.b16 %v3509, %v3509
      %v3542 = vpack.c.b16 %v3510, %v3510
      %v3543 = vpack.c.b16 %v3511, %v3511
      %3576 = vst [vmem:[%s455] sm:$0xf] %v3512
      %3577 = vst [vmem:[%s455 + $0x4] sm:$0xf] %v3513
      %3578 = vst [vmem:[%s455 + $0x8] sm:$0xf] %v3514
      %3579 = vst [vmem:[%s455 + $0xc] sm:$0xf] %v3515
      %3580 = vst [vmem:[%s455 + $0x10] sm:$0xf] %v3516
      %3581 = vst [vmem:[%s455 + $0x14] sm:$0xf] %v3517
      %3582 = vst [vmem:[%s455 + $0x18] sm:$0xf] %v3518
      %3583 = vst [vmem:[%s455 + $0x1c] sm:$0xf] %v3519
      %3584 = vst [vmem:[%s455 + $0x20] sm:$0xf] %v3520
      %3585 = vst [vmem:[%s455 + $0x24] sm:$0xf] %v3521
      %3586 = vst [vmem:[%s455 + $0x28] sm:$0xf] %v3522
      %3587 = vst [vmem:[%s455 + $0x2c] sm:$0xf] %v3523
      %3588 = vst [vmem:[%s455 + $0x30] sm:$0xf] %v3524
      %3589 = vst [vmem:[%s455 + $0x34] sm:$0xf] %v3525
      %3590 = vst [vmem:[%s455 + $0x38] sm:$0xf] %v3526
      %3591 = vst [vmem:[%s455 + $0x3c] sm:$0xf] %v3527
      %3592 = vst [vmem:[%s455 + $0x40] sm:$0xf] %v3528
      %3593 = vst [vmem:[%s455 + $0x44] sm:$0xf] %v3529
      %3594 = vst [vmem:[%s455 + $0x48] sm:$0xf] %v3530
      %3595 = vst [vmem:[%s455 + $0x4c] sm:$0xf] %v3531
      %3596 = vst [vmem:[%s455 + $0x50] sm:$0xf] %v3532
      %3597 = vst [vmem:[%s455 + $0x54] sm:$0xf] %v3533
      %3598 = vst [vmem:[%s455 + $0x58] sm:$0xf] %v3534
      %3599 = vst [vmem:[%s455 + $0x5c] sm:$0xf] %v3535
      %3600 = vst [vmem:[%s455 + $0x60] sm:$0xf] %v3536
      %3601 = vst [vmem:[%s455 + $0x64] sm:$0xf] %v3537
      %3602 = vst [vmem:[%s455 + $0x68] sm:$0xf] %v3538
      %3603 = vst [vmem:[%s455 + $0x6c] sm:$0xf] %v3539
      %3604 = vst [vmem:[%s455 + $0x70] sm:$0xf] %v3540
      %3605 = vst [vmem:[%s455 + $0x74] sm:$0xf] %v3541
      %3606 = vst [vmem:[%s455 + $0x78] sm:$0xf] %v3542
      %3607 = vst [vmem:[%s455 + $0x7c] sm:$0xf] %v3543
      %v3608 = vadd.f32 %v3416, %v3417
      %v3609 = vadd.f32 %v3608, %v3418
      %v3610 = vadd.f32 %v3609, %v3419
      %v3611 = vadd.f32 %v3610, %v3420
      %v3612 = vadd.f32 %v3611, %v3421
      %v3613 = vadd.f32 %v3612, %v3422
      %v3614 = vadd.f32 %v3613, %v3423
      %v3615 = vadd.f32 %v3614, %v3424
      %v3616 = vadd.f32 %v3615, %v3425
      %v3617 = vadd.f32 %v3616, %v3426
      %v3618 = vadd.f32 %v3617, %v3427
      %v3619 = vadd.f32 %v3618, %v3428
      %v3620 = vadd.f32 %v3619, %v3429
      %v3621 = vadd.f32 %v3620, %v3430
      %v3622 = vadd.f32 %v3621, %v3431
      %v3623 = vadd.f32 %v3622, %v3432
      %v3624 = vadd.f32 %v3623, %v3433
      %v3625 = vadd.f32 %v3624, %v3434
      %v3626 = vadd.f32 %v3625, %v3435
      %v3627 = vadd.f32 %v3626, %v3436
      %v3628 = vadd.f32 %v3627, %v3437
      %v3629 = vadd.f32 %v3628, %v3438
      %v3630 = vadd.f32 %v3629, %v3439
      %v3631 = vadd.f32 %v3630, %v3440
      %v3632 = vadd.f32 %v3631, %v3441
      %v3633 = vadd.f32 %v3632, %v3442
      %v3634 = vadd.f32 %v3633, %v3443
      %v3635 = vadd.f32 %v3634, %v3444
      %v3636 = vadd.f32 %v3635, %v3445
      %v3637 = vadd.f32 %v3636, %v3446
      %v3638 = vadd.f32 %v3637, %v3447
      %v3639 = vrot.slane %v3638, 4
      %v3640 = vadd.f32 %v3638, %v3639
      %v3641 = vrot.slane %v3640, 2
      %v3642 = vadd.f32 %v3640, %v3641
      %v3643 = vrot.slane %v3642, 1
      %v3644 = vadd.f32 %v3642, %v3643
      %3645 = vst [vmem:[%s461] sm:$0x1] %v3644
      %v3646 = vmul.f32 %v3416, %v3416
      %v3647 = vmul.f32 %v3417, %v3417
      %v3648 = vmul.f32 %v3418, %v3418
      %v3649 = vmul.f32 %v3419, %v3419
      %v3650 = vmul.f32 %v3420, %v3420
      %v3651 = vmul.f32 %v3421, %v3421
      %v3652 = vmul.f32 %v3422, %v3422
      %v3653 = vmul.f32 %v3423, %v3423
      %v3654 = vmul.f32 %v3424, %v3424
      %v3655 = vmul.f32 %v3425, %v3425
      %v3656 = vmul.f32 %v3426, %v3426
      %v3657 = vmul.f32 %v3427, %v3427
      %v3658 = vmul.f32 %v3428, %v3428
      %v3659 = vmul.f32 %v3429, %v3429
      %v3660 = vmul.f32 %v3430, %v3430
      %v3661 = vmul.f32 %v3431, %v3431
      %v3662 = vmul.f32 %v3432, %v3432
      %v3663 = vmul.f32 %v3433, %v3433
      %v3664 = vmul.f32 %v3434, %v3434
      %v3665 = vmul.f32 %v3435, %v3435
      %v3666 = vmul.f32 %v3436, %v3436
      %v3667 = vmul.f32 %v3437, %v3437
      %v3668 = vmul.f32 %v3438, %v3438
      %v3669 = vmul.f32 %v3439, %v3439
      %v3670 = vmul.f32 %v3440, %v3440
      %v3671 = vmul.f32 %v3441, %v3441
      %v3672 = vmul.f32 %v3442, %v3442
      %v3673 = vmul.f32 %v3443, %v3443
      %v3674 = vmul.f32 %v3444, %v3444
      %v3675 = vmul.f32 %v3445, %v3445
      %v3676 = vmul.f32 %v3446, %v3446
      %v3677 = vmul.f32 %v3447, %v3447
      %v3678 = vadd.f32 %v3646, %v3647
      %v3679 = vadd.f32 %v3678, %v3648
      %v3680 = vadd.f32 %v3679, %v3649
      %v3681 = vadd.f32 %v3680, %v3650
      %v3682 = vadd.f32 %v3681, %v3651
      %v3683 = vadd.f32 %v3682, %v3652
      %v3684 = vadd.f32 %v3683, %v3653
      %v3685 = vadd.f32 %v3684, %v3654
      %v3686 = vadd.f32 %v3685, %v3655
      %v3687 = vadd.f32 %v3686, %v3656
      %v3688 = vadd.f32 %v3687, %v3657
      %v3689 = vadd.f32 %v3688, %v3658
      %v3690 = vadd.f32 %v3689, %v3659
      %v3691 = vadd.f32 %v3690, %v3660
      %v3692 = vadd.f32 %v3691, %v3661
      %v3693 = vadd.f32 %v3692, %v3662
      %v3694 = vadd.f32 %v3693, %v3663
      %v3695 = vadd.f32 %v3694, %v3664
      %v3696 = vadd.f32 %v3695, %v3665
      %v3697 = vadd.f32 %v3696, %v3666
      %v3698 = vadd.f32 %v3697, %v3667
      %v3699 = vadd.f32 %v3698, %v3668
      %v3700 = vadd.f32 %v3699, %v3669
      %v3701 = vadd.f32 %v3700, %v3670
      %v3702 = vadd.f32 %v3701, %v3671
      %v3703 = vadd.f32 %v3702, %v3672
      %v3704 = vadd.f32 %v3703, %v3673
      %v3705 = vadd.f32 %v3704, %v3674
      %v3706 = vadd.f32 %v3705, %v3675
      %v3707 = vadd.f32 %v3706, %v3676
      %v3708 = vadd.f32 %v3707, %v3677
      %v3709 = vrot.slane %v3708, 4
      %v3710 = vadd.f32 %v3708, %v3709
      %v3711 = vrot.slane %v3710, 2
      %v3712 = vadd.f32 %v3710, %v3711
      %v3713 = vrot.slane %v3712, 1
      %v3714 = vadd.f32 %v3712, %v3713
      %3715 = vst [vmem:[%s461 + $0x1] sm:$0x1] %v3714
      %s3716 = smul.u32 16, %s24
      %p3717 = scmp.lt.s32.totalorder %s23, 1
      %s3718 = scalar_select %p3717, %s23, 1
      %p3719 = scmp.lt.s32.totalorder %s3716, 15
      %s3720 = scalar_select %p3719, %s3716, 15
      %s3721 = smul.addr %s3720, 2
      %s3722 = smul.addr %s3718, 32
      %s3723 = sadd.s32 %s3721, %s3722
      %s3724 = smul.addr %s3723, 4
      %s3725 = scalar_lea.vmem %s6, %s3724
      %s3726 = sadd.s32 %s23, %s24
      %p3727 = scmp.lt.s32.totalorder %s3726, 1
      %s3728 = scalar_select %p3727, %s3726, 1
      %s3729 = smul.addr %s3728, 2
      %s3730 = scalar_lea.vmem %s7, %s3729
      // Predicated region
      $region45: #{bottleneck_block_nhwc.5} parent=43 // pred_check
        %p3731 = pneg %p214
      $region46: #{bottleneck_block_nhwc.5} parent=43 // pred_check_branch
        %3733 = sbr.rel (%p3731) target = $region48
      $region47: #{bottleneck_block_nhwc.5} parent=43 // pred_region
        %s3734 = smul.u32 16, %s24
      $region48: #{bottleneck_block_nhwc.5} parent=43 // pred_fallthru
        _
      // Predicated region
      $region49: #{bottleneck_block_nhwc.5} parent=43 // pred_check
        %p3735 = pneg %p242
      $region50: #{bottleneck_block_nhwc.5} parent=43 // pred_check_branch
        %3737 = sbr.rel (%p3735) target = $region52
      $region51: #{bottleneck_block_nhwc.5} parent=43 // pred_region
        %s3738 = sadd.s32 %s23, %s24
      $region52: #{bottleneck_block_nhwc.5} parent=43 // pred_fallthru
        _
    $region44: #{bottleneck_block_nhwc.5} parent=5 // pred_fallthru
      _
    %p3739 = scmp.le.s32.totalorder 2, %s14
    // Predicated region
    $region53: #{bottleneck_block_nhwc.5} parent=5 // pred_check
      %p3740 = pneg %p3739
    $region54: #{bottleneck_block_nhwc.5} parent=5 // pred_check_branch
      %3742 = sbr.rel (%p3740) target = $region56
    $region55: #{bottleneck_block_nhwc.5} parent=5 // pred_region
      %s3743 = ssub.s32 %s14, 2
      // Predicated region
      $region57: #{bottleneck_block_nhwc.5} parent=55 // pred_check
        %p3744 = pneg %p220
      $region58: #{bottleneck_block_nhwc.5} parent=55 // pred_check_branch
        %3746 = sbr.rel (%p3744) target = $region60
      $region59: #{bottleneck_block_nhwc.5} parent=55 // pred_region
        %s3747 = smul.u32 16, %s26
        %p3748 = scmp.lt.s32.totalorder %s25, 1
        %s3749 = scalar_select %p3748, %s25, 1
        %p3750 = scmp.lt.s32.totalorder %s3747, 15
        %s3751 = scalar_select %p3750, %s3747, 15
        %s3752 = smul.addr %s3751, 2
        %s3753 = smul.addr %s3749, 32
        %s3754 = sadd.s32 %s3752, %s3753
        %s3755 = smul.addr %s3754, 4
        %s3756 = scalar_lea.vmem %s6, %s3755
      $region60: #{bottleneck_block_nhwc.5} parent=55 // pred_fallthru
        _
      // Predicated region
      $region61: #{bottleneck_block_nhwc.5} parent=55 // pred_check
        %p3757 = pneg %p248
      $region62: #{bottleneck_block_nhwc.5} parent=55 // pred_check_branch
        %3759 = sbr.rel (%p3757) target = $region64
      $region63: #{bottleneck_block_nhwc.5} parent=55 // pred_region
        %s3760 = sadd.s32 %s25, %s26
        %p3761 = scmp.lt.s32.totalorder %s3760, 1
        %s3762 = scalar_select %p3761, %s3760, 1
        %s3763 = smul.addr %s3762, 2
        %s3764 = scalar_lea.vmem %s7, %s3763
      $region64: #{bottleneck_block_nhwc.5} parent=55 // pred_fallthru
        _
    $region56: #{bottleneck_block_nhwc.5} parent=5 // pred_fallthru
      _
  $region6: #{bottleneck_block_nhwc.5} parent=0 // loop_footer
    %s18 = sadd.s32 1, %s14
  $region7: #{bottleneck_block_nhwc.5} parent=0 // loop_footer_branch
    %13 = sbr.rel target = $region3
  $region8: #{bottleneck_block_nhwc.5} parent=0 // loop_exit
    _

</llo_original>
